<compile_context>
chip_gen: v5e
topology: v5e:2x2
jax: 0.10.0
libtpu: 0.0.40
codegen_flags: <defaults>
</compile_context>

<pallas_src>
import functools

import jax
import jax.numpy as jnp
from jax import lax
from jax.experimental import pallas as pl
from jax.experimental.pallas import tpu as pltpu


def _round_up(x, m):
    return (x + m - 1) // m * m


def bottleneck_kernel(use_add, tile_h, width,
                      x_hbm, w1_ref, s1_ref, b1_ref, w2_ref, s2_ref, b2_ref,
                      o_ref, xbuf, ybuf, sem):
    # x_hbm : (N, H+2, Wp, Cin_p) in HBM (manual DMA)
    # o_ref : (1, tH, W, Cout_p) VMEM block
    # xbuf  : (2, tH+2, Wp, Cin_p) double-buffered input slab
    # ybuf  : (tH+2, Wp, Ch_p) staged conv1 output
    b = pl.program_id(0)
    h = pl.program_id(1)
    n_h = pl.num_programs(1)

    tH = tile_h
    W = width
    Wp = xbuf.shape[2]
    Cin = xbuf.shape[3]
    Ch = w1_ref.shape[1]
    Cout = w2_ref.shape[2]

    # ---- manual double-buffered DMA of the (tH+2)-row halo slab ------------
    def slab_copy(row_tile, slot):
        row0 = pl.multiple_of(row_tile * tH, tH)
        return pltpu.make_async_copy(
            x_hbm.at[b, pl.ds(row0, tH + 2), :, :],
            xbuf.at[slot],
            sem.at[slot])

    slot = h & 1

    @pl.when(h == 0)
    def _():                              # prime the pipeline for this image
        slab_copy(0, 0).start()

    @pl.when(h + 1 < n_h)
    def _():                              # prefetch next row tile
        slab_copy(h + 1, (h + 1) & 1).start()

    slab_copy(h, slot).wait()

    x_slab = xbuf[slot]                   # (tH+2, Wp, Cin)
    if use_add:
        x_res = x_slab[1:tH + 1, 1:W + 1, :]   # residual reuses the slab

    # ---- conv1: 1x1 conv == channel matmul, + folded BN + SiLU -------------
    y = jnp.dot(x_slab.reshape((tH + 2) * Wp, Cin), w1_ref[...],
                preferred_element_type=jnp.float32)
    y = y * s1_ref[0] + b1_ref[0]
    y = y * jax.nn.sigmoid(y)
    y = y.reshape(tH + 2, Wp, Ch)

    # Re-zero conv2's left/right padding columns (static mask broadcast over
    # lanes).  Columns >= W+2 are never read by the taps, so no mask needed.
    col = lax.broadcasted_iota(jnp.int32, (1, Wp, 1), 1)
    y = jnp.where((col == 0) | (col == W + 1), 0.0, y)

    ybuf[...] = y.astype(ybuf.dtype)      # stage conv1 output in VMEM

    @pl.when(h == 0)                      # top halo row of the image
    def _():
        ybuf[0, :, :] = jnp.zeros((Wp, Ch), ybuf.dtype)

    @pl.when(h == n_h - 1)                # bottom halo row of the image
    def _():
        ybuf[tH + 1, :, :] = jnp.zeros((Wp, Ch), ybuf.dtype)

    # ---- conv2: 3x3 "same" conv as 9 shifted matmuls, f32 accumulation -----
    def tap(dy, dx):
        return ybuf[dy:dy + tH, dx:dx + W, :].reshape(tH * W, Ch)

    acc = jnp.dot(tap(0, 0), w2_ref[0], preferred_element_type=jnp.float32)
    for t in range(1, 9):
        dy, dx = divmod(t, 3)
        acc = acc + jnp.dot(tap(dy, dx), w2_ref[t],
                            preferred_element_type=jnp.float32)

    z = acc * s2_ref[0] + b2_ref[0]
    z = z * jax.nn.sigmoid(z)
    z = z.reshape(tH, W, Cout)

    if use_add:
        z = z + x_res.astype(jnp.float32)

    o_ref[0] = z.astype(o_ref.dtype)


def bottleneck(x_nchw, params, use_add=True, tile_h=8, lane=128,
               compute_dtype=jnp.bfloat16):
    """Fused Bottleneck forward. x_nchw: (N, Cin, H, W)."""
    w1, s1, b1, w2, s2, b2 = params
    N, Cin, H, W = x_nchw.shape
    Ch = w1.shape[1]
    Cout = w2.shape[-1]
    if use_add and Cin != Cout:
        raise ValueError("residual add requires in_channels == out_channels")

    # Lane-dense channel padding (128 lanes; on v6e/v7x 256 can raise MXU
    # occupancy when real channel counts allow).
    Cin_p = _round_up(Cin, lane)
    Ch_p = _round_up(Ch, lane)
    Cout_p = _round_up(Cout, lane)
    if use_add:
        Cin_p = Cout_p = max(Cin_p, Cout_p)

    # Row tile: largest divisor of H that is <= tile_h (no silent whole-image
    # fallback; the working set stays (tH+2) rows either way).
    tH = max(1, min(tile_h, H))
    while H % tH:
        tH -= 1

    # Sublane-aligned padded width (bf16 rows pack in pairs -> align to 16).
    sub = 16 if compute_dtype == jnp.bfloat16 else 8
    Wp = _round_up(W + 2, sub)

    # NCHW -> NHWC, +1-row/col zero halo, width/channel zero pad, cast.
    x = jnp.transpose(x_nchw, (0, 2, 3, 1)).astype(compute_dtype)
    x = jnp.pad(x, ((0, 0), (1, 1), (1, Wp - (W + 1)), (0, Cin_p - Cin)))

    w1p = jnp.pad(w1, ((0, Cin_p - Cin), (0, Ch_p - Ch))).astype(compute_dtype)
    s1p = jnp.pad(s1, ((0, 0), (0, Ch_p - Ch)))
    b1p = jnp.pad(b1, ((0, 0), (0, Ch_p - Ch)))
    w2p = jnp.pad(w2, ((0, 0), (0, 0), (0, Ch_p - Ch), (0, Cout_p - Cout)))
    w2p = w2p.reshape(9, Ch_p, Cout_p).astype(compute_dtype)
    s2p = jnp.pad(s2, ((0, 0), (0, Cout_p - Cout)))
    b2p = jnp.pad(b2, ((0, 0), (0, Cout_p - Cout)))

    kernel = functools.partial(bottleneck_kernel, use_add, tH, W)

    out = pl.pallas_call(
        kernel,
        out_shape=jax.ShapeDtypeStruct((N, H, W, Cout_p), x_nchw.dtype),
        grid_spec=pltpu.PrefetchScalarGridSpec(
            num_scalar_prefetch=0,
            grid=(N, H // tH),
            in_specs=[
                pl.BlockSpec(memory_space=pl.ANY),          # x stays in HBM
                pl.BlockSpec((Cin_p, Ch_p), lambda b, h: (0, 0)),
                pl.BlockSpec((1, Ch_p), lambda b, h: (0, 0)),
                pl.BlockSpec((1, Ch_p), lambda b, h: (0, 0)),
                pl.BlockSpec((9, Ch_p, Cout_p), lambda b, h: (0, 0, 0)),
                pl.BlockSpec((1, Cout_p), lambda b, h: (0, 0)),
                pl.BlockSpec((1, Cout_p), lambda b, h: (0, 0)),
            ],
            out_specs=pl.BlockSpec((1, tH, W, Cout_p),
                                   lambda b, h: (b, h, 0, 0)),
            scratch_shapes=[
                pltpu.VMEM((2, tH + 2, Wp, Cin_p), compute_dtype),  # x slabs
                pltpu.VMEM((tH + 2, Wp, Ch_p), compute_dtype),      # conv1 out
                pltpu.SemaphoreType.DMA((2,)),
            ],
        ),
        compiler_params=pltpu.CompilerParams(
            # Batch is split across TensorCores; row tiles iterate sequentially
            # (the manual double-buffer carries state along the row axis).
            dimension_semantics=("parallel", "arbitrary"),
            # Explicit scoped-VMEM budget (raises v5e's 16 MiB default, safe
            # under v7x's 64 MiB physical); re-derive if tile_h grows.
            vmem_limit_bytes=32 * 1024 * 1024),
    )(x, w1p, s1p, b1p, w2p, s2p, b2p)

    out = out[..., :Cout]
    return jnp.transpose(out, (0, 3, 1, 2))       # NHWC -> NCHW


def make_params(key, in_channels, out_channels, expansion=0.5):
    """Deterministic synthetic params. BN (eval mode) folded into scale/bias.

    w1: (Cin, Ch)        == torch conv1 weight (Ch,Cin,1,1) transposed
    w2: (3, 3, Ch, Cout) == torch conv2 weight (Cout,Ch,3,3) as HWIO
    """
    hidden = int(out_channels * expansion)
    k1, k2 = jax.random.split(key)
    w1 = jax.random.normal(k1, (in_channels, hidden), jnp.float32) * 0.5
    w2 = jax.random.normal(k2, (3, 3, hidden, out_channels), jnp.float32) * 0.5
    eps = 1e-5

    def bn_fold(c, off):
        gamma = 1.0 + 0.05 * jnp.arange(c, dtype=jnp.float32) + off
        beta = 0.02 * jnp.arange(c, dtype=jnp.float32) - off
        mean = 0.01 * jnp.arange(c, dtype=jnp.float32)
        var = 1.0 + 0.1 * jnp.arange(c, dtype=jnp.float32)
        scale = gamma / jnp.sqrt(var + eps)
        bias = beta - mean * scale
        return scale[None, :], bias[None, :]

    s1, b1 = bn_fold(hidden, 0.1)
    s2, b2 = bn_fold(out_channels, 0.2)
    return w1, s1, b1, w2, s2, b2


def bottleneck_ref(x_nchw, params, use_add=True):
    """Pure-JAX reference (independent path via lax.conv_general_dilated)."""
    w1, s1, b1, w2, s2, b2 = params
    x = jnp.transpose(x_nchw, (0, 2, 3, 1))
    y = jnp.einsum('nhwc,cd->nhwd', x, w1, precision=lax.Precision.HIGHEST)
    y = y * s1[0] + b1[0]
    y = y * jax.nn.sigmoid(y)
    z = lax.conv_general_dilated(
        y, w2, window_strides=(1, 1), padding=((1, 1), (1, 1)),
        dimension_numbers=('NHWC', 'HWIO', 'NHWC'),
        precision=lax.Precision.HIGHEST)
    z = z * s2[0] + b2[0]
    z = z * jax.nn.sigmoid(z)
    if use_add:
        z = z + x
    return jnp.transpose(z, (0, 3, 1, 2))


if __name__ == "__main__":
    key = jax.random.PRNGKey(0)
    kx, kp = jax.random.split(key)

    # Bottleneck(in_channels=4, out_channels=4, shortcut=True, expansion=0.5)
    N, C, H, W = 2, 4, 16, 16
    x = jax.random.normal(kx, (N, C, H, W), jnp.float32)
    params = make_params(kp, C, C)

    ref = bottleneck_ref(x, params, use_add=True)

    # Strict numerics check: f32 compute path.
    out_f32 = jax.block_until_ready(
        bottleneck(x, params, use_add=True, tile_h=8,
                   compute_dtype=jnp.float32))
    assert out_f32.shape == (N, C, H, W)
    err32 = float(jnp.max(jnp.abs(out_f32 - ref)))
    assert jnp.allclose(out_f32, ref, atol=2e-3, rtol=2e-3), \
        f"f32 max abs err {err32}"

    # Performance-default bf16 (MXU-native) path: scale-aware tolerance.
    out_bf16 = jax.block_until_ready(
        bottleneck(x, params, use_add=True, tile_h=8,
                   compute_dtype=jnp.bfloat16))
    assert out_bf16.shape == (N, C, H, W)
    err16 = float(jnp.max(jnp.abs(out_bf16 - ref)))
    ref_max = float(jnp.max(jnp.abs(ref)))
    assert err16 <= 0.06 * max(1.0, ref_max), f"bf16 max abs err {err16}"

    print("KERNEL_OK")
</pallas_src>

<mosaic_0001>
module attributes {stable_mosaic.version = 11 : i64} {
  func.func @bottleneck_kernel(%arg0: i32, %arg1: i32, %arg2: memref<2x18x24x128xf32, #tpu.memory_space<any>>, %arg3: memref<128x128xf32, #tpu.memory_space<vmem>>, %arg4: memref<1x128xf32, #tpu.memory_space<vmem>>, %arg5: memref<1x128xf32, #tpu.memory_space<vmem>>, %arg6: memref<9x128x128xf32, #tpu.memory_space<vmem>>, %arg7: memref<1x128xf32, #tpu.memory_space<vmem>>, %arg8: memref<1x128xf32, #tpu.memory_space<vmem>>, %arg9: memref<1x8x16x128xf32, #tpu.memory_space<vmem>>, %arg10: memref<2x10x24x128xf32, #tpu.memory_space<vmem>>, %arg11: memref<10x24x128xf32, #tpu.memory_space<vmem>>, %arg12: memref<2x!tpu.dma_semaphore, #tpu.memory_space<semaphore_mem>>) attributes {dimension_semantics = [#tpu.dimension_semantics<parallel>, #tpu.dimension_semantics<arbitrary>], iteration_bounds = array<i64: 2, 2>, scalar_prefetch = 0 : i64, scratch_operands = 3 : i64, tpu.core_type = #tpu.core_type<tc>, window_params = [{}, {pipeline_mode = #tpu.pipeline_mode<synchronous>, transform_indices = @transform_1, window_bounds = array<i64: 128, 128>}, {pipeline_mode = #tpu.pipeline_mode<synchronous>, transform_indices = @transform_2, window_bounds = array<i64: 1, 128>}, {pipeline_mode = #tpu.pipeline_mode<synchronous>, transform_indices = @transform_3, window_bounds = array<i64: 1, 128>}, {pipeline_mode = #tpu.pipeline_mode<synchronous>, transform_indices = @transform_4, window_bounds = array<i64: 9, 128, 128>}, {pipeline_mode = #tpu.pipeline_mode<synchronous>, transform_indices = @transform_5, window_bounds = array<i64: 1, 128>}, {pipeline_mode = #tpu.pipeline_mode<synchronous>, transform_indices = @transform_6, window_bounds = array<i64: 1, 128>}, {transform_indices = @transform_7, window_bounds = array<i64: 1, 8, 16, 128>}]} {
    %c1_i32 = arith.constant 1 : i32
    %0 = arith.andi %arg1, %c1_i32 : i32
    %c0_i32 = arith.constant 0 : i32
    %1 = arith.cmpi eq, %arg1, %c0_i32 : i32
    %2 = arith.extui %1 : i1 to i32
    %c0_i32_0 = arith.constant 0 : i32
    %3 = arith.cmpi ne, %2, %c0_i32_0 : i32
    scf.if %3 {
      %c0_i32_90 = arith.constant 0 : i32
      %131 = tpu.assume_multiple %c0_i32_90, 8 : i32
      %c0_i32_91 = arith.constant 0 : i32
      %c0_i32_92 = arith.constant 0 : i32
      %c0_i32_93 = arith.constant 0 : i32
      %c0_i32_94 = arith.constant 0 : i32
      %132 = tpu.memref_slice %arg2[%arg0, %131, %c0_i32_93, %c0_i32_94] : memref<2x18x24x128xf32, #tpu.memory_space<any>> -> memref<1x10x24x128xf32, #tpu.memory_space<any>>
      %133 = tpu.memref_squeeze %132 : memref<1x10x24x128xf32, #tpu.memory_space<any>> -> memref<10x24x128xf32, #tpu.memory_space<any>>
      %c0_i32_95 = arith.constant 0 : i32
      %c0_i32_96 = arith.constant 0 : i32
      %c0_i32_97 = arith.constant 0 : i32
      %134 = tpu.memref_slice %arg10[%c0_i32_91, %c0_i32_95, %c0_i32_96, %c0_i32_97] : memref<2x10x24x128xf32, #tpu.memory_space<vmem>> -> memref<1x10x24x128xf32, #tpu.memory_space<vmem>>
      %135 = tpu.memref_squeeze %134 : memref<1x10x24x128xf32, #tpu.memory_space<vmem>> -> memref<10x24x128xf32, #tpu.memory_space<vmem>>
      %136 = tpu.memref_slice %arg12[%c0_i32_92] : memref<2x!tpu.dma_semaphore, #tpu.memory_space<semaphore_mem>> -> memref<1x!tpu.dma_semaphore, #tpu.memory_space<semaphore_mem>>
      %137 = tpu.memref_squeeze %136 : memref<1x!tpu.dma_semaphore, #tpu.memory_space<semaphore_mem>> -> memref<!tpu.dma_semaphore, #tpu.memory_space<semaphore_mem>>
      tpu.enqueue_dma source(%133 : memref<10x24x128xf32, #tpu.memory_space<any>>) target(%135 : memref<10x24x128xf32, #tpu.memory_space<vmem>>) target_semaphore(%137 : memref<!tpu.dma_semaphore, #tpu.memory_space<semaphore_mem>>)
    } else {
    }
    %c1_i32_1 = arith.constant 1 : i32
    %4 = arith.addi %arg1, %c1_i32_1 : i32
    %c2_i32 = arith.constant 2 : i32
    %5 = arith.cmpi slt, %4, %c2_i32 : i32
    %6 = arith.extui %5 : i1 to i32
    %c0_i32_2 = arith.constant 0 : i32
    %7 = arith.cmpi ne, %6, %c0_i32_2 : i32
    scf.if %7 {
      %c1_i32_90 = arith.constant 1 : i32
      %131 = arith.addi %arg1, %c1_i32_90 : i32
      %c1_i32_91 = arith.constant 1 : i32
      %132 = arith.addi %arg1, %c1_i32_91 : i32
      %c1_i32_92 = arith.constant 1 : i32
      %133 = arith.andi %132, %c1_i32_92 : i32
      %c8_i32_93 = arith.constant 8 : i32
      %134 = arith.muli %131, %c8_i32_93 : i32
      %135 = tpu.assume_multiple %134, 8 : i32
      %c0_i32_94 = arith.constant 0 : i32
      %c0_i32_95 = arith.constant 0 : i32
      %136 = tpu.memref_slice %arg2[%arg0, %135, %c0_i32_94, %c0_i32_95] : memref<2x18x24x128xf32, #tpu.memory_space<any>> -> memref<1x10x24x128xf32, #tpu.memory_space<any>>
      %137 = tpu.memref_squeeze %136 : memref<1x10x24x128xf32, #tpu.memory_space<any>> -> memref<10x24x128xf32, #tpu.memory_space<any>>
      %c0_i32_96 = arith.constant 0 : i32
      %c0_i32_97 = arith.constant 0 : i32
      %c0_i32_98 = arith.constant 0 : i32
      %138 = tpu.memref_slice %arg10[%133, %c0_i32_96, %c0_i32_97, %c0_i32_98] : memref<2x10x24x128xf32, #tpu.memory_space<vmem>> -> memref<1x10x24x128xf32, #tpu.memory_space<vmem>>
      %139 = tpu.memref_squeeze %138 : memref<1x10x24x128xf32, #tpu.memory_space<vmem>> -> memref<10x24x128xf32, #tpu.memory_space<vmem>>
      %140 = tpu.memref_slice %arg12[%133] : memref<2x!tpu.dma_semaphore, #tpu.memory_space<semaphore_mem>> -> memref<1x!tpu.dma_semaphore, #tpu.memory_space<semaphore_mem>>
      %141 = tpu.memref_squeeze %140 : memref<1x!tpu.dma_semaphore, #tpu.memory_space<semaphore_mem>> -> memref<!tpu.dma_semaphore, #tpu.memory_space<semaphore_mem>>
      tpu.enqueue_dma source(%137 : memref<10x24x128xf32, #tpu.memory_space<any>>) target(%139 : memref<10x24x128xf32, #tpu.memory_space<vmem>>) target_semaphore(%141 : memref<!tpu.dma_semaphore, #tpu.memory_space<semaphore_mem>>)
    } else {
    }
    %c8_i32 = arith.constant 8 : i32
    %8 = arith.muli %arg1, %c8_i32 : i32
    %9 = tpu.assume_multiple %8, 8 : i32
    %c0_i32_3 = arith.constant 0 : i32
    %c0_i32_4 = arith.constant 0 : i32
    %10 = tpu.memref_slice %arg2[%arg0, %9, %c0_i32_3, %c0_i32_4] : memref<2x18x24x128xf32, #tpu.memory_space<any>> -> memref<1x10x24x128xf32, #tpu.memory_space<any>>
    %11 = tpu.memref_squeeze %10 : memref<1x10x24x128xf32, #tpu.memory_space<any>> -> memref<10x24x128xf32, #tpu.memory_space<any>>
    %c0_i32_5 = arith.constant 0 : i32
    %c0_i32_6 = arith.constant 0 : i32
    %c0_i32_7 = arith.constant 0 : i32
    %12 = tpu.memref_slice %arg10[%0, %c0_i32_5, %c0_i32_6, %c0_i32_7] : memref<2x10x24x128xf32, #tpu.memory_space<vmem>> -> memref<1x10x24x128xf32, #tpu.memory_space<vmem>>
    %13 = tpu.memref_squeeze %12 : memref<1x10x24x128xf32, #tpu.memory_space<vmem>> -> memref<10x24x128xf32, #tpu.memory_space<vmem>>
    %14 = tpu.memref_slice %arg12[%0] : memref<2x!tpu.dma_semaphore, #tpu.memory_space<semaphore_mem>> -> memref<1x!tpu.dma_semaphore, #tpu.memory_space<semaphore_mem>>
    %15 = tpu.memref_squeeze %14 : memref<1x!tpu.dma_semaphore, #tpu.memory_space<semaphore_mem>> -> memref<!tpu.dma_semaphore, #tpu.memory_space<semaphore_mem>>
    tpu.wait_dma2 semaphore(%15 : memref<!tpu.dma_semaphore, #tpu.memory_space<semaphore_mem>>) src(%11 : memref<10x24x128xf32, #tpu.memory_space<any>>) dst(%13 : memref<10x24x128xf32, #tpu.memory_space<vmem>>)
    %16 = arith.index_cast %0 : i32 to index
    %c0 = arith.constant 0 : index
    %c0_8 = arith.constant 0 : index
    %c0_9 = arith.constant 0 : index
    %17 = vector.load %arg10[%16, %c0, %c0_8, %c0_9] : memref<2x10x24x128xf32, #tpu.memory_space<vmem>>, vector<1x10x24x128xf32>
    %18 = vector.shape_cast %17 : vector<1x10x24x128xf32> to vector<10x24x128xf32>
    %19 = vector.extract_strided_slice %18 {offsets = [1, 1, 0], sizes = [8, 16, 128], strides = [1, 1, 1]} : vector<10x24x128xf32> to vector<8x16x128xf32>
    %20 = vector.shape_cast %18 : vector<10x24x128xf32> to vector<240x128xf32>
    %c0_10 = arith.constant 0 : index
    %c0_11 = arith.constant 0 : index
    %21 = vector.load %arg3[%c0_10, %c0_11] : memref<128x128xf32, #tpu.memory_space<vmem>>, vector<128x128xf32>
    %cst = arith.constant dense<0.000000e+00> : vector<240x128xf32>
    %22 = tpu.matmul %20, %21, %cst {dimension_numbers = #tpu.dot_dimension_numbers<[1], [0], [0], [1], [0, 0, 1, 1], [], []>} : vector<240x128xf32>, vector<128x128xf32>, vector<240x128xf32> -> vector<240x128xf32>
    %c0_12 = arith.constant 0 : index
    %c0_13 = arith.constant 0 : index
    %23 = vector.load %arg4[%c0_12, %c0_13] : memref<1x128xf32, #tpu.memory_space<vmem>>, vector<1x128xf32>
    %24 = vector.shape_cast %23 : vector<1x128xf32> to vector<128xf32>
    %25 = vector.shape_cast %24 : vector<128xf32> to vector<1x128xf32>
    %26 = vector.broadcast %25 : vector<1x128xf32> to vector<240x128xf32>
    %27 = arith.mulf %22, %26 : vector<240x128xf32>
    %c0_14 = arith.constant 0 : index
    %c0_15 = arith.constant 0 : index
    %28 = vector.load %arg5[%c0_14, %c0_15] : memref<1x128xf32, #tpu.memory_space<vmem>>, vector<1x128xf32>
    %29 = vector.shape_cast %28 : vector<1x128xf32> to vector<128xf32>
    %30 = vector.shape_cast %29 : vector<128xf32> to vector<1x128xf32>
    %31 = vector.broadcast %30 : vector<1x128xf32> to vector<240x128xf32>
    %32 = arith.addf %27, %31 : vector<240x128xf32>
    %33 = arith.negf %32 : vector<240x128xf32>
    %34 = math.exp %33 : vector<240x128xf32>
    %cst_16 = arith.constant 1.000000e+00 : f32
    %35 = vector.broadcast %cst_16 : f32 to vector<240x128xf32>
    %36 = arith.addf %35, %34 : vector<240x128xf32>
    %37 = arith.divf %35, %36 : vector<240x128xf32>
    %38 = arith.mulf %32, %37 : vector<240x128xf32>
    %39 = vector.shape_cast %38 : vector<240x128xf32> to vector<10x24x128xf32>
    %40 = tpu.iota {dimensions = array<i32: 1>} : vector<1x24x1xi32>
    %c0_i32_17 = arith.constant 0 : i32
    %41 = vector.broadcast %c0_i32_17 : i32 to vector<1x24x1xi32>
    %42 = arith.cmpi eq, %40, %41 : vector<1x24x1xi32>
    %c17_i32 = arith.constant 17 : i32
    %43 = vector.broadcast %c17_i32 : i32 to vector<1x24x1xi32>
    %44 = arith.cmpi eq, %40, %43 : vector<1x24x1xi32>
    %45 = arith.ori %42, %44 : vector<1x24x1xi1>
    %cst_18 = arith.constant 0.000000e+00 : f32
    %46 = vector.shape_cast %45 : vector<1x24x1xi1> to vector<1x24x1xi1>
    %47 = vector.broadcast %46 : vector<1x24x1xi1> to vector<10x24x128xi1>
    %48 = vector.broadcast %cst_18 : f32 to vector<10x24x128xf32>
    %49 = arith.select %47, %48, %39 : vector<10x24x128xi1>, vector<10x24x128xf32>
    %c0_19 = arith.constant 0 : index
    %c0_20 = arith.constant 0 : index
    %c0_21 = arith.constant 0 : index
    %50 = vector.load %arg11[%c0_19, %c0_20, %c0_21] : memref<10x24x128xf32, #tpu.memory_space<vmem>>, vector<10x24x128xf32>
    tpu.vector_store %arg11[%c0_19, %c0_20, %c0_21], %49 {strides = array<i32>} : memref<10x24x128xf32, #tpu.memory_space<vmem>>, vector<10x24x128xf32>,
    %c0_i32_22 = arith.constant 0 : i32
    %51 = arith.cmpi eq, %arg1, %c0_i32_22 : i32
    %52 = arith.extui %51 : i1 to i32
    %c0_i32_23 = arith.constant 0 : i32
    %53 = arith.cmpi ne, %52, %c0_i32_23 : i32
    scf.if %53 {
      %cst_90 = arith.constant 0.000000e+00 : f32
      %131 = vector.broadcast %cst_90 : f32 to vector<24x128xf32>
      %c0_91 = arith.constant 0 : index
      %c0_92 = arith.constant 0 : index
      %c0_93 = arith.constant 0 : index
      %132 = vector.load %arg11[%c0_91, %c0_92, %c0_93] : memref<10x24x128xf32, #tpu.memory_space<vmem>>, vector<1x24x128xf32>
      %133 = vector.shape_cast %132 : vector<1x24x128xf32> to vector<24x128xf32>
      %134 = vector.shape_cast %131 : vector<24x128xf32> to vector<1x24x128xf32>
      tpu.vector_store %arg11[%c0_91, %c0_92, %c0_93], %134 {strides = array<i32>} : memref<10x24x128xf32, #tpu.memory_space<vmem>>, vector<1x24x128xf32>,
    } else {
    }
    %c1_i32_24 = arith.constant 1 : i32
    %54 = arith.cmpi eq, %arg1, %c1_i32_24 : i32
    %55 = arith.extui %54 : i1 to i32
    %c0_i32_25 = arith.constant 0 : i32
    %56 = arith.cmpi ne, %55, %c0_i32_25 : i32
    scf.if %56 {
      %cst_90 = arith.constant 0.000000e+00 : f32
      %131 = vector.broadcast %cst_90 : f32 to vector<24x128xf32>
      %c9 = arith.constant 9 : index
      %c0_91 = arith.constant 0 : index
      %c0_92 = arith.constant 0 : index
      %132 = vector.load %arg11[%c9, %c0_91, %c0_92] : memref<10x24x128xf32, #tpu.memory_space<vmem>>, vector<1x24x128xf32>
      %133 = vector.shape_cast %132 : vector<1x24x128xf32> to vector<24x128xf32>
      %134 = vector.shape_cast %131 : vector<24x128xf32> to vector<1x24x128xf32>
      tpu.vector_store %arg11[%c9, %c0_91, %c0_92], %134 {strides = array<i32>} : memref<10x24x128xf32, #tpu.memory_space<vmem>>, vector<1x24x128xf32>,
    } else {
    }
    %c0_26 = arith.constant 0 : index
    %c0_27 = arith.constant 0 : index
    %c0_28 = arith.constant 0 : index
    %57 = vector.load %arg11[%c0_26, %c0_27, %c0_28] : memref<10x24x128xf32, #tpu.memory_space<vmem>>, vector<8x16x128xf32>
    %58 = vector.shape_cast %57 : vector<8x16x128xf32> to vector<128x128xf32>
    %c0_29 = arith.constant 0 : index
    %c0_30 = arith.constant 0 : index
    %c0_31 = arith.constant 0 : index
    %59 = vector.load %arg6[%c0_29, %c0_30, %c0_31] : memref<9x128x128xf32, #tpu.memory_space<vmem>>, vector<1x128x128xf32>
    %60 = vector.shape_cast %59 : vector<1x128x128xf32> to vector<128x128xf32>
    %cst_32 = arith.constant dense<0.000000e+00> : vector<128x128xf32>
    %61 = tpu.matmul %58, %60, %cst_32 {dimension_numbers = #tpu.dot_dimension_numbers<[1], [0], [0], [1], [0, 0, 1, 1], [], []>} : vector<128x128xf32>, vector<128x128xf32>, vector<128x128xf32> -> vector<128x128xf32>
    %c0_33 = arith.constant 0 : index
    %c1 = arith.constant 1 : index
    %c0_34 = arith.constant 0 : index
    %62 = vector.load %arg11[%c0_33, %c1, %c0_34] : memref<10x24x128xf32, #tpu.memory_space<vmem>>, vector<8x16x128xf32>
    %63 = vector.shape_cast %62 : vector<8x16x128xf32> to vector<128x128xf32>
    %c1_35 = arith.constant 1 : index
    %c0_36 = arith.constant 0 : index
    %c0_37 = arith.constant 0 : index
    %64 = vector.load %arg6[%c1_35, %c0_36, %c0_37] : memref<9x128x128xf32, #tpu.memory_space<vmem>>, vector<1x128x128xf32>
    %65 = vector.shape_cast %64 : vector<1x128x128xf32> to vector<128x128xf32>
    %cst_38 = arith.constant dense<0.000000e+00> : vector<128x128xf32>
    %66 = tpu.matmul %63, %65, %cst_38 {dimension_numbers = #tpu.dot_dimension_numbers<[1], [0], [0], [1], [0, 0, 1, 1], [], []>} : vector<128x128xf32>, vector<128x128xf32>, vector<128x128xf32> -> vector<128x128xf32>
    %67 = arith.addf %61, %66 : vector<128x128xf32>
    %c0_39 = arith.constant 0 : index
    %c2 = arith.constant 2 : index
    %c0_40 = arith.constant 0 : index
    %68 = vector.load %arg11[%c0_39, %c2, %c0_40] : memref<10x24x128xf32, #tpu.memory_space<vmem>>, vector<8x16x128xf32>
    %69 = vector.shape_cast %68 : vector<8x16x128xf32> to vector<128x128xf32>
    %c2_41 = arith.constant 2 : index
    %c0_42 = arith.constant 0 : index
    %c0_43 = arith.constant 0 : index
    %70 = vector.load %arg6[%c2_41, %c0_42, %c0_43] : memref<9x128x128xf32, #tpu.memory_space<vmem>>, vector<1x128x128xf32>
    %71 = vector.shape_cast %70 : vector<1x128x128xf32> to vector<128x128xf32>
    %cst_44 = arith.constant dense<0.000000e+00> : vector<128x128xf32>
    %72 = tpu.matmul %69, %71, %cst_44 {dimension_numbers = #tpu.dot_dimension_numbers<[1], [0], [0], [1], [0, 0, 1, 1], [], []>} : vector<128x128xf32>, vector<128x128xf32>, vector<128x128xf32> -> vector<128x128xf32>
    %73 = arith.addf %67, %72 : vector<128x128xf32>
    %c1_45 = arith.constant 1 : index
    %c0_46 = arith.constant 0 : index
    %c0_47 = arith.constant 0 : index
    %74 = vector.load %arg11[%c1_45, %c0_46, %c0_47] : memref<10x24x128xf32, #tpu.memory_space<vmem>>, vector<8x16x128xf32>
    %75 = vector.shape_cast %74 : vector<8x16x128xf32> to vector<128x128xf32>
    %c3 = arith.constant 3 : index
    %c0_48 = arith.constant 0 : index
    %c0_49 = arith.constant 0 : index
    %76 = vector.load %arg6[%c3, %c0_48, %c0_49] : memref<9x128x128xf32, #tpu.memory_space<vmem>>, vector<1x128x128xf32>
    %77 = vector.shape_cast %76 : vector<1x128x128xf32> to vector<128x128xf32>
    %cst_50 = arith.constant dense<0.000000e+00> : vector<128x128xf32>
    %78 = tpu.matmul %75, %77, %cst_50 {dimension_numbers = #tpu.dot_dimension_numbers<[1], [0], [0], [1], [0, 0, 1, 1], [], []>} : vector<128x128xf32>, vector<128x128xf32>, vector<128x128xf32> -> vector<128x128xf32>
    %79 = arith.addf %73, %78 : vector<128x128xf32>
    %c1_51 = arith.constant 1 : index
    %c1_52 = arith.constant 1 : index
    %c0_53 = arith.constant 0 : index
    %80 = vector.load %arg11[%c1_51, %c1_52, %c0_53] : memref<10x24x128xf32, #tpu.memory_space<vmem>>, vector<8x16x128xf32>
    %81 = vector.shape_cast %80 : vector<8x16x128xf32> to vector<128x128xf32>
    %c4 = arith.constant 4 : index
    %c0_54 = arith.constant 0 : index
    %c0_55 = arith.constant 0 : index
    %82 = vector.load %arg6[%c4, %c0_54, %c0_55] : memref<9x128x128xf32, #tpu.memory_space<vmem>>, vector<1x128x128xf32>
    %83 = vector.shape_cast %82 : vector<1x128x128xf32> to vector<128x128xf32>
    %cst_56 = arith.constant dense<0.000000e+00> : vector<128x128xf32>
    %84 = tpu.matmul %81, %83, %cst_56 {dimension_numbers = #tpu.dot_dimension_numbers<[1], [0], [0], [1], [0, 0, 1, 1], [], []>} : vector<128x128xf32>, vector<128x128xf32>, vector<128x128xf32> -> vector<128x128xf32>
    %85 = arith.addf %79, %84 : vector<128x128xf32>
    %c1_57 = arith.constant 1 : index
    %c2_58 = arith.constant 2 : index
    %c0_59 = arith.constant 0 : index
    %86 = vector.load %arg11[%c1_57, %c2_58, %c0_59] : memref<10x24x128xf32, #tpu.memory_space<vmem>>, vector<8x16x128xf32>
    %87 = vector.shape_cast %86 : vector<8x16x128xf32> to vector<128x128xf32>
    %c5 = arith.constant 5 : index
    %c0_60 = arith.constant 0 : index
    %c0_61 = arith.constant 0 : index
    %88 = vector.load %arg6[%c5, %c0_60, %c0_61] : memref<9x128x128xf32, #tpu.memory_space<vmem>>, vector<1x128x128xf32>
    %89 = vector.shape_cast %88 : vector<1x128x128xf32> to vector<128x128xf32>
    %cst_62 = arith.constant dense<0.000000e+00> : vector<128x128xf32>
    %90 = tpu.matmul %87, %89, %cst_62 {dimension_numbers = #tpu.dot_dimension_numbers<[1], [0], [0], [1], [0, 0, 1, 1], [], []>} : vector<128x128xf32>, vector<128x128xf32>, vector<128x128xf32> -> vector<128x128xf32>
    %91 = arith.addf %85, %90 : vector<128x128xf32>
    %c2_63 = arith.constant 2 : index
    %c0_64 = arith.constant 0 : index
    %c0_65 = arith.constant 0 : index
    %92 = vector.load %arg11[%c2_63, %c0_64, %c0_65] : memref<10x24x128xf32, #tpu.memory_space<vmem>>, vector<8x16x128xf32>
    %93 = vector.shape_cast %92 : vector<8x16x128xf32> to vector<128x128xf32>
    %c6 = arith.constant 6 : index
    %c0_66 = arith.constant 0 : index
    %c0_67 = arith.constant 0 : index
    %94 = vector.load %arg6[%c6, %c0_66, %c0_67] : memref<9x128x128xf32, #tpu.memory_space<vmem>>, vector<1x128x128xf32>
    %95 = vector.shape_cast %94 : vector<1x128x128xf32> to vector<128x128xf32>
    %cst_68 = arith.constant dense<0.000000e+00> : vector<128x128xf32>
    %96 = tpu.matmul %93, %95, %cst_68 {dimension_numbers = #tpu.dot_dimension_numbers<[1], [0], [0], [1], [0, 0, 1, 1], [], []>} : vector<128x128xf32>, vector<128x128xf32>, vector<128x128xf32> -> vector<128x128xf32>
    %97 = arith.addf %91, %96 : vector<128x128xf32>
    %c2_69 = arith.constant 2 : index
    %c1_70 = arith.constant 1 : index
    %c0_71 = arith.constant 0 : index
    %98 = vector.load %arg11[%c2_69, %c1_70, %c0_71] : memref<10x24x128xf32, #tpu.memory_space<vmem>>, vector<8x16x128xf32>
    %99 = vector.shape_cast %98 : vector<8x16x128xf32> to vector<128x128xf32>
    %c7 = arith.constant 7 : index
    %c0_72 = arith.constant 0 : index
    %c0_73 = arith.constant 0 : index
    %100 = vector.load %arg6[%c7, %c0_72, %c0_73] : memref<9x128x128xf32, #tpu.memory_space<vmem>>, vector<1x128x128xf32>
    %101 = vector.shape_cast %100 : vector<1x128x128xf32> to vector<128x128xf32>
    %cst_74 = arith.constant dense<0.000000e+00> : vector<128x128xf32>
    %102 = tpu.matmul %99, %101, %cst_74 {dimension_numbers = #tpu.dot_dimension_numbers<[1], [0], [0], [1], [0, 0, 1, 1], [], []>} : vector<128x128xf32>, vector<128x128xf32>, vector<128x128xf32> -> vector<128x128xf32>
    %103 = arith.addf %97, %102 : vector<128x128xf32>
    %c2_75 = arith.constant 2 : index
    %c2_76 = arith.constant 2 : index
    %c0_77 = arith.constant 0 : index
    %104 = vector.load %arg11[%c2_75, %c2_76, %c0_77] : memref<10x24x128xf32, #tpu.memory_space<vmem>>, vector<8x16x128xf32>
    %105 = vector.shape_cast %104 : vector<8x16x128xf32> to vector<128x128xf32>
    %c8 = arith.constant 8 : index
    %c0_78 = arith.constant 0 : index
    %c0_79 = arith.constant 0 : index
    %106 = vector.load %arg6[%c8, %c0_78, %c0_79] : memref<9x128x128xf32, #tpu.memory_space<vmem>>, vector<1x128x128xf32>
    %107 = vector.shape_cast %106 : vector<1x128x128xf32> to vector<128x128xf32>
    %cst_80 = arith.constant dense<0.000000e+00> : vector<128x128xf32>
    %108 = tpu.matmul %105, %107, %cst_80 {dimension_numbers = #tpu.dot_dimension_numbers<[1], [0], [0], [1], [0, 0, 1, 1], [], []>} : vector<128x128xf32>, vector<128x128xf32>, vector<128x128xf32> -> vector<128x128xf32>
    %109 = arith.addf %103, %108 : vector<128x128xf32>
    %c0_81 = arith.constant 0 : index
    %c0_82 = arith.constant 0 : index
    %110 = vector.load %arg7[%c0_81, %c0_82] : memref<1x128xf32, #tpu.memory_space<vmem>>, vector<1x128xf32>
    %111 = vector.shape_cast %110 : vector<1x128xf32> to vector<128xf32>
    %112 = vector.shape_cast %111 : vector<128xf32> to vector<1x128xf32>
    %113 = vector.broadcast %112 : vector<1x128xf32> to vector<128x128xf32>
    %114 = arith.mulf %109, %113 : vector<128x128xf32>
    %c0_83 = arith.constant 0 : index
    %c0_84 = arith.constant 0 : index
    %115 = vector.load %arg8[%c0_83, %c0_84] : memref<1x128xf32, #tpu.memory_space<vmem>>, vector<1x128xf32>
    %116 = vector.shape_cast %115 : vector<1x128xf32> to vector<128xf32>
    %117 = vector.shape_cast %116 : vector<128xf32> to vector<1x128xf32>
    %118 = vector.broadcast %117 : vector<1x128xf32> to vector<128x128xf32>
    %119 = arith.addf %114, %118 : vector<128x128xf32>
    %120 = arith.negf %119 : vector<128x128xf32>
    %121 = math.exp %120 : vector<128x128xf32>
    %cst_85 = arith.constant 1.000000e+00 : f32
    %122 = vector.broadcast %cst_85 : f32 to vector<128x128xf32>
    %123 = arith.addf %122, %121 : vector<128x128xf32>
    %124 = arith.divf %122, %123 : vector<128x128xf32>
    %125 = arith.mulf %119, %124 : vector<128x128xf32>
    %126 = vector.shape_cast %125 : vector<128x128xf32> to vector<8x16x128xf32>
    %127 = arith.addf %126, %19 : vector<8x16x128xf32>
    %c0_86 = arith.constant 0 : index
    %c0_87 = arith.constant 0 : index
    %c0_88 = arith.constant 0 : index
    %c0_89 = arith.constant 0 : index
    %128 = vector.load %arg9[%c0_86, %c0_87, %c0_88, %c0_89] : memref<1x8x16x128xf32, #tpu.memory_space<vmem>>, vector<1x8x16x128xf32>
    %129 = vector.shape_cast %128 : vector<1x8x16x128xf32> to vector<8x16x128xf32>
    %130 = vector.shape_cast %127 : vector<8x16x128xf32> to vector<1x8x16x128xf32>
    tpu.vector_store %arg9[%c0_86, %c0_87, %c0_88, %c0_89], %130 {strides = array<i32>} : memref<1x8x16x128xf32, #tpu.memory_space<vmem>>, vector<1x8x16x128xf32>,
    return
  }
  func.func @transform_1(%arg0: i32, %arg1: i32) -> (i32, i32) {
    %c0_i32 = arith.constant 0 : i32
    %c0_i32_0 = arith.constant 0 : i32
    %c0_i32_1 = arith.constant 0 : i32
    return %c0_i32, %c0_i32_0 : i32, i32
  }
  func.func @transform_2(%arg0: i32, %arg1: i32) -> (i32, i32) {
    %c0_i32 = arith.constant 0 : i32
    %c0_i32_0 = arith.constant 0 : i32
    %c0_i32_1 = arith.constant 0 : i32
    return %c0_i32, %c0_i32_0 : i32, i32
  }
  func.func @transform_3(%arg0: i32, %arg1: i32) -> (i32, i32) {
    %c0_i32 = arith.constant 0 : i32
    %c0_i32_0 = arith.constant 0 : i32
    %c0_i32_1 = arith.constant 0 : i32
    return %c0_i32, %c0_i32_0 : i32, i32
  }
  func.func @transform_4(%arg0: i32, %arg1: i32) -> (i32, i32, i32) {
    %c0_i32 = arith.constant 0 : i32
    %c0_i32_0 = arith.constant 0 : i32
    %c0_i32_1 = arith.constant 0 : i32
    %c0_i32_2 = arith.constant 0 : i32
    return %c0_i32, %c0_i32_0, %c0_i32_1 : i32, i32, i32
  }
  func.func @transform_5(%arg0: i32, %arg1: i32) -> (i32, i32) {
    %c0_i32 = arith.constant 0 : i32
    %c0_i32_0 = arith.constant 0 : i32
    %c0_i32_1 = arith.constant 0 : i32
    return %c0_i32, %c0_i32_0 : i32, i32
  }
  func.func @transform_6(%arg0: i32, %arg1: i32) -> (i32, i32) {
    %c0_i32 = arith.constant 0 : i32
    %c0_i32_0 = arith.constant 0 : i32
    %c0_i32_1 = arith.constant 0 : i32
    return %c0_i32, %c0_i32_0 : i32, i32
  }
  func.func @transform_7(%arg0: i32, %arg1: i32) -> (i32, i32, i32, i32) {
    %c0_i32 = arith.constant 0 : i32
    %c0_i32_0 = arith.constant 0 : i32
    %c0_i32_1 = arith.constant 0 : i32
    return %arg0, %arg1, %c0_i32, %c0_i32_0 : i32, i32, i32, i32
  }
}

</mosaic_0001>

<llo_original>
// kernel: tpu_custom_call.1
$region0: #{tpu_custom_call.1}
  #allocation0 [shape = 'u32[]', space=smem, size = 0x4, offset = 0x4, fixed_abs, tag = 'smem constant byte address 0x4 - core index']
  #allocation1 [shape = 'u32[72,128]{1,0:T(1,128)}', space=vmem, size = 0x9000, scoped, tag = 'internal scratch']
  #allocation2 [shape = 'f32[2,10,24,128]{3,2,1,0:T(8,128)}', space=vmem, size = 0x3c000, scoped, tag = 'scratch operand']
  #allocation3 [shape = 'f32[10,24,128]{2,1,0:T(8,128)}', space=vmem, size = 0x1e000, scoped, tag = 'scratch operand']
  #allocation4 [shape = 's32[2]{0}', space=sflag, size = 0x8, scoped, tag = 'scratch operand']
  #allocation11 [shape = 's32[]', space=sflag, size = 0x4, offset = 0, fixed_abs, tag = 'sflag constant byte address 0x0 - dummy sync flag']
  #allocation12 [shape = 's32[]', space=sflag, size = 0x4, offset = 0, fixed_abs, tag = 'sflag constant byte address 0x0 - dummy sync flag']
  #allocation13 [shape = 'u32[]', space=smem, size = 0x4, offset = 0x44, fixed_abs, tag = 'smem constant byte address 0x44 - assertion arg 0']
  #allocation14 [shape = 'u32[]', space=smem, size = 0x4, offset = 0x48, fixed_abs, tag = 'smem constant byte address 0x48 - assertion arg 1']
  #allocation15 [shape = 's32[]', space=sflag, size = 0x4, offset = 0, fixed_abs, tag = 'sflag constant byte address 0x0 - dummy sync flag']
  #allocation16 [shape = 's32[]', space=sflag, size = 0x4, offset = 0, fixed_abs, tag = 'sflag constant byte address 0x0 - dummy sync flag']
  %s0 = inlined_call_operand.hbm [shape: f32[2,18,24,128], index: 0, kind: input, shape index: {}]
  %s1 = inlined_call_operand.hbm [shape: f32[128,128], index: 1, kind: input, shape index: {}]
  %s2 = inlined_call_operand.vmem [shape: f32[1,128], index: 2, kind: input, shape index: {}]
  %s3 = inlined_call_operand.vmem [shape: f32[1,128], index: 3, kind: input, shape index: {}]
  %s4 = inlined_call_operand.hbm [shape: f32[9,128,128], index: 4, kind: input, shape index: {}]
  %s5 = inlined_call_operand.vmem [shape: f32[1,128], index: 5, kind: input, shape index: {}]
  %s6 = inlined_call_operand.vmem [shape: f32[1,128], index: 6, kind: input, shape index: {}]
  %s7 = inlined_call_operand.hbm [shape: f32[2,16,16,128], index: 7, kind: output, shape index: {}]
  %s8 = sld [smem:[#allocation0]]
  $region89: #{tpu_custom_call.1} parent=0
    _
  %s10 = ssub.s32 1, %s8
  %s11 = scalar_select 0, %s10, %s8
  $region1: #{tpu_custom_call.1} parent=0
    #allocation5 [shape = 'u8[65536]{0}', space=vmem, size = 0x10000, scoped, tag = 'input window, operand 1, single buffered']
    #allocation6 [shape = 's32[2]{0}', space=sflag, size = 0x8, scoped, tag = 'scoped memory for tpu_custom_call.1']
    #allocation7 [shape = 's32[2]{0}', space=sflag, size = 0x8, scoped, tag = 'scoped memory for tpu_custom_call.1']
    #allocation8 [shape = 'u8[589824]{0}', space=vmem, size = 0x90000, scoped, tag = 'input window, operand 4, single buffered']
    #allocation9 [shape = 's32[1]{0}', space=sflag, size = 0x4, scoped, tag = 'scoped memory for tpu_custom_call.1']
    #allocation10 [shape = 'u8[131072]{0}', space=vmem, size = 0x20000, scoped, tag = 'output window, operand 0']
    %12 = vsyncpa [#allocation6], 0
    %13 = vsyncpa [#allocation9], 0
    %14 = vsyncpa [#allocation7], 0
    %s15 = scalar_lea.sflag [#allocation7], 1
    %16 = vsyncpa %s15, 0
    loop: start=0, step=1, limit=6
    $region2: #{tpu_custom_call.1} parent=1 // loop_pre_header
      _
    $region3: #{tpu_custom_call.1} parent=1 // loop_header
      %s18 = sphi 0, %s22
      %p19 = scmp.ge.s32.totalorder %s18, 6
      %s25 = sphi 0, %s37
      %s26 = sphi 0, %s33
      %s27 = sphi 0, %s25
      %s28 = sphi 0, %s26
      %s29 = sphi 0, %s27
      %s30 = sphi 0, %s28
      %s38 = sphi 0, %s38
      %s40 = sphi 0, %s38
      %s41 = sphi 0, %s40
      %s55 = sphi 0, %s41
      %s59 = sphi 0, %s59
      %s61 = sphi 0, %s59
      %s62 = sphi 0, %s61
      %s76 = sphi 0, %s62
      %s80 = sphi 0, %s80
      %s82 = sphi 0, %s80
      %s83 = sphi 0, %s82
      %s97 = sphi 0, %s83
      %s101 = sphi 0, %s101
      %s103 = sphi 0, %s101
      %s104 = sphi 0, %s103
      %s118 = sphi 0, %s104
      %s122 = sphi 0, %s122
      %s124 = sphi 0, %s122
      %s125 = sphi 0, %s124
      %s139 = sphi 0, %s125
      %s143 = sphi 0, %s143
      %s145 = sphi 0, %s143
      %s146 = sphi 0, %s145
      %s160 = sphi 0, %s146
      %s168 = sphi 0, %s170
      %s171 = sphi 0, %s168
      %s172 = sphi 0, %s171
      %s188 = sphi 0, %s172
    $region4: #{tpu_custom_call.1} parent=1 // loop_header_branch
      %21 = sbr.rel (%p19) target = $region8
    $region5: #{tpu_custom_call.1} parent=1 // loop_body
      %s23 = ssub.s32 %s18, 1
      %s24 = ssub.s32 %s18, 2
      %s31 = sadd.s32 1, %s26
      %p32 = scmp.ge.s32.totalorder %s31, 2
      %s33 = scalar_select %p32, 0, %s31
      %s34 = sadd.s32 1, %s25
      %s35 = scalar_select %p32, %s34, %s25
      %p36 = scmp.ge.s32.totalorder %s35, 2
      %s37 = scalar_select %p36, 0, %s35
      %s39 = sadd.s32 %s38, 1
      %p42 = scmp.eq.s32.totalorder %s18, 3
      %p43 = scmp.ne.s32.totalorder %s38, %s40
      %p44 = scmp.eq.s32.totalorder %s18, 0
      %p45 = por %p43, %p44
      %p46 = scmp.ne.s32.totalorder %s38, %s40
      %p47 = scmp.eq.s32.totalorder %s23, 3
      %p48 = por %p46, %p47
      %p49 = scmp.ne.s32.totalorder %s40, %s41
      %p50 = scmp.eq.s32.totalorder %s23, 0
      %p51 = por %p49, %p50
      %p52 = scmp.ne.s32.totalorder %s40, %s41
      %p53 = scmp.eq.s32.totalorder %s24, 3
      %p54 = por %p52, %p53
      %p56 = scmp.ne.s32.totalorder %s41, %s55
      %p57 = scmp.eq.s32.totalorder %s24, 0
      %p58 = por %p56, %p57
      %s60 = sadd.s32 %s59, 1
      %p63 = scmp.eq.s32.totalorder %s18, 3
      %p64 = scmp.ne.s32.totalorder %s59, %s61
      %p65 = scmp.eq.s32.totalorder %s18, 0
      %p66 = por %p64, %p65
      %p67 = scmp.ne.s32.totalorder %s59, %s61
      %p68 = scmp.eq.s32.totalorder %s23, 3
      %p69 = por %p67, %p68
      %p70 = scmp.ne.s32.totalorder %s61, %s62
      %p71 = scmp.eq.s32.totalorder %s23, 0
      %p72 = por %p70, %p71
      %p73 = scmp.ne.s32.totalorder %s61, %s62
      %p74 = scmp.eq.s32.totalorder %s24, 3
      %p75 = por %p73, %p74
      %p77 = scmp.ne.s32.totalorder %s62, %s76
      %p78 = scmp.eq.s32.totalorder %s24, 0
      %p79 = por %p77, %p78
      %s81 = sadd.s32 %s80, 1
      %p84 = scmp.eq.s32.totalorder %s18, 3
      %p85 = scmp.ne.s32.totalorder %s80, %s82
      %p86 = scmp.eq.s32.totalorder %s18, 0
      %p87 = por %p85, %p86
      %p88 = scmp.ne.s32.totalorder %s80, %s82
      %p89 = scmp.eq.s32.totalorder %s23, 3
      %p90 = por %p88, %p89
      %p91 = scmp.ne.s32.totalorder %s82, %s83
      %p92 = scmp.eq.s32.totalorder %s23, 0
      %p93 = por %p91, %p92
      %p94 = scmp.ne.s32.totalorder %s82, %s83
      %p95 = scmp.eq.s32.totalorder %s24, 3
      %p96 = por %p94, %p95
      %p98 = scmp.ne.s32.totalorder %s83, %s97
      %p99 = scmp.eq.s32.totalorder %s24, 0
      %p100 = por %p98, %p99
      %s102 = sadd.s32 %s101, 1
      %p105 = scmp.eq.s32.totalorder %s18, 3
      %p106 = scmp.ne.s32.totalorder %s101, %s103
      %p107 = scmp.eq.s32.totalorder %s18, 0
      %p108 = por %p106, %p107
      %p109 = scmp.ne.s32.totalorder %s101, %s103
      %p110 = scmp.eq.s32.totalorder %s23, 3
      %p111 = por %p109, %p110
      %p112 = scmp.ne.s32.totalorder %s103, %s104
      %p113 = scmp.eq.s32.totalorder %s23, 0
      %p114 = por %p112, %p113
      %p115 = scmp.ne.s32.totalorder %s103, %s104
      %p116 = scmp.eq.s32.totalorder %s24, 3
      %p117 = por %p115, %p116
      %p119 = scmp.ne.s32.totalorder %s104, %s118
      %p120 = scmp.eq.s32.totalorder %s24, 0
      %p121 = por %p119, %p120
      %s123 = sadd.s32 %s122, 1
      %p126 = scmp.eq.s32.totalorder %s18, 3
      %p127 = scmp.ne.s32.totalorder %s122, %s124
      %p128 = scmp.eq.s32.totalorder %s18, 0
      %p129 = por %p127, %p128
      %p130 = scmp.ne.s32.totalorder %s122, %s124
      %p131 = scmp.eq.s32.totalorder %s23, 3
      %p132 = por %p130, %p131
      %p133 = scmp.ne.s32.totalorder %s124, %s125
      %p134 = scmp.eq.s32.totalorder %s23, 0
      %p135 = por %p133, %p134
      %p136 = scmp.ne.s32.totalorder %s124, %s125
      %p137 = scmp.eq.s32.totalorder %s24, 3
      %p138 = por %p136, %p137
      %p140 = scmp.ne.s32.totalorder %s125, %s139
      %p141 = scmp.eq.s32.totalorder %s24, 0
      %p142 = por %p140, %p141
      %s144 = sadd.s32 %s143, 1
      %p147 = scmp.eq.s32.totalorder %s18, 3
      %p148 = scmp.ne.s32.totalorder %s143, %s145
      %p149 = scmp.eq.s32.totalorder %s18, 0
      %p150 = por %p148, %p149
      %p151 = scmp.ne.s32.totalorder %s143, %s145
      %p152 = scmp.eq.s32.totalorder %s23, 3
      %p153 = por %p151, %p152
      %p154 = scmp.ne.s32.totalorder %s145, %s146
      %p155 = scmp.eq.s32.totalorder %s23, 0
      %p156 = por %p154, %p155
      %p157 = scmp.ne.s32.totalorder %s145, %s146
      %p158 = scmp.eq.s32.totalorder %s24, 3
      %p159 = por %p157, %p158
      %p161 = scmp.ne.s32.totalorder %s146, %s160
      %p162 = scmp.eq.s32.totalorder %s24, 0
      %p163 = por %p161, %p162
      %s164 = ssub.s32 %s25, %s37
      %s165 = ssub.s32 %s26, %s33
      %s166 = sor.u32 %s164, %s165
      %p167 = scmp.eq.s32.totalorder %s166, 0
      %s169 = sadd.s32 %s168, 1
      %s170 = scalar_select %p167, %s168, %s169
      %p173 = pneg %p167
      %p174 = scmp.eq.s32.totalorder %s18, 3
      %p175 = por %p173, %p174
      %p176 = scmp.ne.s32.totalorder %s168, %s171
      %p177 = scmp.eq.s32.totalorder %s18, 0
      %p178 = por %p176, %p177
      %p179 = scmp.ne.s32.totalorder %s168, %s171
      %p180 = scmp.eq.s32.totalorder %s23, 3
      %p181 = por %p179, %p180
      %p182 = scmp.ne.s32.totalorder %s171, %s172
      %p183 = scmp.eq.s32.totalorder %s23, 0
      %p184 = por %p182, %p183
      %p185 = scmp.ne.s32.totalorder %s171, %s172
      %p186 = scmp.eq.s32.totalorder %s24, 3
      %p187 = por %p185, %p186
      %p189 = scmp.ne.s32.totalorder %s172, %s188
      %p190 = scmp.eq.s32.totalorder %s24, 0
      %p191 = por %p189, %p190
      %p192 = scmp.le.s32.totalorder 1, %s18
      %p193 = scmp.lt.s32.totalorder %s18, 5
      %p194 = pnand %p192, %p193
      %p195 = pneg %p194
      // Predicated region
      $region9: #{tpu_custom_call.1} parent=5 // pred_check
        _
      $region10: #{tpu_custom_call.1} parent=5 // pred_check_branch
        %197 = sbr.rel (%p194) target = $region12
      $region11: #{tpu_custom_call.1} parent=5 // pred_region
        %s198 = ssub.s32 %s18, 1
        // Predicated region
        $region13: #{tpu_custom_call.1} parent=11 // pred_check
          %p199 = pneg %p51
        $region14: #{tpu_custom_call.1} parent=11 // pred_check_branch
          %201 = sbr.rel (%p199) target = $region16
        $region15: #{tpu_custom_call.1} parent=11 // pred_region
          %203 = vsyncadd [#allocation6], 0
          %s204 = sshll.u32 %s1, 4
          %s205 = int_to_ptr.hbm [resolvable:$true] %s204
          %s206 = sshll.u32 [#allocation5], 4
          %s207 = int_to_ptr.vmem [resolvable:$true] %s206
          %212 = dma.hbm_to_vmem [thread:$0]  %s205, 2048, %s207, [#allocation6], 128, 128, 8
        $region16: #{tpu_custom_call.1} parent=11 // pred_fallthru
          _
        // Predicated region
        $region17: #{tpu_custom_call.1} parent=11 // pred_check
          %p213 = pneg %p72
        $region18: #{tpu_custom_call.1} parent=11 // pred_check_branch
          %215 = sbr.rel (%p213) target = $region20
        $region19: #{tpu_custom_call.1} parent=11 // pred_region
          _
        $region20: #{tpu_custom_call.1} parent=11 // pred_fallthru
          _
        // Predicated region
        $region21: #{tpu_custom_call.1} parent=11 // pred_check
          %p216 = pneg %p93
        $region22: #{tpu_custom_call.1} parent=11 // pred_check_branch
          %218 = sbr.rel (%p216) target = $region24
        $region23: #{tpu_custom_call.1} parent=11 // pred_region
          _
        $region24: #{tpu_custom_call.1} parent=11 // pred_fallthru
          _
        // Predicated region
        $region25: #{tpu_custom_call.1} parent=11 // pred_check
          %p219 = pneg %p114
        $region26: #{tpu_custom_call.1} parent=11 // pred_check_branch
          %221 = sbr.rel (%p219) target = $region28
        $region27: #{tpu_custom_call.1} parent=11 // pred_region
          %223 = vsyncadd [#allocation9], 0
          %s224 = sshll.u32 %s4, 4
          %s225 = int_to_ptr.hbm [resolvable:$true] %s224
          %s226 = sshll.u32 [#allocation8], 4
          %s227 = int_to_ptr.vmem [resolvable:$true] %s226
          %232 = dma.hbm_to_vmem [thread:$0]  %s225, 18432, %s227, [#allocation9], 128, 128, 8
        $region28: #{tpu_custom_call.1} parent=11 // pred_fallthru
          _
        // Predicated region
        $region29: #{tpu_custom_call.1} parent=11 // pred_check
          %p233 = pneg %p135
        $region30: #{tpu_custom_call.1} parent=11 // pred_check_branch
          %235 = sbr.rel (%p233) target = $region32
        $region31: #{tpu_custom_call.1} parent=11 // pred_region
          _
        $region32: #{tpu_custom_call.1} parent=11 // pred_fallthru
          _
        // Predicated region
        $region33: #{tpu_custom_call.1} parent=11 // pred_check
          %p236 = pneg %p156
        $region34: #{tpu_custom_call.1} parent=11 // pred_check_branch
          %238 = sbr.rel (%p236) target = $region36
        $region35: #{tpu_custom_call.1} parent=11 // pred_region
          _
        $region36: #{tpu_custom_call.1} parent=11 // pred_fallthru
          _
      $region12: #{tpu_custom_call.1} parent=5 // pred_fallthru
        _
      %p239 = scmp.lt.s32.totalorder %s18, 4
      // Predicated region
      $region37: #{tpu_custom_call.1} parent=5 // pred_check
        %p240 = pneg %p239
      $region38: #{tpu_custom_call.1} parent=5 // pred_check_branch
        %242 = sbr.rel (%p240) target = $region40
      $region39: #{tpu_custom_call.1} parent=5 // pred_region
        _
      $region40: #{tpu_custom_call.1} parent=5 // pred_fallthru
        _
      %p243 = scmp.le.s32.totalorder 1, %s18
      %p244 = scmp.lt.s32.totalorder %s18, 5
      %p245 = pnand %p243, %p244
      %p246 = pneg %p245
      // Predicated region
      $region41: #{tpu_custom_call.1} parent=5 // pred_check
        _
      $region42: #{tpu_custom_call.1} parent=5 // pred_check_branch
        %248 = sbr.rel (%p245) target = $region44
      $region43: #{tpu_custom_call.1} parent=5 // pred_region
        %s249 = ssub.s32 %s18, 1
        // Predicated region
        $region45: #{tpu_custom_call.1} parent=43 // pred_check
          %p250 = pneg %p51
        $region46: #{tpu_custom_call.1} parent=43 // pred_check_branch
          %252 = sbr.rel (%p250) target = $region48
        $region47: #{tpu_custom_call.1} parent=43 // pred_region
          %254 = dma.done [#allocation6], 2048
        $region48: #{tpu_custom_call.1} parent=43 // pred_fallthru
          _
        // Predicated region
        $region49: #{tpu_custom_call.1} parent=43 // pred_check
          %p255 = pneg %p114
        $region50: #{tpu_custom_call.1} parent=43 // pred_check_branch
          %257 = sbr.rel (%p255) target = $region52
        $region51: #{tpu_custom_call.1} parent=43 // pred_region
          %259 = dma.done [#allocation9], 18432
        $region52: #{tpu_custom_call.1} parent=43 // pred_fallthru
          _
        %p260 = pneg %p51
        %p261 = pneg %p48
        %p262 = pneg %p72
        %p263 = pneg %p69
        %p264 = pneg %p93
        %p265 = pneg %p90
        %p266 = pneg %p114
        %p267 = pneg %p111
        %p268 = pneg %p135
        %p269 = pneg %p132
        %p270 = pneg %p156
        %p271 = pneg %p153
        %p272 = pneg %p184
        %p273 = pneg %p181
        %s274 = sand.u32 %s171, 1
        %s275 = scalar_lea.sflag [#allocation7], %s274
        %s276 = sand.u32 %s171, 1
        %s277 = smul.addr %s276, 128
        %s278 = scalar_lea.vmem [#allocation10], %s277
        %s279 = smul.u32 8, %s28
        %s280 = sand.u32 %s28, 1
        %p281 = scmp.eq.s32.totalorder %s28, 0
        // Predicated region
        $region53: #{tpu_custom_call.1} parent=43 // pred_check
          %p282 = pneg %p281
        $region54: #{tpu_custom_call.1} parent=43 // pred_check_branch
          %284 = sbr.rel (%p282) target = $region56
        $region55: #{tpu_custom_call.1} parent=43 // pred_region
          %s285 = smul.u32 0, 24
          %s286 = smul.u32 %s27, 432
          %s287 = sadd.s32 %s285, %s286
          %s288 = scalar_lea.hbm %s0, %s287
          // Predicated region
          $region57: #{tpu_custom_call.1} parent=55 // pred_check
            _
          $region58: #{tpu_custom_call.1} parent=55 // pred_check_branch
            %290 = sbr.rel target = $region60
          $region59: #{tpu_custom_call.1} parent=55 // pred_region
            %291 = sst [smem:[#allocation13]] [#allocation12]
            %292 = sst [smem:[#allocation14]] [#allocation11]
          $region60: #{tpu_custom_call.1} parent=55 // pred_fallthru
            _
          %294 = shalt.err (0)
          %s296 = sshll.u32 %s288, 4
          %s297 = int_to_ptr.hbm [resolvable:$true] %s296
          %s298 = sshll.u32 [#allocation2], 4
          %s299 = int_to_ptr.vmem [resolvable:$true] %s298
          %301 = dma.hbm_to_vmem [thread:$0]  %s297, 3840, %s299, [#allocation4]
        $region56: #{tpu_custom_call.1} parent=43 // pred_fallthru
          _
        %s302 = sadd.s32 %s28, 1
        %p303 = scmp.lt.s32.totalorder %s302, 2
        // Predicated region
        $region61: #{tpu_custom_call.1} parent=43 // pred_check
          %p304 = pneg %p303
        $region62: #{tpu_custom_call.1} parent=43 // pred_check_branch
          %306 = sbr.rel (%p304) target = $region64
        $region63: #{tpu_custom_call.1} parent=43 // pred_region
          %s307 = sand.u32 %s302, 1
          %s308 = smul.u32 %s302, 8
          %s309 = smul.u32 %s308, 24
          %s310 = smul.u32 %s27, 432
          %s311 = sadd.s32 %s309, %s310
          %s312 = scalar_lea.hbm %s0, %s311
          %s313 = smul.u32 %s307, 240
          %s314 = scalar_lea.vmem [#allocation2], %s313
          %s315 = scalar_lea.sflag [#allocation4], %s307
          // Predicated region
          $region65: #{tpu_custom_call.1} parent=63 // pred_check
            _
          $region66: #{tpu_custom_call.1} parent=63 // pred_check_branch
            %317 = sbr.rel target = $region68
          $region67: #{tpu_custom_call.1} parent=63 // pred_region
            %318 = sst [smem:[#allocation13]] [#allocation16]
            %319 = sst [smem:[#allocation14]] [#allocation15]
          $region68: #{tpu_custom_call.1} parent=63 // pred_fallthru
            _
          %321 = shalt.err (0)
          %s323 = sshll.u32 %s312, 4
          %s324 = int_to_ptr.hbm [resolvable:$true] %s323
          %s325 = sshll.u32 %s314, 4
          %s326 = int_to_ptr.vmem [resolvable:$true] %s325
          %328 = dma.hbm_to_vmem [thread:$0]  %s324, 3840, %s326, %s315
        $region64: #{tpu_custom_call.1} parent=43 // pred_fallthru
          _
        %s329 = smul.u32 %s28, 8
        %s330 = smul.u32 %s280, 240
        %s331 = scalar_lea.vmem [#allocation2], %s330
        %s332 = scalar_lea.sflag [#allocation4], %s280
        %s333 = smul.u32 10, 24
        %s334 = smul.u32 %s333, 1
        %s335 = sshll.u32 %s334, 4
        %336 = dma.done %s332, %s335
        %v337 = vld [vmem:[%s331] sm:$0xff]
        %v338 = vld [vmem:[%s331 + $0x8] sm:$0xff]
        %v339 = vld [vmem:[%s331 + $0x10] sm:$0xff]
        %v340 = vld [vmem:[%s331 + $0x18] sm:$0xff]
        %v341 = vld [vmem:[%s331 + $0x20] sm:$0xff]
        %v342 = vld [vmem:[%s331 + $0x28] sm:$0xff]
        %v343 = vld [vmem:[%s331 + $0x30] sm:$0xff]
        %v344 = vld [vmem:[%s331 + $0x38] sm:$0xff]
        %v345 = vld [vmem:[%s331 + $0x40] sm:$0xff]
        %v346 = vld [vmem:[%s331 + $0x48] sm:$0xff]
        %v347 = vld [vmem:[%s331 + $0x50] sm:$0xff]
        %v348 = vld [vmem:[%s331 + $0x58] sm:$0xff]
        %v349 = vld [vmem:[%s331 + $0x60] sm:$0xff]
        %v350 = vld [vmem:[%s331 + $0x68] sm:$0xff]
        %v351 = vld [vmem:[%s331 + $0x70] sm:$0xff]
        %v352 = vld [vmem:[%s331 + $0x78] sm:$0xff]
        %v353 = vld [vmem:[%s331 + $0x80] sm:$0xff]
        %v354 = vld [vmem:[%s331 + $0x88] sm:$0xff]
        %v355 = vld [vmem:[%s331 + $0x90] sm:$0xff]
        %v356 = vld [vmem:[%s331 + $0x98] sm:$0xff]
        %v357 = vld [vmem:[%s331 + $0xa0] sm:$0xff]
        %v358 = vld [vmem:[%s331 + $0xa8] sm:$0xff]
        %v359 = vld [vmem:[%s331 + $0xb0] sm:$0xff]
        %v360 = vld [vmem:[%s331 + $0xb8] sm:$0xff]
        %v361 = vld [vmem:[%s331 + $0xc0] sm:$0xff]
        %v362 = vld [vmem:[%s331 + $0xc8] sm:$0xff]
        %v363 = vld [vmem:[%s331 + $0xd0] sm:$0xff]
        %v364 = vld [vmem:[%s331 + $0xd8] sm:$0xff]
        %v365 = vld [vmem:[%s331 + $0xe0] sm:$0xff]
        %v366 = vld [vmem:[%s331 + $0xe8] sm:$0xff]
        %v367 = vld [vmem:[#allocation5] sm:$0xff]
        %v368 = vld [vmem:[#allocation5 + $0x8] sm:$0xff]
        %v369 = vld [vmem:[#allocation5 + $0x10] sm:$0xff]
        %v370 = vld [vmem:[#allocation5 + $0x18] sm:$0xff]
        %v371 = vld [vmem:[#allocation5 + $0x20] sm:$0xff]
        %v372 = vld [vmem:[#allocation5 + $0x28] sm:$0xff]
        %v373 = vld [vmem:[#allocation5 + $0x30] sm:$0xff]
        %v374 = vld [vmem:[#allocation5 + $0x38] sm:$0xff]
        %v375 = vld [vmem:[#allocation5 + $0x40] sm:$0xff]
        %v376 = vld [vmem:[#allocation5 + $0x48] sm:$0xff]
        %v377 = vld [vmem:[#allocation5 + $0x50] sm:$0xff]
        %v378 = vld [vmem:[#allocation5 + $0x58] sm:$0xff]
        %v379 = vld [vmem:[#allocation5 + $0x60] sm:$0xff]
        %v380 = vld [vmem:[#allocation5 + $0x68] sm:$0xff]
        %v381 = vld [vmem:[#allocation5 + $0x70] sm:$0xff]
        %v382 = vld [vmem:[#allocation5 + $0x78] sm:$0xff]
        %383 = vmatpush.msra.mxu0 %v382
        %384 = vmatpush.msra.mxu0 %v381
        %385 = vmatpush.msra.mxu0 %v380
        %386 = vmatpush.msra.mxu0 %v379
        %387 = vmatpush.msra.mxu0 %v378
        %388 = vmatpush.msra.mxu0 %v377
        %389 = vmatpush.msra.mxu0 %v376
        %390 = vmatpush.msra.mxu0 %v375
        %391 = vmatpush.msra.mxu0 %v374
        %392 = vmatpush.msra.mxu0 %v373
        %393 = vmatpush.msra.mxu0 %v372
        %394 = vmatpush.msra.mxu0 %v371
        %395 = vmatpush.msra.mxu0 %v370
        %396 = vmatpush.msra.mxu0 %v369
        %397 = vmatpush.msra.mxu0 %v368
        %398 = vmatpush.msra.mxu0 %v367
        %399 = vmatmul.f32.gmra.mxu0 %v337
        %v400 = vpop.f32.mrf.mxu0
        %v401 = vadd.f32 0.0, %v400
        %402 = vmatmul.f32.gmra.mxu0 %v338
        %v403 = vpop.f32.mrf.mxu0
        %v404 = vadd.f32 0.0, %v403
        %405 = vmatmul.f32.gmra.mxu0 %v339
        %v406 = vpop.f32.mrf.mxu0
        %v407 = vadd.f32 0.0, %v406
        %408 = vmatmul.f32.gmra.mxu0 %v340
        %v409 = vpop.f32.mrf.mxu0
        %v410 = vadd.f32 0.0, %v409
        %411 = vmatmul.f32.gmra.mxu0 %v341
        %v412 = vpop.f32.mrf.mxu0
        %v413 = vadd.f32 0.0, %v412
        %414 = vmatmul.f32.gmra.mxu0 %v342
        %v415 = vpop.f32.mrf.mxu0
        %v416 = vadd.f32 0.0, %v415
        %417 = vmatmul.f32.gmra.mxu0 %v343
        %v418 = vpop.f32.mrf.mxu0
        %v419 = vadd.f32 0.0, %v418
        %420 = vmatmul.f32.gmra.mxu0 %v344
        %v421 = vpop.f32.mrf.mxu0
        %v422 = vadd.f32 0.0, %v421
        %423 = vmatmul.f32.gmra.mxu0 %v345
        %v424 = vpop.f32.mrf.mxu0
        %v425 = vadd.f32 0.0, %v424
        %426 = vmatmul.f32.gmra.mxu0 %v346
        %v427 = vpop.f32.mrf.mxu0
        %v428 = vadd.f32 0.0, %v427
        %429 = vmatmul.f32.gmra.mxu0 %v347
        %v430 = vpop.f32.mrf.mxu0
        %v431 = vadd.f32 0.0, %v430
        %432 = vmatmul.f32.gmra.mxu0 %v348
        %v433 = vpop.f32.mrf.mxu0
        %v434 = vadd.f32 0.0, %v433
        %435 = vmatmul.f32.gmra.mxu0 %v349
        %v436 = vpop.f32.mrf.mxu0
        %v437 = vadd.f32 0.0, %v436
        %438 = vmatmul.f32.gmra.mxu0 %v350
        %v439 = vpop.f32.mrf.mxu0
        %v440 = vadd.f32 0.0, %v439
        %441 = vmatmul.f32.gmra.mxu0 %v351
        %v442 = vpop.f32.mrf.mxu0
        %v443 = vadd.f32 0.0, %v442
        %444 = vmatmul.f32.gmra.mxu0 %v352
        %v445 = vpop.f32.mrf.mxu0
        %v446 = vadd.f32 0.0, %v445
        %447 = vmatmul.f32.gmra.mxu0 %v353
        %v448 = vpop.f32.mrf.mxu0
        %v449 = vadd.f32 0.0, %v448
        %450 = vmatmul.f32.gmra.mxu0 %v354
        %v451 = vpop.f32.mrf.mxu0
        %v452 = vadd.f32 0.0, %v451
        %453 = vmatmul.f32.gmra.mxu0 %v355
        %v454 = vpop.f32.mrf.mxu0
        %v455 = vadd.f32 0.0, %v454
        %456 = vmatmul.f32.gmra.mxu0 %v356
        %v457 = vpop.f32.mrf.mxu0
        %v458 = vadd.f32 0.0, %v457
        %459 = vmatmul.f32.gmra.mxu0 %v357
        %v460 = vpop.f32.mrf.mxu0
        %v461 = vadd.f32 0.0, %v460
        %462 = vmatmul.f32.gmra.mxu0 %v358
        %v463 = vpop.f32.mrf.mxu0
        %v464 = vadd.f32 0.0, %v463
        %465 = vmatmul.f32.gmra.mxu0 %v359
        %v466 = vpop.f32.mrf.mxu0
        %v467 = vadd.f32 0.0, %v466
        %468 = vmatmul.f32.gmra.mxu0 %v360
        %v469 = vpop.f32.mrf.mxu0
        %v470 = vadd.f32 0.0, %v469
        %471 = vmatmul.f32.gmra.mxu0 %v361
        %v472 = vpop.f32.mrf.mxu0
        %v473 = vadd.f32 0.0, %v472
        %474 = vmatmul.f32.gmra.mxu0 %v362
        %v475 = vpop.f32.mrf.mxu0
        %v476 = vadd.f32 0.0, %v475
        %477 = vmatmul.f32.gmra.mxu0 %v363
        %v478 = vpop.f32.mrf.mxu0
        %v479 = vadd.f32 0.0, %v478
        %480 = vmatmul.f32.gmra.mxu0 %v364
        %v481 = vpop.f32.mrf.mxu0
        %v482 = vadd.f32 0.0, %v481
        %483 = vmatmul.f32.gmra.mxu0 %v365
        %v484 = vpop.f32.mrf.mxu0
        %v485 = vadd.f32 0.0, %v484
        %486 = vmatmul.f32.gmra.mxu0 %v366
        %v487 = vpop.f32.mrf.mxu0
        %v488 = vadd.f32 0.0, %v487
        %489 = vdwg.mxu0
        %v490 = vld [vmem:[%s2] sm:$0x1]
        %v492 = vperm.slane %v490, 0
        %v494 = vmul.f32 %v401, %v492
        %v495 = vmul.f32 %v404, %v492
        %v496 = vmul.f32 %v407, %v492
        %v497 = vmul.f32 %v410, %v492
        %v498 = vmul.f32 %v413, %v492
        %v499 = vmul.f32 %v416, %v492
        %v500 = vmul.f32 %v419, %v492
        %v501 = vmul.f32 %v422, %v492
        %v502 = vmul.f32 %v425, %v492
        %v503 = vmul.f32 %v428, %v492
        %v504 = vmul.f32 %v431, %v492
        %v505 = vmul.f32 %v434, %v492
        %v506 = vmul.f32 %v437, %v492
        %v507 = vmul.f32 %v440, %v492
        %v508 = vmul.f32 %v443, %v492
        %v509 = vmul.f32 %v446, %v492
        %v510 = vmul.f32 %v449, %v492
        %v511 = vmul.f32 %v452, %v492
        %v512 = vmul.f32 %v455, %v492
        %v513 = vmul.f32 %v458, %v492
        %v514 = vmul.f32 %v461, %v492
        %v515 = vmul.f32 %v464, %v492
        %v516 = vmul.f32 %v467, %v492
        %v517 = vmul.f32 %v470, %v492
        %v518 = vmul.f32 %v473, %v492
        %v519 = vmul.f32 %v476, %v492
        %v520 = vmul.f32 %v479, %v492
        %v521 = vmul.f32 %v482, %v492
        %v522 = vmul.f32 %v485, %v492
        %v523 = vmul.f32 %v488, %v492
        %v524 = vld [vmem:[%s3] sm:$0x1]
        %v526 = vperm.slane %v524, 0
        %v528 = vadd.f32 %v494, %v526
        %v529 = vadd.f32 %v495, %v526
        %v530 = vadd.f32 %v496, %v526
        %v531 = vadd.f32 %v497, %v526
        %v532 = vadd.f32 %v498, %v526
        %v533 = vadd.f32 %v499, %v526
        %v534 = vadd.f32 %v500, %v526
        %v535 = vadd.f32 %v501, %v526
        %v536 = vadd.f32 %v502, %v526
        %v537 = vadd.f32 %v503, %v526
        %v538 = vadd.f32 %v504, %v526
        %v539 = vadd.f32 %v505, %v526
        %v540 = vadd.f32 %v506, %v526
        %v541 = vadd.f32 %v507, %v526
        %v542 = vadd.f32 %v508, %v526
        %v543 = vadd.f32 %v509, %v526
        %v544 = vadd.f32 %v510, %v526
        %v545 = vadd.f32 %v511, %v526
        %v546 = vadd.f32 %v512, %v526
        %v547 = vadd.f32 %v513, %v526
        %v548 = vadd.f32 %v514, %v526
        %v549 = vadd.f32 %v515, %v526
        %v550 = vadd.f32 %v516, %v526
        %v551 = vadd.f32 %v517, %v526
        %v552 = vadd.f32 %v518, %v526
        %v553 = vadd.f32 %v519, %v526
        %v554 = vadd.f32 %v520, %v526
        %v555 = vadd.f32 %v521, %v526
        %v556 = vadd.f32 %v522, %v526
        %v557 = vadd.f32 %v523, %v526
        %v558 = vxor.u32 %v528, 2147483648
        %v559 = vxor.u32 %v529, 2147483648
        %v560 = vxor.u32 %v530, 2147483648
        %v561 = vxor.u32 %v531, 2147483648
        %v562 = vxor.u32 %v532, 2147483648
        %v563 = vxor.u32 %v533, 2147483648
        %v564 = vxor.u32 %v534, 2147483648
        %v565 = vxor.u32 %v535, 2147483648
        %v566 = vxor.u32 %v536, 2147483648
        %v567 = vxor.u32 %v537, 2147483648
        %v568 = vxor.u32 %v538, 2147483648
        %v569 = vxor.u32 %v539, 2147483648
        %v570 = vxor.u32 %v540, 2147483648
        %v571 = vxor.u32 %v541, 2147483648
        %v572 = vxor.u32 %v542, 2147483648
        %v573 = vxor.u32 %v543, 2147483648
        %v574 = vxor.u32 %v544, 2147483648
        %v575 = vxor.u32 %v545, 2147483648
        %v576 = vxor.u32 %v546, 2147483648
        %v577 = vxor.u32 %v547, 2147483648
        %v578 = vxor.u32 %v548, 2147483648
        %v579 = vxor.u32 %v549, 2147483648
        %v580 = vxor.u32 %v550, 2147483648
        %v581 = vxor.u32 %v551, 2147483648
        %v582 = vxor.u32 %v552, 2147483648
        %v583 = vxor.u32 %v553, 2147483648
        %v584 = vxor.u32 %v554, 2147483648
        %v585 = vxor.u32 %v555, 2147483648
        %v586 = vxor.u32 %v556, 2147483648
        %v587 = vxor.u32 %v557, 2147483648
        %v588 = vmul.f32 %v558, 1.442695
        %v589 = vpow.pop %v588
        %v590 = vmul.f32 %v559, 1.442695
        %v591 = vpow.pop %v590
        %v592 = vmul.f32 %v560, 1.442695
        %v593 = vpow.pop %v592
        %v594 = vmul.f32 %v561, 1.442695
        %v595 = vpow.pop %v594
        %v596 = vmul.f32 %v562, 1.442695
        %v597 = vpow.pop %v596
        %v598 = vmul.f32 %v563, 1.442695
        %v599 = vpow.pop %v598
        %v600 = vmul.f32 %v564, 1.442695
        %v601 = vpow.pop %v600
        %v602 = vmul.f32 %v565, 1.442695
        %v603 = vpow.pop %v602
        %v604 = vmul.f32 %v566, 1.442695
        %v605 = vpow.pop %v604
        %v606 = vmul.f32 %v567, 1.442695
        %v607 = vpow.pop %v606
        %v608 = vmul.f32 %v568, 1.442695
        %v609 = vpow.pop %v608
        %v610 = vmul.f32 %v569, 1.442695
        %v611 = vpow.pop %v610
        %v612 = vmul.f32 %v570, 1.442695
        %v613 = vpow.pop %v612
        %v614 = vmul.f32 %v571, 1.442695
        %v615 = vpow.pop %v614
        %v616 = vmul.f32 %v572, 1.442695
        %v617 = vpow.pop %v616
        %v618 = vmul.f32 %v573, 1.442695
        %v619 = vpow.pop %v618
        %v620 = vmul.f32 %v574, 1.442695
        %v621 = vpow.pop %v620
        %v622 = vmul.f32 %v575, 1.442695
        %v623 = vpow.pop %v622
        %v624 = vmul.f32 %v576, 1.442695
        %v625 = vpow.pop %v624
        %v626 = vmul.f32 %v577, 1.442695
        %v627 = vpow.pop %v626
        %v628 = vmul.f32 %v578, 1.442695
        %v629 = vpow.pop %v628
        %v630 = vmul.f32 %v579, 1.442695
        %v631 = vpow.pop %v630
        %v632 = vmul.f32 %v580, 1.442695
        %v633 = vpow.pop %v632
        %v634 = vmul.f32 %v581, 1.442695
        %v635 = vpow.pop %v634
        %v636 = vmul.f32 %v582, 1.442695
        %v637 = vpow.pop %v636
        %v638 = vmul.f32 %v583, 1.442695
        %v639 = vpow.pop %v638
        %v640 = vmul.f32 %v584, 1.442695
        %v641 = vpow.pop %v640
        %v642 = vmul.f32 %v585, 1.442695
        %v643 = vpow.pop %v642
        %v644 = vmul.f32 %v586, 1.442695
        %v645 = vpow.pop %v644
        %v646 = vmul.f32 %v587, 1.442695
        %v647 = vpow.pop %v646
        %v648 = vadd.f32 %v589, 1.0
        %v649 = vadd.f32 %v591, 1.0
        %v650 = vadd.f32 %v593, 1.0
        %v651 = vadd.f32 %v595, 1.0
        %v652 = vadd.f32 %v597, 1.0
        %v653 = vadd.f32 %v599, 1.0
        %v654 = vadd.f32 %v601, 1.0
        %v655 = vadd.f32 %v603, 1.0
        %v656 = vadd.f32 %v605, 1.0
        %v657 = vadd.f32 %v607, 1.0
        %v658 = vadd.f32 %v609, 1.0
        %v659 = vadd.f32 %v611, 1.0
        %v660 = vadd.f32 %v613, 1.0
        %v661 = vadd.f32 %v615, 1.0
        %v662 = vadd.f32 %v617, 1.0
        %v663 = vadd.f32 %v619, 1.0
        %v664 = vadd.f32 %v621, 1.0
        %v665 = vadd.f32 %v623, 1.0
        %v666 = vadd.f32 %v625, 1.0
        %v667 = vadd.f32 %v627, 1.0
        %v668 = vadd.f32 %v629, 1.0
        %v669 = vadd.f32 %v631, 1.0
        %v670 = vadd.f32 %v633, 1.0
        %v671 = vadd.f32 %v635, 1.0
        %v672 = vadd.f32 %v637, 1.0
        %v673 = vadd.f32 %v639, 1.0
        %v674 = vadd.f32 %v641, 1.0
        %v675 = vadd.f32 %v643, 1.0
        %v676 = vadd.f32 %v645, 1.0
        %v677 = vadd.f32 %v647, 1.0
        %v678 = vrcp.pop %v648
        %v679 = vmul.f32 %v648, %v678
        %v680 = vsub.f32 1.0, %v679
        %v681 = vmul.f32 %v678, %v680
        %v682 = vadd.f32 %v678, %v681
        %vm683 = vweird.f32 %v648
        %vm684 = vweird.f32 %v678
        %vm685 = vmor %vm683, %vm684
        %v686 = vsel %vm685, %v678, %v682
        %v687 = vand.u32 2147483647, %v648
        %vm688 = vcmp.eq.f32.partialorder %v687, 8.507059e+37
        %v689 = vand.u32 %v648, 2147483648
        %v690 = vor.u32 1.1754944e-38, %v689
        %v691 = vsel %vm688, %v690, %v686
        %v692 = vmul.f32 1.0, %v691
        %v693 = vrcp.pop %v649
        %v694 = vmul.f32 %v649, %v693
        %v695 = vsub.f32 1.0, %v694
        %v696 = vmul.f32 %v693, %v695
        %v697 = vadd.f32 %v693, %v696
        %vm698 = vweird.f32 %v649
        %vm699 = vweird.f32 %v693
        %vm700 = vmor %vm698, %vm699
        %v701 = vsel %vm700, %v693, %v697
        %v702 = vand.u32 2147483647, %v649
        %vm703 = vcmp.eq.f32.partialorder %v702, 8.507059e+37
        %v704 = vand.u32 %v649, 2147483648
        %v705 = vor.u32 1.1754944e-38, %v704
        %v706 = vsel %vm703, %v705, %v701
        %v707 = vmul.f32 1.0, %v706
        %v708 = vrcp.pop %v650
        %v709 = vmul.f32 %v650, %v708
        %v710 = vsub.f32 1.0, %v709
        %v711 = vmul.f32 %v708, %v710
        %v712 = vadd.f32 %v708, %v711
        %vm713 = vweird.f32 %v650
        %vm714 = vweird.f32 %v708
        %vm715 = vmor %vm713, %vm714
        %v716 = vsel %vm715, %v708, %v712
        %v717 = vand.u32 2147483647, %v650
        %vm718 = vcmp.eq.f32.partialorder %v717, 8.507059e+37
        %v719 = vand.u32 %v650, 2147483648
        %v720 = vor.u32 1.1754944e-38, %v719
        %v721 = vsel %vm718, %v720, %v716
        %v722 = vmul.f32 1.0, %v721
        %v723 = vrcp.pop %v651
        %v724 = vmul.f32 %v651, %v723
        %v725 = vsub.f32 1.0, %v724
        %v726 = vmul.f32 %v723, %v725
        %v727 = vadd.f32 %v723, %v726
        %vm728 = vweird.f32 %v651
        %vm729 = vweird.f32 %v723
        %vm730 = vmor %vm728, %vm729
        %v731 = vsel %vm730, %v723, %v727
        %v732 = vand.u32 2147483647, %v651
        %vm733 = vcmp.eq.f32.partialorder %v732, 8.507059e+37
        %v734 = vand.u32 %v651, 2147483648
        %v735 = vor.u32 1.1754944e-38, %v734
        %v736 = vsel %vm733, %v735, %v731
        %v737 = vmul.f32 1.0, %v736
        %v738 = vrcp.pop %v652
        %v739 = vmul.f32 %v652, %v738
        %v740 = vsub.f32 1.0, %v739
        %v741 = vmul.f32 %v738, %v740
        %v742 = vadd.f32 %v738, %v741
        %vm743 = vweird.f32 %v652
        %vm744 = vweird.f32 %v738
        %vm745 = vmor %vm743, %vm744
        %v746 = vsel %vm745, %v738, %v742
        %v747 = vand.u32 2147483647, %v652
        %vm748 = vcmp.eq.f32.partialorder %v747, 8.507059e+37
        %v749 = vand.u32 %v652, 2147483648
        %v750 = vor.u32 1.1754944e-38, %v749
        %v751 = vsel %vm748, %v750, %v746
        %v752 = vmul.f32 1.0, %v751
        %v753 = vrcp.pop %v653
        %v754 = vmul.f32 %v653, %v753
        %v755 = vsub.f32 1.0, %v754
        %v756 = vmul.f32 %v753, %v755
        %v757 = vadd.f32 %v753, %v756
        %vm758 = vweird.f32 %v653
        %vm759 = vweird.f32 %v753
        %vm760 = vmor %vm758, %vm759
        %v761 = vsel %vm760, %v753, %v757
        %v762 = vand.u32 2147483647, %v653
        %vm763 = vcmp.eq.f32.partialorder %v762, 8.507059e+37
        %v764 = vand.u32 %v653, 2147483648
        %v765 = vor.u32 1.1754944e-38, %v764
        %v766 = vsel %vm763, %v765, %v761
        %v767 = vmul.f32 1.0, %v766
        %v768 = vrcp.pop %v654
        %v769 = vmul.f32 %v654, %v768
        %v770 = vsub.f32 1.0, %v769
        %v771 = vmul.f32 %v768, %v770
        %v772 = vadd.f32 %v768, %v771
        %vm773 = vweird.f32 %v654
        %vm774 = vweird.f32 %v768
        %vm775 = vmor %vm773, %vm774
        %v776 = vsel %vm775, %v768, %v772
        %v777 = vand.u32 2147483647, %v654
        %vm778 = vcmp.eq.f32.partialorder %v777, 8.507059e+37
        %v779 = vand.u32 %v654, 2147483648
        %v780 = vor.u32 1.1754944e-38, %v779
        %v781 = vsel %vm778, %v780, %v776
        %v782 = vmul.f32 1.0, %v781
        %v783 = vrcp.pop %v655
        %v784 = vmul.f32 %v655, %v783
        %v785 = vsub.f32 1.0, %v784
        %v786 = vmul.f32 %v783, %v785
        %v787 = vadd.f32 %v783, %v786
        %vm788 = vweird.f32 %v655
        %vm789 = vweird.f32 %v783
        %vm790 = vmor %vm788, %vm789
        %v791 = vsel %vm790, %v783, %v787
        %v792 = vand.u32 2147483647, %v655
        %vm793 = vcmp.eq.f32.partialorder %v792, 8.507059e+37
        %v794 = vand.u32 %v655, 2147483648
        %v795 = vor.u32 1.1754944e-38, %v794
        %v796 = vsel %vm793, %v795, %v791
        %v797 = vmul.f32 1.0, %v796
        %v798 = vrcp.pop %v656
        %v799 = vmul.f32 %v656, %v798
        %v800 = vsub.f32 1.0, %v799
        %v801 = vmul.f32 %v798, %v800
        %v802 = vadd.f32 %v798, %v801
        %vm803 = vweird.f32 %v656
        %vm804 = vweird.f32 %v798
        %vm805 = vmor %vm803, %vm804
        %v806 = vsel %vm805, %v798, %v802
        %v807 = vand.u32 2147483647, %v656
        %vm808 = vcmp.eq.f32.partialorder %v807, 8.507059e+37
        %v809 = vand.u32 %v656, 2147483648
        %v810 = vor.u32 1.1754944e-38, %v809
        %v811 = vsel %vm808, %v810, %v806
        %v812 = vmul.f32 1.0, %v811
        %v813 = vrcp.pop %v657
        %v814 = vmul.f32 %v657, %v813
        %v815 = vsub.f32 1.0, %v814
        %v816 = vmul.f32 %v813, %v815
        %v817 = vadd.f32 %v813, %v816
        %vm818 = vweird.f32 %v657
        %vm819 = vweird.f32 %v813
        %vm820 = vmor %vm818, %vm819
        %v821 = vsel %vm820, %v813, %v817
        %v822 = vand.u32 2147483647, %v657
        %vm823 = vcmp.eq.f32.partialorder %v822, 8.507059e+37
        %v824 = vand.u32 %v657, 2147483648
        %v825 = vor.u32 1.1754944e-38, %v824
        %v826 = vsel %vm823, %v825, %v821
        %v827 = vmul.f32 1.0, %v826
        %v828 = vrcp.pop %v658
        %v829 = vmul.f32 %v658, %v828
        %v830 = vsub.f32 1.0, %v829
        %v831 = vmul.f32 %v828, %v830
        %v832 = vadd.f32 %v828, %v831
        %vm833 = vweird.f32 %v658
        %vm834 = vweird.f32 %v828
        %vm835 = vmor %vm833, %vm834
        %v836 = vsel %vm835, %v828, %v832
        %v837 = vand.u32 2147483647, %v658
        %vm838 = vcmp.eq.f32.partialorder %v837, 8.507059e+37
        %v839 = vand.u32 %v658, 2147483648
        %v840 = vor.u32 1.1754944e-38, %v839
        %v841 = vsel %vm838, %v840, %v836
        %v842 = vmul.f32 1.0, %v841
        %v843 = vrcp.pop %v659
        %v844 = vmul.f32 %v659, %v843
        %v845 = vsub.f32 1.0, %v844
        %v846 = vmul.f32 %v843, %v845
        %v847 = vadd.f32 %v843, %v846
        %vm848 = vweird.f32 %v659
        %vm849 = vweird.f32 %v843
        %vm850 = vmor %vm848, %vm849
        %v851 = vsel %vm850, %v843, %v847
        %v852 = vand.u32 2147483647, %v659
        %vm853 = vcmp.eq.f32.partialorder %v852, 8.507059e+37
        %v854 = vand.u32 %v659, 2147483648
        %v855 = vor.u32 1.1754944e-38, %v854
        %v856 = vsel %vm853, %v855, %v851
        %v857 = vmul.f32 1.0, %v856
        %v858 = vrcp.pop %v660
        %v859 = vmul.f32 %v660, %v858
        %v860 = vsub.f32 1.0, %v859
        %v861 = vmul.f32 %v858, %v860
        %v862 = vadd.f32 %v858, %v861
        %vm863 = vweird.f32 %v660
        %vm864 = vweird.f32 %v858
        %vm865 = vmor %vm863, %vm864
        %v866 = vsel %vm865, %v858, %v862
        %v867 = vand.u32 2147483647, %v660
        %vm868 = vcmp.eq.f32.partialorder %v867, 8.507059e+37
        %v869 = vand.u32 %v660, 2147483648
        %v870 = vor.u32 1.1754944e-38, %v869
        %v871 = vsel %vm868, %v870, %v866
        %v872 = vmul.f32 1.0, %v871
        %v873 = vrcp.pop %v661
        %v874 = vmul.f32 %v661, %v873
        %v875 = vsub.f32 1.0, %v874
        %v876 = vmul.f32 %v873, %v875
        %v877 = vadd.f32 %v873, %v876
        %vm878 = vweird.f32 %v661
        %vm879 = vweird.f32 %v873
        %vm880 = vmor %vm878, %vm879
        %v881 = vsel %vm880, %v873, %v877
        %v882 = vand.u32 2147483647, %v661
        %vm883 = vcmp.eq.f32.partialorder %v882, 8.507059e+37
        %v884 = vand.u32 %v661, 2147483648
        %v885 = vor.u32 1.1754944e-38, %v884
        %v886 = vsel %vm883, %v885, %v881
        %v887 = vmul.f32 1.0, %v886
        %v888 = vrcp.pop %v662
        %v889 = vmul.f32 %v662, %v888
        %v890 = vsub.f32 1.0, %v889
        %v891 = vmul.f32 %v888, %v890
        %v892 = vadd.f32 %v888, %v891
        %vm893 = vweird.f32 %v662
        %vm894 = vweird.f32 %v888
        %vm895 = vmor %vm893, %vm894
        %v896 = vsel %vm895, %v888, %v892
        %v897 = vand.u32 2147483647, %v662
        %vm898 = vcmp.eq.f32.partialorder %v897, 8.507059e+37
        %v899 = vand.u32 %v662, 2147483648
        %v900 = vor.u32 1.1754944e-38, %v899
        %v901 = vsel %vm898, %v900, %v896
        %v902 = vmul.f32 1.0, %v901
        %v903 = vrcp.pop %v663
        %v904 = vmul.f32 %v663, %v903
        %v905 = vsub.f32 1.0, %v904
        %v906 = vmul.f32 %v903, %v905
        %v907 = vadd.f32 %v903, %v906
        %vm908 = vweird.f32 %v663
        %vm909 = vweird.f32 %v903
        %vm910 = vmor %vm908, %vm909
        %v911 = vsel %vm910, %v903, %v907
        %v912 = vand.u32 2147483647, %v663
        %vm913 = vcmp.eq.f32.partialorder %v912, 8.507059e+37
        %v914 = vand.u32 %v663, 2147483648
        %v915 = vor.u32 1.1754944e-38, %v914
        %v916 = vsel %vm913, %v915, %v911
        %v917 = vmul.f32 1.0, %v916
        %v918 = vrcp.pop %v664
        %v919 = vmul.f32 %v664, %v918
        %v920 = vsub.f32 1.0, %v919
        %v921 = vmul.f32 %v918, %v920
        %v922 = vadd.f32 %v918, %v921
        %vm923 = vweird.f32 %v664
        %vm924 = vweird.f32 %v918
        %vm925 = vmor %vm923, %vm924
        %v926 = vsel %vm925, %v918, %v922
        %v927 = vand.u32 2147483647, %v664
        %vm928 = vcmp.eq.f32.partialorder %v927, 8.507059e+37
        %v929 = vand.u32 %v664, 2147483648
        %v930 = vor.u32 1.1754944e-38, %v929
        %v931 = vsel %vm928, %v930, %v926
        %v932 = vmul.f32 1.0, %v931
        %v933 = vrcp.pop %v665
        %v934 = vmul.f32 %v665, %v933
        %v935 = vsub.f32 1.0, %v934
        %v936 = vmul.f32 %v933, %v935
        %v937 = vadd.f32 %v933, %v936
        %vm938 = vweird.f32 %v665
        %vm939 = vweird.f32 %v933
        %vm940 = vmor %vm938, %vm939
        %v941 = vsel %vm940, %v933, %v937
        %v942 = vand.u32 2147483647, %v665
        %vm943 = vcmp.eq.f32.partialorder %v942, 8.507059e+37
        %v944 = vand.u32 %v665, 2147483648
        %v945 = vor.u32 1.1754944e-38, %v944
        %v946 = vsel %vm943, %v945, %v941
        %v947 = vmul.f32 1.0, %v946
        %v948 = vrcp.pop %v666
        %v949 = vmul.f32 %v666, %v948
        %v950 = vsub.f32 1.0, %v949
        %v951 = vmul.f32 %v948, %v950
        %v952 = vadd.f32 %v948, %v951
        %vm953 = vweird.f32 %v666
        %vm954 = vweird.f32 %v948
        %vm955 = vmor %vm953, %vm954
        %v956 = vsel %vm955, %v948, %v952
        %v957 = vand.u32 2147483647, %v666
        %vm958 = vcmp.eq.f32.partialorder %v957, 8.507059e+37
        %v959 = vand.u32 %v666, 2147483648
        %v960 = vor.u32 1.1754944e-38, %v959
        %v961 = vsel %vm958, %v960, %v956
        %v962 = vmul.f32 1.0, %v961
        %v963 = vrcp.pop %v667
        %v964 = vmul.f32 %v667, %v963
        %v965 = vsub.f32 1.0, %v964
        %v966 = vmul.f32 %v963, %v965
        %v967 = vadd.f32 %v963, %v966
        %vm968 = vweird.f32 %v667
        %vm969 = vweird.f32 %v963
        %vm970 = vmor %vm968, %vm969
        %v971 = vsel %vm970, %v963, %v967
        %v972 = vand.u32 2147483647, %v667
        %vm973 = vcmp.eq.f32.partialorder %v972, 8.507059e+37
        %v974 = vand.u32 %v667, 2147483648
        %v975 = vor.u32 1.1754944e-38, %v974
        %v976 = vsel %vm973, %v975, %v971
        %v977 = vmul.f32 1.0, %v976
        %v978 = vrcp.pop %v668
        %v979 = vmul.f32 %v668, %v978
        %v980 = vsub.f32 1.0, %v979
        %v981 = vmul.f32 %v978, %v980
        %v982 = vadd.f32 %v978, %v981
        %vm983 = vweird.f32 %v668
        %vm984 = vweird.f32 %v978
        %vm985 = vmor %vm983, %vm984
        %v986 = vsel %vm985, %v978, %v982
        %v987 = vand.u32 2147483647, %v668
        %vm988 = vcmp.eq.f32.partialorder %v987, 8.507059e+37
        %v989 = vand.u32 %v668, 2147483648
        %v990 = vor.u32 1.1754944e-38, %v989
        %v991 = vsel %vm988, %v990, %v986
        %v992 = vmul.f32 1.0, %v991
        %v993 = vrcp.pop %v669
        %v994 = vmul.f32 %v669, %v993
        %v995 = vsub.f32 1.0, %v994
        %v996 = vmul.f32 %v993, %v995
        %v997 = vadd.f32 %v993, %v996
        %vm998 = vweird.f32 %v669
        %vm999 = vweird.f32 %v993
        %vm1000 = vmor %vm998, %vm999
        %v1001 = vsel %vm1000, %v993, %v997
        %v1002 = vand.u32 2147483647, %v669
        %vm1003 = vcmp.eq.f32.partialorder %v1002, 8.507059e+37
        %v1004 = vand.u32 %v669, 2147483648
        %v1005 = vor.u32 1.1754944e-38, %v1004
        %v1006 = vsel %vm1003, %v1005, %v1001
        %v1007 = vmul.f32 1.0, %v1006
        %v1008 = vrcp.pop %v670
        %v1009 = vmul.f32 %v670, %v1008
        %v1010 = vsub.f32 1.0, %v1009
        %v1011 = vmul.f32 %v1008, %v1010
        %v1012 = vadd.f32 %v1008, %v1011
        %vm1013 = vweird.f32 %v670
        %vm1014 = vweird.f32 %v1008
        %vm1015 = vmor %vm1013, %vm1014
        %v1016 = vsel %vm1015, %v1008, %v1012
        %v1017 = vand.u32 2147483647, %v670
        %vm1018 = vcmp.eq.f32.partialorder %v1017, 8.507059e+37
        %v1019 = vand.u32 %v670, 2147483648
        %v1020 = vor.u32 1.1754944e-38, %v1019
        %v1021 = vsel %vm1018, %v1020, %v1016
        %v1022 = vmul.f32 1.0, %v1021
        %v1023 = vrcp.pop %v671
        %v1024 = vmul.f32 %v671, %v1023
        %v1025 = vsub.f32 1.0, %v1024
        %v1026 = vmul.f32 %v1023, %v1025
        %v1027 = vadd.f32 %v1023, %v1026
        %vm1028 = vweird.f32 %v671
        %vm1029 = vweird.f32 %v1023
        %vm1030 = vmor %vm1028, %vm1029
        %v1031 = vsel %vm1030, %v1023, %v1027
        %v1032 = vand.u32 2147483647, %v671
        %vm1033 = vcmp.eq.f32.partialorder %v1032, 8.507059e+37
        %v1034 = vand.u32 %v671, 2147483648
        %v1035 = vor.u32 1.1754944e-38, %v1034
        %v1036 = vsel %vm1033, %v1035, %v1031
        %v1037 = vmul.f32 1.0, %v1036
        %v1038 = vrcp.pop %v672
        %v1039 = vmul.f32 %v672, %v1038
        %v1040 = vsub.f32 1.0, %v1039
        %v1041 = vmul.f32 %v1038, %v1040
        %v1042 = vadd.f32 %v1038, %v1041
        %vm1043 = vweird.f32 %v672
        %vm1044 = vweird.f32 %v1038
        %vm1045 = vmor %vm1043, %vm1044
        %v1046 = vsel %vm1045, %v1038, %v1042
        %v1047 = vand.u32 2147483647, %v672
        %vm1048 = vcmp.eq.f32.partialorder %v1047, 8.507059e+37
        %v1049 = vand.u32 %v672, 2147483648
        %v1050 = vor.u32 1.1754944e-38, %v1049
        %v1051 = vsel %vm1048, %v1050, %v1046
        %v1052 = vmul.f32 1.0, %v1051
        %v1053 = vrcp.pop %v673
        %v1054 = vmul.f32 %v673, %v1053
        %v1055 = vsub.f32 1.0, %v1054
        %v1056 = vmul.f32 %v1053, %v1055
        %v1057 = vadd.f32 %v1053, %v1056
        %vm1058 = vweird.f32 %v673
        %vm1059 = vweird.f32 %v1053
        %vm1060 = vmor %vm1058, %vm1059
        %v1061 = vsel %vm1060, %v1053, %v1057
        %v1062 = vand.u32 2147483647, %v673
        %vm1063 = vcmp.eq.f32.partialorder %v1062, 8.507059e+37
        %v1064 = vand.u32 %v673, 2147483648
        %v1065 = vor.u32 1.1754944e-38, %v1064
        %v1066 = vsel %vm1063, %v1065, %v1061
        %v1067 = vmul.f32 1.0, %v1066
        %v1068 = vrcp.pop %v674
        %v1069 = vmul.f32 %v674, %v1068
        %v1070 = vsub.f32 1.0, %v1069
        %v1071 = vmul.f32 %v1068, %v1070
        %v1072 = vadd.f32 %v1068, %v1071
        %vm1073 = vweird.f32 %v674
        %vm1074 = vweird.f32 %v1068
        %vm1075 = vmor %vm1073, %vm1074
        %v1076 = vsel %vm1075, %v1068, %v1072
        %v1077 = vand.u32 2147483647, %v674
        %vm1078 = vcmp.eq.f32.partialorder %v1077, 8.507059e+37
        %v1079 = vand.u32 %v674, 2147483648
        %v1080 = vor.u32 1.1754944e-38, %v1079
        %v1081 = vsel %vm1078, %v1080, %v1076
        %v1082 = vmul.f32 1.0, %v1081
        %v1083 = vrcp.pop %v675
        %v1084 = vmul.f32 %v675, %v1083
        %v1085 = vsub.f32 1.0, %v1084
        %v1086 = vmul.f32 %v1083, %v1085
        %v1087 = vadd.f32 %v1083, %v1086
        %vm1088 = vweird.f32 %v675
        %vm1089 = vweird.f32 %v1083
        %vm1090 = vmor %vm1088, %vm1089
        %v1091 = vsel %vm1090, %v1083, %v1087
        %v1092 = vand.u32 2147483647, %v675
        %vm1093 = vcmp.eq.f32.partialorder %v1092, 8.507059e+37
        %v1094 = vand.u32 %v675, 2147483648
        %v1095 = vor.u32 1.1754944e-38, %v1094
        %v1096 = vsel %vm1093, %v1095, %v1091
        %v1097 = vmul.f32 1.0, %v1096
        %v1098 = vrcp.pop %v676
        %v1099 = vmul.f32 %v676, %v1098
        %v1100 = vsub.f32 1.0, %v1099
        %v1101 = vmul.f32 %v1098, %v1100
        %v1102 = vadd.f32 %v1098, %v1101
        %vm1103 = vweird.f32 %v676
        %vm1104 = vweird.f32 %v1098
        %vm1105 = vmor %vm1103, %vm1104
        %v1106 = vsel %vm1105, %v1098, %v1102
        %v1107 = vand.u32 2147483647, %v676
        %vm1108 = vcmp.eq.f32.partialorder %v1107, 8.507059e+37
        %v1109 = vand.u32 %v676, 2147483648
        %v1110 = vor.u32 1.1754944e-38, %v1109
        %v1111 = vsel %vm1108, %v1110, %v1106
        %v1112 = vmul.f32 1.0, %v1111
        %v1113 = vrcp.pop %v677
        %v1114 = vmul.f32 %v677, %v1113
        %v1115 = vsub.f32 1.0, %v1114
        %v1116 = vmul.f32 %v1113, %v1115
        %v1117 = vadd.f32 %v1113, %v1116
        %vm1118 = vweird.f32 %v677
        %vm1119 = vweird.f32 %v1113
        %vm1120 = vmor %vm1118, %vm1119
        %v1121 = vsel %vm1120, %v1113, %v1117
        %v1122 = vand.u32 2147483647, %v677
        %vm1123 = vcmp.eq.f32.partialorder %v1122, 8.507059e+37
        %v1124 = vand.u32 %v677, 2147483648
        %v1125 = vor.u32 1.1754944e-38, %v1124
        %v1126 = vsel %vm1123, %v1125, %v1121
        %v1127 = vmul.f32 1.0, %v1126
        %v1128 = vmul.f32 %v528, %v692
        %v1129 = vmul.f32 %v529, %v707
        %v1130 = vmul.f32 %v530, %v722
        %v1131 = vmul.f32 %v531, %v737
        %v1132 = vmul.f32 %v532, %v752
        %v1133 = vmul.f32 %v533, %v767
        %v1134 = vmul.f32 %v534, %v782
        %v1135 = vmul.f32 %v535, %v797
        %v1136 = vmul.f32 %v536, %v812
        %v1137 = vmul.f32 %v537, %v827
        %v1138 = vmul.f32 %v538, %v842
        %v1139 = vmul.f32 %v539, %v857
        %v1140 = vmul.f32 %v540, %v872
        %v1141 = vmul.f32 %v541, %v887
        %v1142 = vmul.f32 %v542, %v902
        %v1143 = vmul.f32 %v543, %v917
        %v1144 = vmul.f32 %v544, %v932
        %v1145 = vmul.f32 %v545, %v947
        %v1146 = vmul.f32 %v546, %v962
        %v1147 = vmul.f32 %v547, %v977
        %v1148 = vmul.f32 %v548, %v992
        %v1149 = vmul.f32 %v549, %v1007
        %v1150 = vmul.f32 %v550, %v1022
        %v1151 = vmul.f32 %v551, %v1037
        %v1152 = vmul.f32 %v552, %v1052
        %v1153 = vmul.f32 %v553, %v1067
        %v1154 = vmul.f32 %v554, %v1082
        %v1155 = vmul.f32 %v555, %v1097
        %v1156 = vmul.f32 %v556, %v1112
        %v1157 = vmul.f32 %v557, %v1127
        %v1158 = vlaneseq
        %v1159 = vshrl.u32 %v1158, 7
        %v1160 = vadd.s32 %v1159, 8
        %v1161 = vadd.s32 %v1159, 16
        %vm1162 = vcmp.eq.s32.totalorder %v1159, 0
        %vm1163 = vcmp.eq.s32.totalorder %v1160, 0
        %vm1164 = vcmp.eq.s32.totalorder %v1161, 0
        %vm1165 = vcmp.eq.s32.totalorder %v1159, 17
        %vm1166 = vcmp.eq.s32.totalorder %v1160, 17
        %vm1167 = vcmp.eq.s32.totalorder %v1161, 17
        %vm1168 = vmor %vm1162, %vm1165
        %vm1169 = vmor %vm1163, %vm1166
        %vm1170 = vmor %vm1164, %vm1167
        %v1171 = vsel %vm1168, 1, 0
        %v1172 = vsel %vm1169, 1, 0
        %v1173 = vsel %vm1170, 1, 0
        %vm1174 = vcmp.eq.s32.totalorder %v1171, 1
        %vm1175 = vcmp.eq.s32.totalorder %v1172, 1
        %vm1176 = vcmp.eq.s32.totalorder %v1173, 1
        %v1177 = vsel %vm1174, 0.0, %v1128
        %v1178 = vsel %vm1175, 0.0, %v1129
        %v1179 = vsel %vm1176, 0.0, %v1130
        %v1180 = vsel %vm1174, 0.0, %v1131
        %v1181 = vsel %vm1175, 0.0, %v1132
        %v1182 = vsel %vm1176, 0.0, %v1133
        %v1183 = vsel %vm1174, 0.0, %v1134
        %v1184 = vsel %vm1175, 0.0, %v1135
        %v1185 = vsel %vm1176, 0.0, %v1136
        %v1186 = vsel %vm1174, 0.0, %v1137
        %v1187 = vsel %vm1175, 0.0, %v1138
        %v1188 = vsel %vm1176, 0.0, %v1139
        %v1189 = vsel %vm1174, 0.0, %v1140
        %v1190 = vsel %vm1175, 0.0, %v1141
        %v1191 = vsel %vm1176, 0.0, %v1142
        %v1192 = vsel %vm1174, 0.0, %v1143
        %v1193 = vsel %vm1175, 0.0, %v1144
        %v1194 = vsel %vm1176, 0.0, %v1145
        %v1195 = vsel %vm1174, 0.0, %v1146
        %v1196 = vsel %vm1175, 0.0, %v1147
        %v1197 = vsel %vm1176, 0.0, %v1148
        %v1198 = vsel %vm1174, 0.0, %v1149
        %v1199 = vsel %vm1175, 0.0, %v1150
        %v1200 = vsel %vm1176, 0.0, %v1151
        %v1201 = vsel %vm1174, 0.0, %v1152
        %v1202 = vsel %vm1175, 0.0, %v1153
        %v1203 = vsel %vm1176, 0.0, %v1154
        %v1204 = vsel %vm1174, 0.0, %v1155
        %v1205 = vsel %vm1175, 0.0, %v1156
        %v1206 = vsel %vm1176, 0.0, %v1157
        %1207 = vst [vmem:[#allocation3] sm:$0xff] %v1177
        %1208 = vst [vmem:[#allocation3 + $0x8] sm:$0xff] %v1178
        %1209 = vst [vmem:[#allocation3 + $0x10] sm:$0xff] %v1179
        %1210 = vst [vmem:[#allocation3 + $0x18] sm:$0xff] %v1180
        %1211 = vst [vmem:[#allocation3 + $0x20] sm:$0xff] %v1181
        %1212 = vst [vmem:[#allocation3 + $0x28] sm:$0xff] %v1182
        %1213 = vst [vmem:[#allocation3 + $0x30] sm:$0xff] %v1183
        %1214 = vst [vmem:[#allocation3 + $0x38] sm:$0xff] %v1184
        %1215 = vst [vmem:[#allocation3 + $0x40] sm:$0xff] %v1185
        %1216 = vst [vmem:[#allocation3 + $0x48] sm:$0xff] %v1186
        %1217 = vst [vmem:[#allocation3 + $0x50] sm:$0xff] %v1187
        %1218 = vst [vmem:[#allocation3 + $0x58] sm:$0xff] %v1188
        %1219 = vst [vmem:[#allocation3 + $0x60] sm:$0xff] %v1189
        %1220 = vst [vmem:[#allocation3 + $0x68] sm:$0xff] %v1190
        %1221 = vst [vmem:[#allocation3 + $0x70] sm:$0xff] %v1191
        %1222 = vst [vmem:[#allocation3 + $0x78] sm:$0xff] %v1192
        %1223 = vst [vmem:[#allocation3 + $0x80] sm:$0xff] %v1193
        %1224 = vst [vmem:[#allocation3 + $0x88] sm:$0xff] %v1194
        %1225 = vst [vmem:[#allocation3 + $0x90] sm:$0xff] %v1195
        %1226 = vst [vmem:[#allocation3 + $0x98] sm:$0xff] %v1196
        %1227 = vst [vmem:[#allocation3 + $0xa0] sm:$0xff] %v1197
        %1228 = vst [vmem:[#allocation3 + $0xa8] sm:$0xff] %v1198
        %1229 = vst [vmem:[#allocation3 + $0xb0] sm:$0xff] %v1199
        %1230 = vst [vmem:[#allocation3 + $0xb8] sm:$0xff] %v1200
        %1231 = vst [vmem:[#allocation3 + $0xc0] sm:$0xff] %v1201
        %1232 = vst [vmem:[#allocation3 + $0xc8] sm:$0xff] %v1202
        %1233 = vst [vmem:[#allocation3 + $0xd0] sm:$0xff] %v1203
        %1234 = vst [vmem:[#allocation3 + $0xd8] sm:$0xff] %v1204
        %1235 = vst [vmem:[#allocation3 + $0xe0] sm:$0xff] %v1205
        %1236 = vst [vmem:[#allocation3 + $0xe8] sm:$0xff] %v1206
        // Predicated region
        $region69: #{tpu_custom_call.1} parent=43 // pred_check
          %p1237 = pneg %p281
        $region70: #{tpu_custom_call.1} parent=43 // pred_check_branch
          %1239 = sbr.rel (%p1237) target = $region72
        $region71: #{tpu_custom_call.1} parent=43 // pred_region
          %1240 = vst [vmem:[#allocation3] sm:$0xff] 0.0
          %1241 = vst [vmem:[#allocation3 + $0x8] sm:$0xff] 0.0
          %1242 = vst [vmem:[#allocation3 + $0x10] sm:$0xff] 0.0
        $region72: #{tpu_custom_call.1} parent=43 // pred_fallthru
          _
        %p1243 = scmp.eq.s32.totalorder %s28, 1
        // Predicated region
        $region73: #{tpu_custom_call.1} parent=43 // pred_check
          %p1244 = pneg %p1243
        $region74: #{tpu_custom_call.1} parent=43 // pred_check_branch
          %1246 = sbr.rel (%p1244) target = $region76
        $region75: #{tpu_custom_call.1} parent=43 // pred_region
          %s1247 = scalar_lea.vmem [#allocation3], 216
          %1248 = vst [vmem:[%s1247] sm:$0xff] 0.0
          %1249 = vst [vmem:[%s1247 + $0x8] sm:$0xff] 0.0
          %1250 = vst [vmem:[%s1247 + $0x10] sm:$0xff] 0.0
        $region76: #{tpu_custom_call.1} parent=43 // pred_fallthru
          _
        %v1251 = vld [vmem:[#allocation3] sm:$0xff]
        %v1252 = vld [vmem:[#allocation3 + $0x8] sm:$0xff]
        %v1253 = vld [vmem:[#allocation3 + $0x18] sm:$0xff]
        %v1254 = vld [vmem:[#allocation3 + $0x20] sm:$0xff]
        %v1255 = vld [vmem:[#allocation3 + $0x30] sm:$0xff]
        %v1256 = vld [vmem:[#allocation3 + $0x38] sm:$0xff]
        %v1257 = vld [vmem:[#allocation3 + $0x48] sm:$0xff]
        %v1258 = vld [vmem:[#allocation3 + $0x50] sm:$0xff]
        %v1259 = vld [vmem:[#allocation3 + $0x60] sm:$0xff]
        %v1260 = vld [vmem:[#allocation3 + $0x68] sm:$0xff]
        %v1261 = vld [vmem:[#allocation3 + $0x78] sm:$0xff]
        %v1262 = vld [vmem:[#allocation3 + $0x80] sm:$0xff]
        %v1263 = vld [vmem:[#allocation3 + $0x90] sm:$0xff]
        %v1264 = vld [vmem:[#allocation3 + $0x98] sm:$0xff]
        %v1265 = vld [vmem:[#allocation3 + $0xa8] sm:$0xff]
        %v1266 = vld [vmem:[#allocation3 + $0xb0] sm:$0xff]
        %v1267 = vld [vmem:[#allocation8] sm:$0xff]
        %v1268 = vld [vmem:[#allocation8 + $0x8] sm:$0xff]
        %v1269 = vld [vmem:[#allocation8 + $0x10] sm:$0xff]
        %v1270 = vld [vmem:[#allocation8 + $0x18] sm:$0xff]
        %v1271 = vld [vmem:[#allocation8 + $0x20] sm:$0xff]
        %v1272 = vld [vmem:[#allocation8 + $0x28] sm:$0xff]
        %v1273 = vld [vmem:[#allocation8 + $0x30] sm:$0xff]
        %v1274 = vld [vmem:[#allocation8 + $0x38] sm:$0xff]
        %v1275 = vld [vmem:[#allocation8 + $0x40] sm:$0xff]
        %v1276 = vld [vmem:[#allocation8 + $0x48] sm:$0xff]
        %v1277 = vld [vmem:[#allocation8 + $0x50] sm:$0xff]
        %v1278 = vld [vmem:[#allocation8 + $0x58] sm:$0xff]
        %v1279 = vld [vmem:[#allocation8 + $0x60] sm:$0xff]
        %v1280 = vld [vmem:[#allocation8 + $0x68] sm:$0xff]
        %v1281 = vld [vmem:[#allocation8 + $0x70] sm:$0xff]
        %v1282 = vld [vmem:[#allocation8 + $0x78] sm:$0xff]
        %v1283 = vld [vmem:[#allocation3 + $0x1] sm:$0xff]
        %v1284 = vld [vmem:[#allocation3 + $0x9] sm:$0xff]
        %v1285 = vld [vmem:[#allocation3 + $0x19] sm:$0xff]
        %v1286 = vld [vmem:[#allocation3 + $0x21] sm:$0xff]
        %v1287 = vld [vmem:[#allocation3 + $0x31] sm:$0xff]
        %v1288 = vld [vmem:[#allocation3 + $0x39] sm:$0xff]
        %v1289 = vld [vmem:[#allocation3 + $0x49] sm:$0xff]
        %v1290 = vld [vmem:[#allocation3 + $0x51] sm:$0xff]
        %v1291 = vld [vmem:[#allocation3 + $0x61] sm:$0xff]
        %v1292 = vld [vmem:[#allocation3 + $0x69] sm:$0xff]
        %v1293 = vld [vmem:[#allocation3 + $0x79] sm:$0xff]
        %v1294 = vld [vmem:[#allocation3 + $0x81] sm:$0xff]
        %v1295 = vld [vmem:[#allocation3 + $0x91] sm:$0xff]
        %v1296 = vld [vmem:[#allocation3 + $0x99] sm:$0xff]
        %v1297 = vld [vmem:[#allocation3 + $0xa9] sm:$0xff]
        %v1298 = vld [vmem:[#allocation3 + $0xb1] sm:$0xff]
        %s1299 = scalar_lea.vmem [#allocation8], 128
        %v1300 = vld [vmem:[%s1299] sm:$0xff]
        %v1301 = vld [vmem:[%s1299 + $0x8] sm:$0xff]
        %v1302 = vld [vmem:[%s1299 + $0x10] sm:$0xff]
        %v1303 = vld [vmem:[%s1299 + $0x18] sm:$0xff]
        %v1304 = vld [vmem:[%s1299 + $0x20] sm:$0xff]
        %v1305 = vld [vmem:[%s1299 + $0x28] sm:$0xff]
        %v1306 = vld [vmem:[%s1299 + $0x30] sm:$0xff]
        %v1307 = vld [vmem:[%s1299 + $0x38] sm:$0xff]
        %v1308 = vld [vmem:[%s1299 + $0x40] sm:$0xff]
        %v1309 = vld [vmem:[%s1299 + $0x48] sm:$0xff]
        %v1310 = vld [vmem:[%s1299 + $0x50] sm:$0xff]
        %v1311 = vld [vmem:[%s1299 + $0x58] sm:$0xff]
        %v1312 = vld [vmem:[%s1299 + $0x60] sm:$0xff]
        %v1313 = vld [vmem:[%s1299 + $0x68] sm:$0xff]
        %v1314 = vld [vmem:[%s1299 + $0x70] sm:$0xff]
        %v1315 = vld [vmem:[%s1299 + $0x78] sm:$0xff]
        %1316 = vmatpush.msra.mxu0 %v1315
        %1317 = vmatpush.msra.mxu0 %v1314
        %1318 = vmatpush.msra.mxu0 %v1313
        %1319 = vmatpush.msra.mxu0 %v1312
        %1320 = vmatpush.msra.mxu0 %v1311
        %1321 = vmatpush.msra.mxu0 %v1310
        %1322 = vmatpush.msra.mxu0 %v1309
        %1323 = vmatpush.msra.mxu0 %v1308
        %1324 = vmatpush.msra.mxu0 %v1307
        %1325 = vmatpush.msra.mxu0 %v1306
        %1326 = vmatpush.msra.mxu0 %v1305
        %1327 = vmatpush.msra.mxu0 %v1304
        %1328 = vmatpush.msra.mxu0 %v1303
        %1329 = vmatpush.msra.mxu0 %v1302
        %1330 = vmatpush.msra.mxu0 %v1301
        %1331 = vmatpush.msra.mxu0 %v1300
        %1332 = vmatmul.f32.gmra.mxu0 %v1283
        %v1333 = vpop.f32.mrf.mxu0
        %v1334 = vadd.f32 0.0, %v1333
        %1335 = vmatmul.f32.gmra.mxu0 %v1284
        %v1336 = vpop.f32.mrf.mxu0
        %v1337 = vadd.f32 0.0, %v1336
        %1338 = vmatmul.f32.gmra.mxu0 %v1285
        %v1339 = vpop.f32.mrf.mxu0
        %v1340 = vadd.f32 0.0, %v1339
        %1341 = vmatmul.f32.gmra.mxu0 %v1286
        %v1342 = vpop.f32.mrf.mxu0
        %v1343 = vadd.f32 0.0, %v1342
        %1344 = vmatmul.f32.gmra.mxu0 %v1287
        %v1345 = vpop.f32.mrf.mxu0
        %v1346 = vadd.f32 0.0, %v1345
        %1347 = vmatmul.f32.gmra.mxu0 %v1288
        %v1348 = vpop.f32.mrf.mxu0
        %v1349 = vadd.f32 0.0, %v1348
        %1350 = vmatmul.f32.gmra.mxu0 %v1289
        %v1351 = vpop.f32.mrf.mxu0
        %v1352 = vadd.f32 0.0, %v1351
        %1353 = vmatmul.f32.gmra.mxu0 %v1290
        %v1354 = vpop.f32.mrf.mxu0
        %v1355 = vadd.f32 0.0, %v1354
        %1356 = vmatmul.f32.gmra.mxu0 %v1291
        %v1357 = vpop.f32.mrf.mxu0
        %v1358 = vadd.f32 0.0, %v1357
        %1359 = vmatmul.f32.gmra.mxu0 %v1292
        %v1360 = vpop.f32.mrf.mxu0
        %v1361 = vadd.f32 0.0, %v1360
        %1362 = vmatmul.f32.gmra.mxu0 %v1293
        %v1363 = vpop.f32.mrf.mxu0
        %v1364 = vadd.f32 0.0, %v1363
        %1365 = vmatmul.f32.gmra.mxu0 %v1294
        %v1366 = vpop.f32.mrf.mxu0
        %v1367 = vadd.f32 0.0, %v1366
        %1368 = vmatmul.f32.gmra.mxu0 %v1295
        %v1369 = vpop.f32.mrf.mxu0
        %v1370 = vadd.f32 0.0, %v1369
        %1371 = vmatmul.f32.gmra.mxu0 %v1296
        %v1372 = vpop.f32.mrf.mxu0
        %v1373 = vadd.f32 0.0, %v1372
        %1374 = vmatmul.f32.gmra.mxu0 %v1297
        %v1375 = vpop.f32.mrf.mxu0
        %v1376 = vadd.f32 0.0, %v1375
        %1377 = vmatmul.f32.gmra.mxu0 %v1298
        %v1378 = vpop.f32.mrf.mxu0
        %v1379 = vadd.f32 0.0, %v1378
        %1380 = vdwg.mxu0
        %1381 = vmatpush.msra.mxu0 %v1282
        %1382 = vmatpush.msra.mxu0 %v1281
        %1383 = vmatpush.msra.mxu0 %v1280
        %1384 = vmatpush.msra.mxu0 %v1279
        %1385 = vmatpush.msra.mxu0 %v1278
        %1386 = vmatpush.msra.mxu0 %v1277
        %1387 = vmatpush.msra.mxu0 %v1276
        %1388 = vmatpush.msra.mxu0 %v1275
        %1389 = vmatpush.msra.mxu0 %v1274
        %1390 = vmatpush.msra.mxu0 %v1273
        %1391 = vmatpush.msra.mxu0 %v1272
        %1392 = vmatpush.msra.mxu0 %v1271
        %1393 = vmatpush.msra.mxu0 %v1270
        %1394 = vmatpush.msra.mxu0 %v1269
        %1395 = vmatpush.msra.mxu0 %v1268
        %1396 = vmatpush.msra.mxu0 %v1267
        %1397 = vmatmul.f32.gmra.mxu0 %v1251
        %v1398 = vpop.f32.mrf.mxu0
        %v1399 = vadd.f32 %v1334, %v1398
        %1400 = vmatmul.f32.gmra.mxu0 %v1252
        %v1401 = vpop.f32.mrf.mxu0
        %v1402 = vadd.f32 %v1337, %v1401
        %1403 = vmatmul.f32.gmra.mxu0 %v1253
        %v1404 = vpop.f32.mrf.mxu0
        %v1405 = vadd.f32 %v1340, %v1404
        %1406 = vmatmul.f32.gmra.mxu0 %v1254
        %v1407 = vpop.f32.mrf.mxu0
        %v1408 = vadd.f32 %v1343, %v1407
        %1409 = vmatmul.f32.gmra.mxu0 %v1255
        %v1410 = vpop.f32.mrf.mxu0
        %v1411 = vadd.f32 %v1346, %v1410
        %1412 = vmatmul.f32.gmra.mxu0 %v1256
        %v1413 = vpop.f32.mrf.mxu0
        %v1414 = vadd.f32 %v1349, %v1413
        %1415 = vmatmul.f32.gmra.mxu0 %v1257
        %v1416 = vpop.f32.mrf.mxu0
        %v1417 = vadd.f32 %v1352, %v1416
        %1418 = vmatmul.f32.gmra.mxu0 %v1258
        %v1419 = vpop.f32.mrf.mxu0
        %v1420 = vadd.f32 %v1355, %v1419
        %1421 = vmatmul.f32.gmra.mxu0 %v1259
        %v1422 = vpop.f32.mrf.mxu0
        %v1423 = vadd.f32 %v1358, %v1422
        %1424 = vmatmul.f32.gmra.mxu0 %v1260
        %v1425 = vpop.f32.mrf.mxu0
        %v1426 = vadd.f32 %v1361, %v1425
        %1427 = vmatmul.f32.gmra.mxu0 %v1261
        %v1428 = vpop.f32.mrf.mxu0
        %v1429 = vadd.f32 %v1364, %v1428
        %1430 = vmatmul.f32.gmra.mxu0 %v1262
        %v1431 = vpop.f32.mrf.mxu0
        %v1432 = vadd.f32 %v1367, %v1431
        %1433 = vmatmul.f32.gmra.mxu0 %v1263
        %v1434 = vpop.f32.mrf.mxu0
        %v1435 = vadd.f32 %v1370, %v1434
        %1436 = vmatmul.f32.gmra.mxu0 %v1264
        %v1437 = vpop.f32.mrf.mxu0
        %v1438 = vadd.f32 %v1373, %v1437
        %1439 = vmatmul.f32.gmra.mxu0 %v1265
        %v1440 = vpop.f32.mrf.mxu0
        %v1441 = vadd.f32 %v1376, %v1440
        %1442 = vmatmul.f32.gmra.mxu0 %v1266
        %v1443 = vpop.f32.mrf.mxu0
        %v1444 = vadd.f32 %v1379, %v1443
        %1445 = vdwg.mxu0
        %v1446 = vld [vmem:[#allocation3 + $0x2] sm:$0xff]
        %v1447 = vld [vmem:[#allocation3 + $0xa] sm:$0xff]
        %v1448 = vld [vmem:[#allocation3 + $0x1a] sm:$0xff]
        %v1449 = vld [vmem:[#allocation3 + $0x22] sm:$0xff]
        %v1450 = vld [vmem:[#allocation3 + $0x32] sm:$0xff]
        %v1451 = vld [vmem:[#allocation3 + $0x3a] sm:$0xff]
        %v1452 = vld [vmem:[#allocation3 + $0x4a] sm:$0xff]
        %v1453 = vld [vmem:[#allocation3 + $0x52] sm:$0xff]
        %v1454 = vld [vmem:[#allocation3 + $0x62] sm:$0xff]
        %v1455 = vld [vmem:[#allocation3 + $0x6a] sm:$0xff]
        %v1456 = vld [vmem:[#allocation3 + $0x7a] sm:$0xff]
        %v1457 = vld [vmem:[#allocation3 + $0x82] sm:$0xff]
        %v1458 = vld [vmem:[#allocation3 + $0x92] sm:$0xff]
        %v1459 = vld [vmem:[#allocation3 + $0x9a] sm:$0xff]
        %v1460 = vld [vmem:[#allocation3 + $0xaa] sm:$0xff]
        %v1461 = vld [vmem:[#allocation3 + $0xb2] sm:$0xff]
        %s1462 = scalar_lea.vmem [#allocation8], 256
        %v1463 = vld [vmem:[%s1462] sm:$0xff]
        %v1464 = vld [vmem:[%s1462 + $0x8] sm:$0xff]
        %v1465 = vld [vmem:[%s1462 + $0x10] sm:$0xff]
        %v1466 = vld [vmem:[%s1462 + $0x18] sm:$0xff]
        %v1467 = vld [vmem:[%s1462 + $0x20] sm:$0xff]
        %v1468 = vld [vmem:[%s1462 + $0x28] sm:$0xff]
        %v1469 = vld [vmem:[%s1462 + $0x30] sm:$0xff]
        %v1470 = vld [vmem:[%s1462 + $0x38] sm:$0xff]
        %v1471 = vld [vmem:[%s1462 + $0x40] sm:$0xff]
        %v1472 = vld [vmem:[%s1462 + $0x48] sm:$0xff]
        %v1473 = vld [vmem:[%s1462 + $0x50] sm:$0xff]
        %v1474 = vld [vmem:[%s1462 + $0x58] sm:$0xff]
        %v1475 = vld [vmem:[%s1462 + $0x60] sm:$0xff]
        %v1476 = vld [vmem:[%s1462 + $0x68] sm:$0xff]
        %v1477 = vld [vmem:[%s1462 + $0x70] sm:$0xff]
        %v1478 = vld [vmem:[%s1462 + $0x78] sm:$0xff]
        %1479 = vmatpush.msra.mxu0 %v1478
        %1480 = vmatpush.msra.mxu0 %v1477
        %1481 = vmatpush.msra.mxu0 %v1476
        %1482 = vmatpush.msra.mxu0 %v1475
        %1483 = vmatpush.msra.mxu0 %v1474
        %1484 = vmatpush.msra.mxu0 %v1473
        %1485 = vmatpush.msra.mxu0 %v1472
        %1486 = vmatpush.msra.mxu0 %v1471
        %1487 = vmatpush.msra.mxu0 %v1470
        %1488 = vmatpush.msra.mxu0 %v1469
        %1489 = vmatpush.msra.mxu0 %v1468
        %1490 = vmatpush.msra.mxu0 %v1467
        %1491 = vmatpush.msra.mxu0 %v1466
        %1492 = vmatpush.msra.mxu0 %v1465
        %1493 = vmatpush.msra.mxu0 %v1464
        %1494 = vmatpush.msra.mxu0 %v1463
        %1495 = vmatmul.f32.gmra.mxu0 %v1446
        %v1496 = vpop.f32.mrf.mxu0
        %v1497 = vadd.f32 0.0, %v1496
        %1498 = vmatmul.f32.gmra.mxu0 %v1447
        %v1499 = vpop.f32.mrf.mxu0
        %v1500 = vadd.f32 0.0, %v1499
        %1501 = vmatmul.f32.gmra.mxu0 %v1448
        %v1502 = vpop.f32.mrf.mxu0
        %v1503 = vadd.f32 0.0, %v1502
        %1504 = vmatmul.f32.gmra.mxu0 %v1449
        %v1505 = vpop.f32.mrf.mxu0
        %v1506 = vadd.f32 0.0, %v1505
        %1507 = vmatmul.f32.gmra.mxu0 %v1450
        %v1508 = vpop.f32.mrf.mxu0
        %v1509 = vadd.f32 0.0, %v1508
        %1510 = vmatmul.f32.gmra.mxu0 %v1451
        %v1511 = vpop.f32.mrf.mxu0
        %v1512 = vadd.f32 0.0, %v1511
        %1513 = vmatmul.f32.gmra.mxu0 %v1452
        %v1514 = vpop.f32.mrf.mxu0
        %v1515 = vadd.f32 0.0, %v1514
        %1516 = vmatmul.f32.gmra.mxu0 %v1453
        %v1517 = vpop.f32.mrf.mxu0
        %v1518 = vadd.f32 0.0, %v1517
        %1519 = vmatmul.f32.gmra.mxu0 %v1454
        %v1520 = vpop.f32.mrf.mxu0
        %v1521 = vadd.f32 0.0, %v1520
        %1522 = vmatmul.f32.gmra.mxu0 %v1455
        %v1523 = vpop.f32.mrf.mxu0
        %v1524 = vadd.f32 0.0, %v1523
        %1525 = vmatmul.f32.gmra.mxu0 %v1456
        %v1526 = vpop.f32.mrf.mxu0
        %v1527 = vadd.f32 0.0, %v1526
        %1528 = vmatmul.f32.gmra.mxu0 %v1457
        %v1529 = vpop.f32.mrf.mxu0
        %v1530 = vadd.f32 0.0, %v1529
        %1531 = vmatmul.f32.gmra.mxu0 %v1458
        %v1532 = vpop.f32.mrf.mxu0
        %v1533 = vadd.f32 0.0, %v1532
        %1534 = vmatmul.f32.gmra.mxu0 %v1459
        %v1535 = vpop.f32.mrf.mxu0
        %v1536 = vadd.f32 0.0, %v1535
        %1537 = vmatmul.f32.gmra.mxu0 %v1460
        %v1538 = vpop.f32.mrf.mxu0
        %v1539 = vadd.f32 0.0, %v1538
        %1540 = vmatmul.f32.gmra.mxu0 %v1461
        %v1541 = vpop.f32.mrf.mxu0
        %v1542 = vadd.f32 0.0, %v1541
        %1543 = vdwg.mxu0
        %v1544 = vadd.f32 %v1399, %v1497
        %v1545 = vadd.f32 %v1402, %v1500
        %v1546 = vadd.f32 %v1405, %v1503
        %v1547 = vadd.f32 %v1408, %v1506
        %v1548 = vadd.f32 %v1411, %v1509
        %v1549 = vadd.f32 %v1414, %v1512
        %v1550 = vadd.f32 %v1417, %v1515
        %v1551 = vadd.f32 %v1420, %v1518
        %v1552 = vadd.f32 %v1423, %v1521
        %v1553 = vadd.f32 %v1426, %v1524
        %v1554 = vadd.f32 %v1429, %v1527
        %v1555 = vadd.f32 %v1432, %v1530
        %v1556 = vadd.f32 %v1435, %v1533
        %v1557 = vadd.f32 %v1438, %v1536
        %v1558 = vadd.f32 %v1441, %v1539
        %v1559 = vadd.f32 %v1444, %v1542
        %s1560 = scalar_lea.vmem [#allocation3], 24
        %v1561 = vld [vmem:[%s1560] sm:$0xff]
        %v1562 = vld [vmem:[%s1560 + $0x8] sm:$0xff]
        %v1563 = vld [vmem:[%s1560 + $0x18] sm:$0xff]
        %v1564 = vld [vmem:[%s1560 + $0x20] sm:$0xff]
        %v1565 = vld [vmem:[%s1560 + $0x30] sm:$0xff]
        %v1566 = vld [vmem:[%s1560 + $0x38] sm:$0xff]
        %v1567 = vld [vmem:[%s1560 + $0x48] sm:$0xff]
        %v1568 = vld [vmem:[%s1560 + $0x50] sm:$0xff]
        %v1569 = vld [vmem:[%s1560 + $0x60] sm:$0xff]
        %v1570 = vld [vmem:[%s1560 + $0x68] sm:$0xff]
        %v1571 = vld [vmem:[%s1560 + $0x78] sm:$0xff]
        %v1572 = vld [vmem:[%s1560 + $0x80] sm:$0xff]
        %v1573 = vld [vmem:[%s1560 + $0x90] sm:$0xff]
        %v1574 = vld [vmem:[%s1560 + $0x98] sm:$0xff]
        %v1575 = vld [vmem:[%s1560 + $0xa8] sm:$0xff]
        %v1576 = vld [vmem:[%s1560 + $0xb0] sm:$0xff]
        %s1577 = scalar_lea.vmem [#allocation8], 384
        %v1578 = vld [vmem:[%s1577] sm:$0xff]
        %v1579 = vld [vmem:[%s1577 + $0x8] sm:$0xff]
        %v1580 = vld [vmem:[%s1577 + $0x10] sm:$0xff]
        %v1581 = vld [vmem:[%s1577 + $0x18] sm:$0xff]
        %v1582 = vld [vmem:[%s1577 + $0x20] sm:$0xff]
        %v1583 = vld [vmem:[%s1577 + $0x28] sm:$0xff]
        %v1584 = vld [vmem:[%s1577 + $0x30] sm:$0xff]
        %v1585 = vld [vmem:[%s1577 + $0x38] sm:$0xff]
        %v1586 = vld [vmem:[%s1577 + $0x40] sm:$0xff]
        %v1587 = vld [vmem:[%s1577 + $0x48] sm:$0xff]
        %v1588 = vld [vmem:[%s1577 + $0x50] sm:$0xff]
        %v1589 = vld [vmem:[%s1577 + $0x58] sm:$0xff]
        %v1590 = vld [vmem:[%s1577 + $0x60] sm:$0xff]
        %v1591 = vld [vmem:[%s1577 + $0x68] sm:$0xff]
        %v1592 = vld [vmem:[%s1577 + $0x70] sm:$0xff]
        %v1593 = vld [vmem:[%s1577 + $0x78] sm:$0xff]
        %1594 = vmatpush.msra.mxu0 %v1593
        %1595 = vmatpush.msra.mxu0 %v1592
        %1596 = vmatpush.msra.mxu0 %v1591
        %1597 = vmatpush.msra.mxu0 %v1590
        %1598 = vmatpush.msra.mxu0 %v1589
        %1599 = vmatpush.msra.mxu0 %v1588
        %1600 = vmatpush.msra.mxu0 %v1587
        %1601 = vmatpush.msra.mxu0 %v1586
        %1602 = vmatpush.msra.mxu0 %v1585
        %1603 = vmatpush.msra.mxu0 %v1584
        %1604 = vmatpush.msra.mxu0 %v1583
        %1605 = vmatpush.msra.mxu0 %v1582
        %1606 = vmatpush.msra.mxu0 %v1581
        %1607 = vmatpush.msra.mxu0 %v1580
        %1608 = vmatpush.msra.mxu0 %v1579
        %1609 = vmatpush.msra.mxu0 %v1578
        %1610 = vmatmul.f32.gmra.mxu0 %v1561
        %v1611 = vpop.f32.mrf.mxu0
        %v1612 = vadd.f32 0.0, %v1611
        %1613 = vmatmul.f32.gmra.mxu0 %v1562
        %v1614 = vpop.f32.mrf.mxu0
        %v1615 = vadd.f32 0.0, %v1614
        %1616 = vmatmul.f32.gmra.mxu0 %v1563
        %v1617 = vpop.f32.mrf.mxu0
        %v1618 = vadd.f32 0.0, %v1617
        %1619 = vmatmul.f32.gmra.mxu0 %v1564
        %v1620 = vpop.f32.mrf.mxu0
        %v1621 = vadd.f32 0.0, %v1620
        %1622 = vmatmul.f32.gmra.mxu0 %v1565
        %v1623 = vpop.f32.mrf.mxu0
        %v1624 = vadd.f32 0.0, %v1623
        %1625 = vmatmul.f32.gmra.mxu0 %v1566
        %v1626 = vpop.f32.mrf.mxu0
        %v1627 = vadd.f32 0.0, %v1626
        %1628 = vmatmul.f32.gmra.mxu0 %v1567
        %v1629 = vpop.f32.mrf.mxu0
        %v1630 = vadd.f32 0.0, %v1629
        %1631 = vmatmul.f32.gmra.mxu0 %v1568
        %v1632 = vpop.f32.mrf.mxu0
        %v1633 = vadd.f32 0.0, %v1632
        %1634 = vmatmul.f32.gmra.mxu0 %v1569
        %v1635 = vpop.f32.mrf.mxu0
        %v1636 = vadd.f32 0.0, %v1635
        %1637 = vmatmul.f32.gmra.mxu0 %v1570
        %v1638 = vpop.f32.mrf.mxu0
        %v1639 = vadd.f32 0.0, %v1638
        %1640 = vmatmul.f32.gmra.mxu0 %v1571
        %v1641 = vpop.f32.mrf.mxu0
        %v1642 = vadd.f32 0.0, %v1641
        %1643 = vmatmul.f32.gmra.mxu0 %v1572
        %v1644 = vpop.f32.mrf.mxu0
        %v1645 = vadd.f32 0.0, %v1644
        %1646 = vmatmul.f32.gmra.mxu0 %v1573
        %v1647 = vpop.f32.mrf.mxu0
        %v1648 = vadd.f32 0.0, %v1647
        %1649 = vmatmul.f32.gmra.mxu0 %v1574
        %v1650 = vpop.f32.mrf.mxu0
        %v1651 = vadd.f32 0.0, %v1650
        %1652 = vmatmul.f32.gmra.mxu0 %v1575
        %v1653 = vpop.f32.mrf.mxu0
        %v1654 = vadd.f32 0.0, %v1653
        %1655 = vmatmul.f32.gmra.mxu0 %v1576
        %v1656 = vpop.f32.mrf.mxu0
        %v1657 = vadd.f32 0.0, %v1656
        %1658 = vdwg.mxu0
        %v1659 = vadd.f32 %v1544, %v1612
        %v1660 = vadd.f32 %v1545, %v1615
        %v1661 = vadd.f32 %v1546, %v1618
        %v1662 = vadd.f32 %v1547, %v1621
        %v1663 = vadd.f32 %v1548, %v1624
        %v1664 = vadd.f32 %v1549, %v1627
        %v1665 = vadd.f32 %v1550, %v1630
        %v1666 = vadd.f32 %v1551, %v1633
        %v1667 = vadd.f32 %v1552, %v1636
        %v1668 = vadd.f32 %v1553, %v1639
        %v1669 = vadd.f32 %v1554, %v1642
        %v1670 = vadd.f32 %v1555, %v1645
        %v1671 = vadd.f32 %v1556, %v1648
        %v1672 = vadd.f32 %v1557, %v1651
        %v1673 = vadd.f32 %v1558, %v1654
        %v1674 = vadd.f32 %v1559, %v1657
        %v1675 = vld [vmem:[%s1560 + $0x1] sm:$0xff]
        %v1676 = vld [vmem:[%s1560 + $0x9] sm:$0xff]
        %v1677 = vld [vmem:[%s1560 + $0x19] sm:$0xff]
        %v1678 = vld [vmem:[%s1560 + $0x21] sm:$0xff]
        %v1679 = vld [vmem:[%s1560 + $0x31] sm:$0xff]
        %v1680 = vld [vmem:[%s1560 + $0x39] sm:$0xff]
        %v1681 = vld [vmem:[%s1560 + $0x49] sm:$0xff]
        %v1682 = vld [vmem:[%s1560 + $0x51] sm:$0xff]
        %v1683 = vld [vmem:[%s1560 + $0x61] sm:$0xff]
        %v1684 = vld [vmem:[%s1560 + $0x69] sm:$0xff]
        %v1685 = vld [vmem:[%s1560 + $0x79] sm:$0xff]
        %v1686 = vld [vmem:[%s1560 + $0x81] sm:$0xff]
        %v1687 = vld [vmem:[%s1560 + $0x91] sm:$0xff]
        %v1688 = vld [vmem:[%s1560 + $0x99] sm:$0xff]
        %v1689 = vld [vmem:[%s1560 + $0xa9] sm:$0xff]
        %v1690 = vld [vmem:[%s1560 + $0xb1] sm:$0xff]
        %s1691 = scalar_lea.vmem [#allocation8], 512
        %v1692 = vld [vmem:[%s1691] sm:$0xff]
        %v1693 = vld [vmem:[%s1691 + $0x8] sm:$0xff]
        %v1694 = vld [vmem:[%s1691 + $0x10] sm:$0xff]
        %v1695 = vld [vmem:[%s1691 + $0x18] sm:$0xff]
        %v1696 = vld [vmem:[%s1691 + $0x20] sm:$0xff]
        %v1697 = vld [vmem:[%s1691 + $0x28] sm:$0xff]
        %v1698 = vld [vmem:[%s1691 + $0x30] sm:$0xff]
        %v1699 = vld [vmem:[%s1691 + $0x38] sm:$0xff]
        %v1700 = vld [vmem:[%s1691 + $0x40] sm:$0xff]
        %v1701 = vld [vmem:[%s1691 + $0x48] sm:$0xff]
        %v1702 = vld [vmem:[%s1691 + $0x50] sm:$0xff]
        %v1703 = vld [vmem:[%s1691 + $0x58] sm:$0xff]
        %v1704 = vld [vmem:[%s1691 + $0x60] sm:$0xff]
        %v1705 = vld [vmem:[%s1691 + $0x68] sm:$0xff]
        %v1706 = vld [vmem:[%s1691 + $0x70] sm:$0xff]
        %v1707 = vld [vmem:[%s1691 + $0x78] sm:$0xff]
        %1708 = vmatpush.msra.mxu0 %v1707
        %1709 = vmatpush.msra.mxu0 %v1706
        %1710 = vmatpush.msra.mxu0 %v1705
        %1711 = vmatpush.msra.mxu0 %v1704
        %1712 = vmatpush.msra.mxu0 %v1703
        %1713 = vmatpush.msra.mxu0 %v1702
        %1714 = vmatpush.msra.mxu0 %v1701
        %1715 = vmatpush.msra.mxu0 %v1700
        %1716 = vmatpush.msra.mxu0 %v1699
        %1717 = vmatpush.msra.mxu0 %v1698
        %1718 = vmatpush.msra.mxu0 %v1697
        %1719 = vmatpush.msra.mxu0 %v1696
        %1720 = vmatpush.msra.mxu0 %v1695
        %1721 = vmatpush.msra.mxu0 %v1694
        %1722 = vmatpush.msra.mxu0 %v1693
        %1723 = vmatpush.msra.mxu0 %v1692
        %1724 = vmatmul.f32.gmra.mxu0 %v1675
        %v1725 = vpop.f32.mrf.mxu0
        %v1726 = vadd.f32 0.0, %v1725
        %1727 = vmatmul.f32.gmra.mxu0 %v1676
        %v1728 = vpop.f32.mrf.mxu0
        %v1729 = vadd.f32 0.0, %v1728
        %1730 = vmatmul.f32.gmra.mxu0 %v1677
        %v1731 = vpop.f32.mrf.mxu0
        %v1732 = vadd.f32 0.0, %v1731
        %1733 = vmatmul.f32.gmra.mxu0 %v1678
        %v1734 = vpop.f32.mrf.mxu0
        %v1735 = vadd.f32 0.0, %v1734
        %1736 = vmatmul.f32.gmra.mxu0 %v1679
        %v1737 = vpop.f32.mrf.mxu0
        %v1738 = vadd.f32 0.0, %v1737
        %1739 = vmatmul.f32.gmra.mxu0 %v1680
        %v1740 = vpop.f32.mrf.mxu0
        %v1741 = vadd.f32 0.0, %v1740
        %1742 = vmatmul.f32.gmra.mxu0 %v1681
        %v1743 = vpop.f32.mrf.mxu0
        %v1744 = vadd.f32 0.0, %v1743
        %1745 = vmatmul.f32.gmra.mxu0 %v1682
        %v1746 = vpop.f32.mrf.mxu0
        %v1747 = vadd.f32 0.0, %v1746
        %1748 = vmatmul.f32.gmra.mxu0 %v1683
        %v1749 = vpop.f32.mrf.mxu0
        %v1750 = vadd.f32 0.0, %v1749
        %1751 = vmatmul.f32.gmra.mxu0 %v1684
        %v1752 = vpop.f32.mrf.mxu0
        %v1753 = vadd.f32 0.0, %v1752
        %1754 = vmatmul.f32.gmra.mxu0 %v1685
        %v1755 = vpop.f32.mrf.mxu0
        %v1756 = vadd.f32 0.0, %v1755
        %1757 = vmatmul.f32.gmra.mxu0 %v1686
        %v1758 = vpop.f32.mrf.mxu0
        %v1759 = vadd.f32 0.0, %v1758
        %1760 = vmatmul.f32.gmra.mxu0 %v1687
        %v1761 = vpop.f32.mrf.mxu0
        %v1762 = vadd.f32 0.0, %v1761
        %1763 = vmatmul.f32.gmra.mxu0 %v1688
        %v1764 = vpop.f32.mrf.mxu0
        %v1765 = vadd.f32 0.0, %v1764
        %1766 = vmatmul.f32.gmra.mxu0 %v1689
        %v1767 = vpop.f32.mrf.mxu0
        %v1768 = vadd.f32 0.0, %v1767
        %1769 = vmatmul.f32.gmra.mxu0 %v1690
        %v1770 = vpop.f32.mrf.mxu0
        %v1771 = vadd.f32 0.0, %v1770
        %1772 = vdwg.mxu0
        %v1773 = vadd.f32 %v1659, %v1726
        %v1774 = vadd.f32 %v1660, %v1729
        %v1775 = vadd.f32 %v1661, %v1732
        %v1776 = vadd.f32 %v1662, %v1735
        %v1777 = vadd.f32 %v1663, %v1738
        %v1778 = vadd.f32 %v1664, %v1741
        %v1779 = vadd.f32 %v1665, %v1744
        %v1780 = vadd.f32 %v1666, %v1747
        %v1781 = vadd.f32 %v1667, %v1750
        %v1782 = vadd.f32 %v1668, %v1753
        %v1783 = vadd.f32 %v1669, %v1756
        %v1784 = vadd.f32 %v1670, %v1759
        %v1785 = vadd.f32 %v1671, %v1762
        %v1786 = vadd.f32 %v1672, %v1765
        %v1787 = vadd.f32 %v1673, %v1768
        %v1788 = vadd.f32 %v1674, %v1771
        %v1789 = vld [vmem:[%s1560 + $0x2] sm:$0xff]
        %v1790 = vld [vmem:[%s1560 + $0xa] sm:$0xff]
        %v1791 = vld [vmem:[%s1560 + $0x1a] sm:$0xff]
        %v1792 = vld [vmem:[%s1560 + $0x22] sm:$0xff]
        %v1793 = vld [vmem:[%s1560 + $0x32] sm:$0xff]
        %v1794 = vld [vmem:[%s1560 + $0x3a] sm:$0xff]
        %v1795 = vld [vmem:[%s1560 + $0x4a] sm:$0xff]
        %v1796 = vld [vmem:[%s1560 + $0x52] sm:$0xff]
        %v1797 = vld [vmem:[%s1560 + $0x62] sm:$0xff]
        %v1798 = vld [vmem:[%s1560 + $0x6a] sm:$0xff]
        %v1799 = vld [vmem:[%s1560 + $0x7a] sm:$0xff]
        %v1800 = vld [vmem:[%s1560 + $0x82] sm:$0xff]
        %v1801 = vld [vmem:[%s1560 + $0x92] sm:$0xff]
        %v1802 = vld [vmem:[%s1560 + $0x9a] sm:$0xff]
        %v1803 = vld [vmem:[%s1560 + $0xaa] sm:$0xff]
        %v1804 = vld [vmem:[%s1560 + $0xb2] sm:$0xff]
        %s1805 = scalar_lea.vmem [#allocation8], 640
        %v1806 = vld [vmem:[%s1805] sm:$0xff]
        %v1807 = vld [vmem:[%s1805 + $0x8] sm:$0xff]
        %v1808 = vld [vmem:[%s1805 + $0x10] sm:$0xff]
        %v1809 = vld [vmem:[%s1805 + $0x18] sm:$0xff]
        %v1810 = vld [vmem:[%s1805 + $0x20] sm:$0xff]
        %v1811 = vld [vmem:[%s1805 + $0x28] sm:$0xff]
        %v1812 = vld [vmem:[%s1805 + $0x30] sm:$0xff]
        %v1813 = vld [vmem:[%s1805 + $0x38] sm:$0xff]
        %v1814 = vld [vmem:[%s1805 + $0x40] sm:$0xff]
        %v1815 = vld [vmem:[%s1805 + $0x48] sm:$0xff]
        %v1816 = vld [vmem:[%s1805 + $0x50] sm:$0xff]
        %v1817 = vld [vmem:[%s1805 + $0x58] sm:$0xff]
        %v1818 = vld [vmem:[%s1805 + $0x60] sm:$0xff]
        %v1819 = vld [vmem:[%s1805 + $0x68] sm:$0xff]
        %v1820 = vld [vmem:[%s1805 + $0x70] sm:$0xff]
        %v1821 = vld [vmem:[%s1805 + $0x78] sm:$0xff]
        %1822 = vmatpush.msra.mxu0 %v1821
        %1823 = vmatpush.msra.mxu0 %v1820
        %1824 = vmatpush.msra.mxu0 %v1819
        %1825 = vmatpush.msra.mxu0 %v1818
        %1826 = vmatpush.msra.mxu0 %v1817
        %1827 = vmatpush.msra.mxu0 %v1816
        %1828 = vmatpush.msra.mxu0 %v1815
        %1829 = vmatpush.msra.mxu0 %v1814
        %1830 = vmatpush.msra.mxu0 %v1813
        %1831 = vmatpush.msra.mxu0 %v1812
        %1832 = vmatpush.msra.mxu0 %v1811
        %1833 = vmatpush.msra.mxu0 %v1810
        %1834 = vmatpush.msra.mxu0 %v1809
        %1835 = vmatpush.msra.mxu0 %v1808
        %1836 = vmatpush.msra.mxu0 %v1807
        %1837 = vmatpush.msra.mxu0 %v1806
        %1838 = vmatmul.f32.gmra.mxu0 %v1789
        %v1839 = vpop.f32.mrf.mxu0
        %v1840 = vadd.f32 0.0, %v1839
        %1841 = vmatmul.f32.gmra.mxu0 %v1790
        %v1842 = vpop.f32.mrf.mxu0
        %v1843 = vadd.f32 0.0, %v1842
        %1844 = vmatmul.f32.gmra.mxu0 %v1791
        %v1845 = vpop.f32.mrf.mxu0
        %v1846 = vadd.f32 0.0, %v1845
        %1847 = vmatmul.f32.gmra.mxu0 %v1792
        %v1848 = vpop.f32.mrf.mxu0
        %v1849 = vadd.f32 0.0, %v1848
        %1850 = vmatmul.f32.gmra.mxu0 %v1793
        %v1851 = vpop.f32.mrf.mxu0
        %v1852 = vadd.f32 0.0, %v1851
        %1853 = vmatmul.f32.gmra.mxu0 %v1794
        %v1854 = vpop.f32.mrf.mxu0
        %v1855 = vadd.f32 0.0, %v1854
        %1856 = vmatmul.f32.gmra.mxu0 %v1795
        %v1857 = vpop.f32.mrf.mxu0
        %v1858 = vadd.f32 0.0, %v1857
        %1859 = vmatmul.f32.gmra.mxu0 %v1796
        %v1860 = vpop.f32.mrf.mxu0
        %v1861 = vadd.f32 0.0, %v1860
        %1862 = vmatmul.f32.gmra.mxu0 %v1797
        %v1863 = vpop.f32.mrf.mxu0
        %v1864 = vadd.f32 0.0, %v1863
        %1865 = vmatmul.f32.gmra.mxu0 %v1798
        %v1866 = vpop.f32.mrf.mxu0
        %v1867 = vadd.f32 0.0, %v1866
        %1868 = vmatmul.f32.gmra.mxu0 %v1799
        %v1869 = vpop.f32.mrf.mxu0
        %v1870 = vadd.f32 0.0, %v1869
        %1871 = vmatmul.f32.gmra.mxu0 %v1800
        %v1872 = vpop.f32.mrf.mxu0
        %v1873 = vadd.f32 0.0, %v1872
        %1874 = vmatmul.f32.gmra.mxu0 %v1801
        %v1875 = vpop.f32.mrf.mxu0
        %v1876 = vadd.f32 0.0, %v1875
        %1877 = vmatmul.f32.gmra.mxu0 %v1802
        %v1878 = vpop.f32.mrf.mxu0
        %v1879 = vadd.f32 0.0, %v1878
        %1880 = vmatmul.f32.gmra.mxu0 %v1803
        %v1881 = vpop.f32.mrf.mxu0
        %v1882 = vadd.f32 0.0, %v1881
        %1883 = vmatmul.f32.gmra.mxu0 %v1804
        %v1884 = vpop.f32.mrf.mxu0
        %v1885 = vadd.f32 0.0, %v1884
        %1886 = vdwg.mxu0
        %v1887 = vadd.f32 %v1773, %v1840
        %v1888 = vadd.f32 %v1774, %v1843
        %v1889 = vadd.f32 %v1775, %v1846
        %v1890 = vadd.f32 %v1776, %v1849
        %v1891 = vadd.f32 %v1777, %v1852
        %v1892 = vadd.f32 %v1778, %v1855
        %v1893 = vadd.f32 %v1779, %v1858
        %v1894 = vadd.f32 %v1780, %v1861
        %v1895 = vadd.f32 %v1781, %v1864
        %v1896 = vadd.f32 %v1782, %v1867
        %v1897 = vadd.f32 %v1783, %v1870
        %v1898 = vadd.f32 %v1784, %v1873
        %v1899 = vadd.f32 %v1785, %v1876
        %v1900 = vadd.f32 %v1786, %v1879
        %v1901 = vadd.f32 %v1787, %v1882
        %v1902 = vadd.f32 %v1788, %v1885
        %s1903 = scalar_lea.vmem [#allocation3], 48
        %v1904 = vld [vmem:[%s1903] sm:$0xff]
        %v1905 = vld [vmem:[%s1903 + $0x8] sm:$0xff]
        %v1906 = vld [vmem:[%s1903 + $0x18] sm:$0xff]
        %v1907 = vld [vmem:[%s1903 + $0x20] sm:$0xff]
        %v1908 = vld [vmem:[%s1903 + $0x30] sm:$0xff]
        %v1909 = vld [vmem:[%s1903 + $0x38] sm:$0xff]
        %v1910 = vld [vmem:[%s1903 + $0x48] sm:$0xff]
        %v1911 = vld [vmem:[%s1903 + $0x50] sm:$0xff]
        %v1912 = vld [vmem:[%s1903 + $0x60] sm:$0xff]
        %v1913 = vld [vmem:[%s1903 + $0x68] sm:$0xff]
        %v1914 = vld [vmem:[%s1903 + $0x78] sm:$0xff]
        %v1915 = vld [vmem:[%s1903 + $0x80] sm:$0xff]
        %v1916 = vld [vmem:[%s1903 + $0x90] sm:$0xff]
        %v1917 = vld [vmem:[%s1903 + $0x98] sm:$0xff]
        %v1918 = vld [vmem:[%s1903 + $0xa8] sm:$0xff]
        %v1919 = vld [vmem:[%s1903 + $0xb0] sm:$0xff]
        %s1920 = scalar_lea.vmem [#allocation8], 768
        %v1921 = vld [vmem:[%s1920] sm:$0xff]
        %v1922 = vld [vmem:[%s1920 + $0x8] sm:$0xff]
        %v1923 = vld [vmem:[%s1920 + $0x10] sm:$0xff]
        %v1924 = vld [vmem:[%s1920 + $0x18] sm:$0xff]
        %v1925 = vld [vmem:[%s1920 + $0x20] sm:$0xff]
        %v1926 = vld [vmem:[%s1920 + $0x28] sm:$0xff]
        %v1927 = vld [vmem:[%s1920 + $0x30] sm:$0xff]
        %v1928 = vld [vmem:[%s1920 + $0x38] sm:$0xff]
        %v1929 = vld [vmem:[%s1920 + $0x40] sm:$0xff]
        %v1930 = vld [vmem:[%s1920 + $0x48] sm:$0xff]
        %v1931 = vld [vmem:[%s1920 + $0x50] sm:$0xff]
        %v1932 = vld [vmem:[%s1920 + $0x58] sm:$0xff]
        %v1933 = vld [vmem:[%s1920 + $0x60] sm:$0xff]
        %v1934 = vld [vmem:[%s1920 + $0x68] sm:$0xff]
        %v1935 = vld [vmem:[%s1920 + $0x70] sm:$0xff]
        %v1936 = vld [vmem:[%s1920 + $0x78] sm:$0xff]
        %1937 = vmatpush.msra.mxu0 %v1936
        %1938 = vmatpush.msra.mxu0 %v1935
        %1939 = vmatpush.msra.mxu0 %v1934
        %1940 = vmatpush.msra.mxu0 %v1933
        %1941 = vmatpush.msra.mxu0 %v1932
        %1942 = vmatpush.msra.mxu0 %v1931
        %1943 = vmatpush.msra.mxu0 %v1930
        %1944 = vmatpush.msra.mxu0 %v1929
        %1945 = vmatpush.msra.mxu0 %v1928
        %1946 = vmatpush.msra.mxu0 %v1927
        %1947 = vmatpush.msra.mxu0 %v1926
        %1948 = vmatpush.msra.mxu0 %v1925
        %1949 = vmatpush.msra.mxu0 %v1924
        %1950 = vmatpush.msra.mxu0 %v1923
        %1951 = vmatpush.msra.mxu0 %v1922
        %1952 = vmatpush.msra.mxu0 %v1921
        %1953 = vmatmul.f32.gmra.mxu0 %v1904
        %v1954 = vpop.f32.mrf.mxu0
        %v1955 = vadd.f32 0.0, %v1954
        %1956 = vmatmul.f32.gmra.mxu0 %v1905
        %v1957 = vpop.f32.mrf.mxu0
        %v1958 = vadd.f32 0.0, %v1957
        %1959 = vmatmul.f32.gmra.mxu0 %v1906
        %v1960 = vpop.f32.mrf.mxu0
        %v1961 = vadd.f32 0.0, %v1960
        %1962 = vmatmul.f32.gmra.mxu0 %v1907
        %v1963 = vpop.f32.mrf.mxu0
        %v1964 = vadd.f32 0.0, %v1963
        %1965 = vmatmul.f32.gmra.mxu0 %v1908
        %v1966 = vpop.f32.mrf.mxu0
        %v1967 = vadd.f32 0.0, %v1966
        %1968 = vmatmul.f32.gmra.mxu0 %v1909
        %v1969 = vpop.f32.mrf.mxu0
        %v1970 = vadd.f32 0.0, %v1969
        %1971 = vmatmul.f32.gmra.mxu0 %v1910
        %v1972 = vpop.f32.mrf.mxu0
        %v1973 = vadd.f32 0.0, %v1972
        %1974 = vmatmul.f32.gmra.mxu0 %v1911
        %v1975 = vpop.f32.mrf.mxu0
        %v1976 = vadd.f32 0.0, %v1975
        %1977 = vmatmul.f32.gmra.mxu0 %v1912
        %v1978 = vpop.f32.mrf.mxu0
        %v1979 = vadd.f32 0.0, %v1978
        %1980 = vmatmul.f32.gmra.mxu0 %v1913
        %v1981 = vpop.f32.mrf.mxu0
        %v1982 = vadd.f32 0.0, %v1981
        %1983 = vmatmul.f32.gmra.mxu0 %v1914
        %v1984 = vpop.f32.mrf.mxu0
        %v1985 = vadd.f32 0.0, %v1984
        %1986 = vmatmul.f32.gmra.mxu0 %v1915
        %v1987 = vpop.f32.mrf.mxu0
        %v1988 = vadd.f32 0.0, %v1987
        %1989 = vmatmul.f32.gmra.mxu0 %v1916
        %v1990 = vpop.f32.mrf.mxu0
        %v1991 = vadd.f32 0.0, %v1990
        %1992 = vmatmul.f32.gmra.mxu0 %v1917
        %v1993 = vpop.f32.mrf.mxu0
        %v1994 = vadd.f32 0.0, %v1993
        %1995 = vmatmul.f32.gmra.mxu0 %v1918
        %v1996 = vpop.f32.mrf.mxu0
        %v1997 = vadd.f32 0.0, %v1996
        %1998 = vmatmul.f32.gmra.mxu0 %v1919
        %v1999 = vpop.f32.mrf.mxu0
        %v2000 = vadd.f32 0.0, %v1999
        %2001 = vdwg.mxu0
        %v2002 = vadd.f32 %v1887, %v1955
        %v2003 = vadd.f32 %v1888, %v1958
        %v2004 = vadd.f32 %v1889, %v1961
        %v2005 = vadd.f32 %v1890, %v1964
        %v2006 = vadd.f32 %v1891, %v1967
        %v2007 = vadd.f32 %v1892, %v1970
        %v2008 = vadd.f32 %v1893, %v1973
        %v2009 = vadd.f32 %v1894, %v1976
        %v2010 = vadd.f32 %v1895, %v1979
        %v2011 = vadd.f32 %v1896, %v1982
        %v2012 = vadd.f32 %v1897, %v1985
        %v2013 = vadd.f32 %v1898, %v1988
        %v2014 = vadd.f32 %v1899, %v1991
        %v2015 = vadd.f32 %v1900, %v1994
        %v2016 = vadd.f32 %v1901, %v1997
        %v2017 = vadd.f32 %v1902, %v2000
        %v2018 = vld [vmem:[%s1903 + $0x1] sm:$0xff]
        %v2019 = vld [vmem:[%s1903 + $0x9] sm:$0xff]
        %v2020 = vld [vmem:[%s1903 + $0x19] sm:$0xff]
        %v2021 = vld [vmem:[%s1903 + $0x21] sm:$0xff]
        %v2022 = vld [vmem:[%s1903 + $0x31] sm:$0xff]
        %v2023 = vld [vmem:[%s1903 + $0x39] sm:$0xff]
        %v2024 = vld [vmem:[%s1903 + $0x49] sm:$0xff]
        %v2025 = vld [vmem:[%s1903 + $0x51] sm:$0xff]
        %v2026 = vld [vmem:[%s1903 + $0x61] sm:$0xff]
        %v2027 = vld [vmem:[%s1903 + $0x69] sm:$0xff]
        %v2028 = vld [vmem:[%s1903 + $0x79] sm:$0xff]
        %v2029 = vld [vmem:[%s1903 + $0x81] sm:$0xff]
        %v2030 = vld [vmem:[%s1903 + $0x91] sm:$0xff]
        %v2031 = vld [vmem:[%s1903 + $0x99] sm:$0xff]
        %v2032 = vld [vmem:[%s1903 + $0xa9] sm:$0xff]
        %v2033 = vld [vmem:[%s1903 + $0xb1] sm:$0xff]
        %s2034 = scalar_lea.vmem [#allocation8], 896
        %v2035 = vld [vmem:[%s2034] sm:$0xff]
        %v2036 = vld [vmem:[%s2034 + $0x8] sm:$0xff]
        %v2037 = vld [vmem:[%s2034 + $0x10] sm:$0xff]
        %v2038 = vld [vmem:[%s2034 + $0x18] sm:$0xff]
        %v2039 = vld [vmem:[%s2034 + $0x20] sm:$0xff]
        %v2040 = vld [vmem:[%s2034 + $0x28] sm:$0xff]
        %v2041 = vld [vmem:[%s2034 + $0x30] sm:$0xff]
        %v2042 = vld [vmem:[%s2034 + $0x38] sm:$0xff]
        %v2043 = vld [vmem:[%s2034 + $0x40] sm:$0xff]
        %v2044 = vld [vmem:[%s2034 + $0x48] sm:$0xff]
        %v2045 = vld [vmem:[%s2034 + $0x50] sm:$0xff]
        %v2046 = vld [vmem:[%s2034 + $0x58] sm:$0xff]
        %v2047 = vld [vmem:[%s2034 + $0x60] sm:$0xff]
        %v2048 = vld [vmem:[%s2034 + $0x68] sm:$0xff]
        %v2049 = vld [vmem:[%s2034 + $0x70] sm:$0xff]
        %v2050 = vld [vmem:[%s2034 + $0x78] sm:$0xff]
        %2051 = vmatpush.msra.mxu0 %v2050
        %2052 = vmatpush.msra.mxu0 %v2049
        %2053 = vmatpush.msra.mxu0 %v2048
        %2054 = vmatpush.msra.mxu0 %v2047
        %2055 = vmatpush.msra.mxu0 %v2046
        %2056 = vmatpush.msra.mxu0 %v2045
        %2057 = vmatpush.msra.mxu0 %v2044
        %2058 = vmatpush.msra.mxu0 %v2043
        %2059 = vmatpush.msra.mxu0 %v2042
        %2060 = vmatpush.msra.mxu0 %v2041
        %2061 = vmatpush.msra.mxu0 %v2040
        %2062 = vmatpush.msra.mxu0 %v2039
        %2063 = vmatpush.msra.mxu0 %v2038
        %2064 = vmatpush.msra.mxu0 %v2037
        %2065 = vmatpush.msra.mxu0 %v2036
        %2066 = vmatpush.msra.mxu0 %v2035
        %2067 = vmatmul.f32.gmra.mxu0 %v2018
        %v2068 = vpop.f32.mrf.mxu0
        %v2069 = vadd.f32 0.0, %v2068
        %2070 = vmatmul.f32.gmra.mxu0 %v2019
        %v2071 = vpop.f32.mrf.mxu0
        %v2072 = vadd.f32 0.0, %v2071
        %2073 = vmatmul.f32.gmra.mxu0 %v2020
        %v2074 = vpop.f32.mrf.mxu0
        %v2075 = vadd.f32 0.0, %v2074
        %2076 = vmatmul.f32.gmra.mxu0 %v2021
        %v2077 = vpop.f32.mrf.mxu0
        %v2078 = vadd.f32 0.0, %v2077
        %2079 = vmatmul.f32.gmra.mxu0 %v2022
        %v2080 = vpop.f32.mrf.mxu0
        %v2081 = vadd.f32 0.0, %v2080
        %2082 = vmatmul.f32.gmra.mxu0 %v2023
        %v2083 = vpop.f32.mrf.mxu0
        %v2084 = vadd.f32 0.0, %v2083
        %2085 = vmatmul.f32.gmra.mxu0 %v2024
        %v2086 = vpop.f32.mrf.mxu0
        %v2087 = vadd.f32 0.0, %v2086
        %2088 = vmatmul.f32.gmra.mxu0 %v2025
        %v2089 = vpop.f32.mrf.mxu0
        %v2090 = vadd.f32 0.0, %v2089
        %2091 = vmatmul.f32.gmra.mxu0 %v2026
        %v2092 = vpop.f32.mrf.mxu0
        %v2093 = vadd.f32 0.0, %v2092
        %2094 = vmatmul.f32.gmra.mxu0 %v2027
        %v2095 = vpop.f32.mrf.mxu0
        %v2096 = vadd.f32 0.0, %v2095
        %2097 = vmatmul.f32.gmra.mxu0 %v2028
        %v2098 = vpop.f32.mrf.mxu0
        %v2099 = vadd.f32 0.0, %v2098
        %2100 = vmatmul.f32.gmra.mxu0 %v2029
        %v2101 = vpop.f32.mrf.mxu0
        %v2102 = vadd.f32 0.0, %v2101
        %2103 = vmatmul.f32.gmra.mxu0 %v2030
        %v2104 = vpop.f32.mrf.mxu0
        %v2105 = vadd.f32 0.0, %v2104
        %2106 = vmatmul.f32.gmra.mxu0 %v2031
        %v2107 = vpop.f32.mrf.mxu0
        %v2108 = vadd.f32 0.0, %v2107
        %2109 = vmatmul.f32.gmra.mxu0 %v2032
        %v2110 = vpop.f32.mrf.mxu0
        %v2111 = vadd.f32 0.0, %v2110
        %2112 = vmatmul.f32.gmra.mxu0 %v2033
        %v2113 = vpop.f32.mrf.mxu0
        %v2114 = vadd.f32 0.0, %v2113
        %2115 = vdwg.mxu0
        %v2116 = vadd.f32 %v2002, %v2069
        %v2117 = vadd.f32 %v2003, %v2072
        %v2118 = vadd.f32 %v2004, %v2075
        %v2119 = vadd.f32 %v2005, %v2078
        %v2120 = vadd.f32 %v2006, %v2081
        %v2121 = vadd.f32 %v2007, %v2084
        %v2122 = vadd.f32 %v2008, %v2087
        %v2123 = vadd.f32 %v2009, %v2090
        %v2124 = vadd.f32 %v2010, %v2093
        %v2125 = vadd.f32 %v2011, %v2096
        %v2126 = vadd.f32 %v2012, %v2099
        %v2127 = vadd.f32 %v2013, %v2102
        %v2128 = vadd.f32 %v2014, %v2105
        %v2129 = vadd.f32 %v2015, %v2108
        %v2130 = vadd.f32 %v2016, %v2111
        %v2131 = vadd.f32 %v2017, %v2114
        %v2132 = vld [vmem:[%s1903 + $0x2] sm:$0xff]
        %v2133 = vld [vmem:[%s1903 + $0xa] sm:$0xff]
        %v2134 = vld [vmem:[%s1903 + $0x1a] sm:$0xff]
        %v2135 = vld [vmem:[%s1903 + $0x22] sm:$0xff]
        %v2136 = vld [vmem:[%s1903 + $0x32] sm:$0xff]
        %v2137 = vld [vmem:[%s1903 + $0x3a] sm:$0xff]
        %v2138 = vld [vmem:[%s1903 + $0x4a] sm:$0xff]
        %v2139 = vld [vmem:[%s1903 + $0x52] sm:$0xff]
        %v2140 = vld [vmem:[%s1903 + $0x62] sm:$0xff]
        %v2141 = vld [vmem:[%s1903 + $0x6a] sm:$0xff]
        %v2142 = vld [vmem:[%s1903 + $0x7a] sm:$0xff]
        %v2143 = vld [vmem:[%s1903 + $0x82] sm:$0xff]
        %v2144 = vld [vmem:[%s1903 + $0x92] sm:$0xff]
        %v2145 = vld [vmem:[%s1903 + $0x9a] sm:$0xff]
        %v2146 = vld [vmem:[%s1903 + $0xaa] sm:$0xff]
        %v2147 = vld [vmem:[%s1903 + $0xb2] sm:$0xff]
        %s2148 = scalar_lea.vmem [#allocation8], 1024
        %v2149 = vld [vmem:[%s2148] sm:$0xff]
        %v2150 = vld [vmem:[%s2148 + $0x8] sm:$0xff]
        %v2151 = vld [vmem:[%s2148 + $0x10] sm:$0xff]
        %v2152 = vld [vmem:[%s2148 + $0x18] sm:$0xff]
        %v2153 = vld [vmem:[%s2148 + $0x20] sm:$0xff]
        %v2154 = vld [vmem:[%s2148 + $0x28] sm:$0xff]
        %v2155 = vld [vmem:[%s2148 + $0x30] sm:$0xff]
        %v2156 = vld [vmem:[%s2148 + $0x38] sm:$0xff]
        %v2157 = vld [vmem:[%s2148 + $0x40] sm:$0xff]
        %v2158 = vld [vmem:[%s2148 + $0x48] sm:$0xff]
        %v2159 = vld [vmem:[%s2148 + $0x50] sm:$0xff]
        %v2160 = vld [vmem:[%s2148 + $0x58] sm:$0xff]
        %v2161 = vld [vmem:[%s2148 + $0x60] sm:$0xff]
        %v2162 = vld [vmem:[%s2148 + $0x68] sm:$0xff]
        %v2163 = vld [vmem:[%s2148 + $0x70] sm:$0xff]
        %v2164 = vld [vmem:[%s2148 + $0x78] sm:$0xff]
        %2165 = vmatpush.msra.mxu0 %v2164
        %2166 = vmatpush.msra.mxu0 %v2163
        %2167 = vmatpush.msra.mxu0 %v2162
        %2168 = vmatpush.msra.mxu0 %v2161
        %2169 = vmatpush.msra.mxu0 %v2160
        %2170 = vmatpush.msra.mxu0 %v2159
        %2171 = vmatpush.msra.mxu0 %v2158
        %2172 = vmatpush.msra.mxu0 %v2157
        %2173 = vmatpush.msra.mxu0 %v2156
        %2174 = vmatpush.msra.mxu0 %v2155
        %2175 = vmatpush.msra.mxu0 %v2154
        %2176 = vmatpush.msra.mxu0 %v2153
        %2177 = vmatpush.msra.mxu0 %v2152
        %2178 = vmatpush.msra.mxu0 %v2151
        %2179 = vmatpush.msra.mxu0 %v2150
        %2180 = vmatpush.msra.mxu0 %v2149
        %2181 = vmatmul.f32.gmra.mxu0 %v2132
        %v2182 = vpop.f32.mrf.mxu0
        %v2183 = vadd.f32 0.0, %v2182
        %2184 = vmatmul.f32.gmra.mxu0 %v2133
        %v2185 = vpop.f32.mrf.mxu0
        %v2186 = vadd.f32 0.0, %v2185
        %2187 = vmatmul.f32.gmra.mxu0 %v2134
        %v2188 = vpop.f32.mrf.mxu0
        %v2189 = vadd.f32 0.0, %v2188
        %2190 = vmatmul.f32.gmra.mxu0 %v2135
        %v2191 = vpop.f32.mrf.mxu0
        %v2192 = vadd.f32 0.0, %v2191
        %2193 = vmatmul.f32.gmra.mxu0 %v2136
        %v2194 = vpop.f32.mrf.mxu0
        %v2195 = vadd.f32 0.0, %v2194
        %2196 = vmatmul.f32.gmra.mxu0 %v2137
        %v2197 = vpop.f32.mrf.mxu0
        %v2198 = vadd.f32 0.0, %v2197
        %2199 = vmatmul.f32.gmra.mxu0 %v2138
        %v2200 = vpop.f32.mrf.mxu0
        %v2201 = vadd.f32 0.0, %v2200
        %2202 = vmatmul.f32.gmra.mxu0 %v2139
        %v2203 = vpop.f32.mrf.mxu0
        %v2204 = vadd.f32 0.0, %v2203
        %2205 = vmatmul.f32.gmra.mxu0 %v2140
        %v2206 = vpop.f32.mrf.mxu0
        %v2207 = vadd.f32 0.0, %v2206
        %2208 = vmatmul.f32.gmra.mxu0 %v2141
        %v2209 = vpop.f32.mrf.mxu0
        %v2210 = vadd.f32 0.0, %v2209
        %2211 = vmatmul.f32.gmra.mxu0 %v2142
        %v2212 = vpop.f32.mrf.mxu0
        %v2213 = vadd.f32 0.0, %v2212
        %2214 = vmatmul.f32.gmra.mxu0 %v2143
        %v2215 = vpop.f32.mrf.mxu0
        %v2216 = vadd.f32 0.0, %v2215
        %2217 = vmatmul.f32.gmra.mxu0 %v2144
        %v2218 = vpop.f32.mrf.mxu0
        %v2219 = vadd.f32 0.0, %v2218
        %2220 = vmatmul.f32.gmra.mxu0 %v2145
        %v2221 = vpop.f32.mrf.mxu0
        %v2222 = vadd.f32 0.0, %v2221
        %2223 = vmatmul.f32.gmra.mxu0 %v2146
        %v2224 = vpop.f32.mrf.mxu0
        %v2225 = vadd.f32 0.0, %v2224
        %2226 = vmatmul.f32.gmra.mxu0 %v2147
        %v2227 = vpop.f32.mrf.mxu0
        %v2228 = vadd.f32 0.0, %v2227
        %2229 = vdwg.mxu0
        %v2230 = vadd.f32 %v2116, %v2183
        %v2231 = vadd.f32 %v2117, %v2186
        %v2232 = vadd.f32 %v2118, %v2189
        %v2233 = vadd.f32 %v2119, %v2192
        %v2234 = vadd.f32 %v2120, %v2195
        %v2235 = vadd.f32 %v2121, %v2198
        %v2236 = vadd.f32 %v2122, %v2201
        %v2237 = vadd.f32 %v2123, %v2204
        %v2238 = vadd.f32 %v2124, %v2207
        %v2239 = vadd.f32 %v2125, %v2210
        %v2240 = vadd.f32 %v2126, %v2213
        %v2241 = vadd.f32 %v2127, %v2216
        %v2242 = vadd.f32 %v2128, %v2219
        %v2243 = vadd.f32 %v2129, %v2222
        %v2244 = vadd.f32 %v2130, %v2225
        %v2245 = vadd.f32 %v2131, %v2228
        %v2246 = vld [vmem:[%s5] sm:$0x1]
        %v2248 = vperm.slane %v2246, 0
        %v2250 = vmul.f32 %v2230, %v2248
        %v2251 = vmul.f32 %v2231, %v2248
        %v2252 = vmul.f32 %v2232, %v2248
        %v2253 = vmul.f32 %v2233, %v2248
        %v2254 = vmul.f32 %v2234, %v2248
        %v2255 = vmul.f32 %v2235, %v2248
        %v2256 = vmul.f32 %v2236, %v2248
        %v2257 = vmul.f32 %v2237, %v2248
        %v2258 = vmul.f32 %v2238, %v2248
        %v2259 = vmul.f32 %v2239, %v2248
        %v2260 = vmul.f32 %v2240, %v2248
        %v2261 = vmul.f32 %v2241, %v2248
        %v2262 = vmul.f32 %v2242, %v2248
        %v2263 = vmul.f32 %v2243, %v2248
        %v2264 = vmul.f32 %v2244, %v2248
        %v2265 = vmul.f32 %v2245, %v2248
        %v2266 = vld [vmem:[%s6] sm:$0x1]
        %v2268 = vperm.slane %v2266, 0
        %v2270 = vadd.f32 %v2250, %v2268
        %v2271 = vadd.f32 %v2251, %v2268
        %v2272 = vadd.f32 %v2252, %v2268
        %v2273 = vadd.f32 %v2253, %v2268
        %v2274 = vadd.f32 %v2254, %v2268
        %v2275 = vadd.f32 %v2255, %v2268
        %v2276 = vadd.f32 %v2256, %v2268
        %v2277 = vadd.f32 %v2257, %v2268
        %v2278 = vadd.f32 %v2258, %v2268
        %v2279 = vadd.f32 %v2259, %v2268
        %v2280 = vadd.f32 %v2260, %v2268
        %v2281 = vadd.f32 %v2261, %v2268
        %v2282 = vadd.f32 %v2262, %v2268
        %v2283 = vadd.f32 %v2263, %v2268
        %v2284 = vadd.f32 %v2264, %v2268
        %v2285 = vadd.f32 %v2265, %v2268
        %v2286 = vxor.u32 %v2270, 2147483648
        %v2287 = vxor.u32 %v2271, 2147483648
        %v2288 = vxor.u32 %v2272, 2147483648
        %v2289 = vxor.u32 %v2273, 2147483648
        %v2290 = vxor.u32 %v2274, 2147483648
        %v2291 = vxor.u32 %v2275, 2147483648
        %v2292 = vxor.u32 %v2276, 2147483648
        %v2293 = vxor.u32 %v2277, 2147483648
        %v2294 = vxor.u32 %v2278, 2147483648
        %v2295 = vxor.u32 %v2279, 2147483648
        %v2296 = vxor.u32 %v2280, 2147483648
        %v2297 = vxor.u32 %v2281, 2147483648
        %v2298 = vxor.u32 %v2282, 2147483648
        %v2299 = vxor.u32 %v2283, 2147483648
        %v2300 = vxor.u32 %v2284, 2147483648
        %v2301 = vxor.u32 %v2285, 2147483648
        %v2302 = vmul.f32 %v2286, 1.442695
        %v2303 = vpow.pop %v2302
        %v2304 = vmul.f32 %v2287, 1.442695
        %v2305 = vpow.pop %v2304
        %v2306 = vmul.f32 %v2288, 1.442695
        %v2307 = vpow.pop %v2306
        %v2308 = vmul.f32 %v2289, 1.442695
        %v2309 = vpow.pop %v2308
        %v2310 = vmul.f32 %v2290, 1.442695
        %v2311 = vpow.pop %v2310
        %v2312 = vmul.f32 %v2291, 1.442695
        %v2313 = vpow.pop %v2312
        %v2314 = vmul.f32 %v2292, 1.442695
        %v2315 = vpow.pop %v2314
        %v2316 = vmul.f32 %v2293, 1.442695
        %v2317 = vpow.pop %v2316
        %v2318 = vmul.f32 %v2294, 1.442695
        %v2319 = vpow.pop %v2318
        %v2320 = vmul.f32 %v2295, 1.442695
        %v2321 = vpow.pop %v2320
        %v2322 = vmul.f32 %v2296, 1.442695
        %v2323 = vpow.pop %v2322
        %v2324 = vmul.f32 %v2297, 1.442695
        %v2325 = vpow.pop %v2324
        %v2326 = vmul.f32 %v2298, 1.442695
        %v2327 = vpow.pop %v2326
        %v2328 = vmul.f32 %v2299, 1.442695
        %v2329 = vpow.pop %v2328
        %v2330 = vmul.f32 %v2300, 1.442695
        %v2331 = vpow.pop %v2330
        %v2332 = vmul.f32 %v2301, 1.442695
        %v2333 = vpow.pop %v2332
        %v2334 = vadd.f32 %v2303, 1.0
        %v2335 = vadd.f32 %v2305, 1.0
        %v2336 = vadd.f32 %v2307, 1.0
        %v2337 = vadd.f32 %v2309, 1.0
        %v2338 = vadd.f32 %v2311, 1.0
        %v2339 = vadd.f32 %v2313, 1.0
        %v2340 = vadd.f32 %v2315, 1.0
        %v2341 = vadd.f32 %v2317, 1.0
        %v2342 = vadd.f32 %v2319, 1.0
        %v2343 = vadd.f32 %v2321, 1.0
        %v2344 = vadd.f32 %v2323, 1.0
        %v2345 = vadd.f32 %v2325, 1.0
        %v2346 = vadd.f32 %v2327, 1.0
        %v2347 = vadd.f32 %v2329, 1.0
        %v2348 = vadd.f32 %v2331, 1.0
        %v2349 = vadd.f32 %v2333, 1.0
        %v2350 = vrcp.pop %v2334
        %v2351 = vmul.f32 %v2334, %v2350
        %v2352 = vsub.f32 1.0, %v2351
        %v2353 = vmul.f32 %v2350, %v2352
        %v2354 = vadd.f32 %v2350, %v2353
        %vm2355 = vweird.f32 %v2334
        %vm2356 = vweird.f32 %v2350
        %vm2357 = vmor %vm2355, %vm2356
        %v2358 = vsel %vm2357, %v2350, %v2354
        %v2359 = vand.u32 2147483647, %v2334
        %vm2360 = vcmp.eq.f32.partialorder %v2359, 8.507059e+37
        %v2361 = vand.u32 %v2334, 2147483648
        %v2362 = vor.u32 1.1754944e-38, %v2361
        %v2363 = vsel %vm2360, %v2362, %v2358
        %v2364 = vmul.f32 1.0, %v2363
        %v2365 = vrcp.pop %v2335
        %v2366 = vmul.f32 %v2335, %v2365
        %v2367 = vsub.f32 1.0, %v2366
        %v2368 = vmul.f32 %v2365, %v2367
        %v2369 = vadd.f32 %v2365, %v2368
        %vm2370 = vweird.f32 %v2335
        %vm2371 = vweird.f32 %v2365
        %vm2372 = vmor %vm2370, %vm2371
        %v2373 = vsel %vm2372, %v2365, %v2369
        %v2374 = vand.u32 2147483647, %v2335
        %vm2375 = vcmp.eq.f32.partialorder %v2374, 8.507059e+37
        %v2376 = vand.u32 %v2335, 2147483648
        %v2377 = vor.u32 1.1754944e-38, %v2376
        %v2378 = vsel %vm2375, %v2377, %v2373
        %v2379 = vmul.f32 1.0, %v2378
        %v2380 = vrcp.pop %v2336
        %v2381 = vmul.f32 %v2336, %v2380
        %v2382 = vsub.f32 1.0, %v2381
        %v2383 = vmul.f32 %v2380, %v2382
        %v2384 = vadd.f32 %v2380, %v2383
        %vm2385 = vweird.f32 %v2336
        %vm2386 = vweird.f32 %v2380
        %vm2387 = vmor %vm2385, %vm2386
        %v2388 = vsel %vm2387, %v2380, %v2384
        %v2389 = vand.u32 2147483647, %v2336
        %vm2390 = vcmp.eq.f32.partialorder %v2389, 8.507059e+37
        %v2391 = vand.u32 %v2336, 2147483648
        %v2392 = vor.u32 1.1754944e-38, %v2391
        %v2393 = vsel %vm2390, %v2392, %v2388
        %v2394 = vmul.f32 1.0, %v2393
        %v2395 = vrcp.pop %v2337
        %v2396 = vmul.f32 %v2337, %v2395
        %v2397 = vsub.f32 1.0, %v2396
        %v2398 = vmul.f32 %v2395, %v2397
        %v2399 = vadd.f32 %v2395, %v2398
        %vm2400 = vweird.f32 %v2337
        %vm2401 = vweird.f32 %v2395
        %vm2402 = vmor %vm2400, %vm2401
        %v2403 = vsel %vm2402, %v2395, %v2399
        %v2404 = vand.u32 2147483647, %v2337
        %vm2405 = vcmp.eq.f32.partialorder %v2404, 8.507059e+37
        %v2406 = vand.u32 %v2337, 2147483648
        %v2407 = vor.u32 1.1754944e-38, %v2406
        %v2408 = vsel %vm2405, %v2407, %v2403
        %v2409 = vmul.f32 1.0, %v2408
        %v2410 = vrcp.pop %v2338
        %v2411 = vmul.f32 %v2338, %v2410
        %v2412 = vsub.f32 1.0, %v2411
        %v2413 = vmul.f32 %v2410, %v2412
        %v2414 = vadd.f32 %v2410, %v2413
        %vm2415 = vweird.f32 %v2338
        %vm2416 = vweird.f32 %v2410
        %vm2417 = vmor %vm2415, %vm2416
        %v2418 = vsel %vm2417, %v2410, %v2414
        %v2419 = vand.u32 2147483647, %v2338
        %vm2420 = vcmp.eq.f32.partialorder %v2419, 8.507059e+37
        %v2421 = vand.u32 %v2338, 2147483648
        %v2422 = vor.u32 1.1754944e-38, %v2421
        %v2423 = vsel %vm2420, %v2422, %v2418
        %v2424 = vmul.f32 1.0, %v2423
        %v2425 = vrcp.pop %v2339
        %v2426 = vmul.f32 %v2339, %v2425
        %v2427 = vsub.f32 1.0, %v2426
        %v2428 = vmul.f32 %v2425, %v2427
        %v2429 = vadd.f32 %v2425, %v2428
        %vm2430 = vweird.f32 %v2339
        %vm2431 = vweird.f32 %v2425
        %vm2432 = vmor %vm2430, %vm2431
        %v2433 = vsel %vm2432, %v2425, %v2429
        %v2434 = vand.u32 2147483647, %v2339
        %vm2435 = vcmp.eq.f32.partialorder %v2434, 8.507059e+37
        %v2436 = vand.u32 %v2339, 2147483648
        %v2437 = vor.u32 1.1754944e-38, %v2436
        %v2438 = vsel %vm2435, %v2437, %v2433
        %v2439 = vmul.f32 1.0, %v2438
        %v2440 = vrcp.pop %v2340
        %v2441 = vmul.f32 %v2340, %v2440
        %v2442 = vsub.f32 1.0, %v2441
        %v2443 = vmul.f32 %v2440, %v2442
        %v2444 = vadd.f32 %v2440, %v2443
        %vm2445 = vweird.f32 %v2340
        %vm2446 = vweird.f32 %v2440
        %vm2447 = vmor %vm2445, %vm2446
        %v2448 = vsel %vm2447, %v2440, %v2444
        %v2449 = vand.u32 2147483647, %v2340
        %vm2450 = vcmp.eq.f32.partialorder %v2449, 8.507059e+37
        %v2451 = vand.u32 %v2340, 2147483648
        %v2452 = vor.u32 1.1754944e-38, %v2451
        %v2453 = vsel %vm2450, %v2452, %v2448
        %v2454 = vmul.f32 1.0, %v2453
        %v2455 = vrcp.pop %v2341
        %v2456 = vmul.f32 %v2341, %v2455
        %v2457 = vsub.f32 1.0, %v2456
        %v2458 = vmul.f32 %v2455, %v2457
        %v2459 = vadd.f32 %v2455, %v2458
        %vm2460 = vweird.f32 %v2341
        %vm2461 = vweird.f32 %v2455
        %vm2462 = vmor %vm2460, %vm2461
        %v2463 = vsel %vm2462, %v2455, %v2459
        %v2464 = vand.u32 2147483647, %v2341
        %vm2465 = vcmp.eq.f32.partialorder %v2464, 8.507059e+37
        %v2466 = vand.u32 %v2341, 2147483648
        %v2467 = vor.u32 1.1754944e-38, %v2466
        %v2468 = vsel %vm2465, %v2467, %v2463
        %v2469 = vmul.f32 1.0, %v2468
        %v2470 = vrcp.pop %v2342
        %v2471 = vmul.f32 %v2342, %v2470
        %v2472 = vsub.f32 1.0, %v2471
        %v2473 = vmul.f32 %v2470, %v2472
        %v2474 = vadd.f32 %v2470, %v2473
        %vm2475 = vweird.f32 %v2342
        %vm2476 = vweird.f32 %v2470
        %vm2477 = vmor %vm2475, %vm2476
        %v2478 = vsel %vm2477, %v2470, %v2474
        %v2479 = vand.u32 2147483647, %v2342
        %vm2480 = vcmp.eq.f32.partialorder %v2479, 8.507059e+37
        %v2481 = vand.u32 %v2342, 2147483648
        %v2482 = vor.u32 1.1754944e-38, %v2481
        %v2483 = vsel %vm2480, %v2482, %v2478
        %v2484 = vmul.f32 1.0, %v2483
        %v2485 = vrcp.pop %v2343
        %v2486 = vmul.f32 %v2343, %v2485
        %v2487 = vsub.f32 1.0, %v2486
        %v2488 = vmul.f32 %v2485, %v2487
        %v2489 = vadd.f32 %v2485, %v2488
        %vm2490 = vweird.f32 %v2343
        %vm2491 = vweird.f32 %v2485
        %vm2492 = vmor %vm2490, %vm2491
        %v2493 = vsel %vm2492, %v2485, %v2489
        %v2494 = vand.u32 2147483647, %v2343
        %vm2495 = vcmp.eq.f32.partialorder %v2494, 8.507059e+37
        %v2496 = vand.u32 %v2343, 2147483648
        %v2497 = vor.u32 1.1754944e-38, %v2496
        %v2498 = vsel %vm2495, %v2497, %v2493
        %v2499 = vmul.f32 1.0, %v2498
        %v2500 = vrcp.pop %v2344
        %v2501 = vmul.f32 %v2344, %v2500
        %v2502 = vsub.f32 1.0, %v2501
        %v2503 = vmul.f32 %v2500, %v2502
        %v2504 = vadd.f32 %v2500, %v2503
        %vm2505 = vweird.f32 %v2344
        %vm2506 = vweird.f32 %v2500
        %vm2507 = vmor %vm2505, %vm2506
        %v2508 = vsel %vm2507, %v2500, %v2504
        %v2509 = vand.u32 2147483647, %v2344
        %vm2510 = vcmp.eq.f32.partialorder %v2509, 8.507059e+37
        %v2511 = vand.u32 %v2344, 2147483648
        %v2512 = vor.u32 1.1754944e-38, %v2511
        %v2513 = vsel %vm2510, %v2512, %v2508
        %v2514 = vmul.f32 1.0, %v2513
        %v2515 = vrcp.pop %v2345
        %v2516 = vmul.f32 %v2345, %v2515
        %v2517 = vsub.f32 1.0, %v2516
        %v2518 = vmul.f32 %v2515, %v2517
        %v2519 = vadd.f32 %v2515, %v2518
        %vm2520 = vweird.f32 %v2345
        %vm2521 = vweird.f32 %v2515
        %vm2522 = vmor %vm2520, %vm2521
        %v2523 = vsel %vm2522, %v2515, %v2519
        %v2524 = vand.u32 2147483647, %v2345
        %vm2525 = vcmp.eq.f32.partialorder %v2524, 8.507059e+37
        %v2526 = vand.u32 %v2345, 2147483648
        %v2527 = vor.u32 1.1754944e-38, %v2526
        %v2528 = vsel %vm2525, %v2527, %v2523
        %v2529 = vmul.f32 1.0, %v2528
        %v2530 = vrcp.pop %v2346
        %v2531 = vmul.f32 %v2346, %v2530
        %v2532 = vsub.f32 1.0, %v2531
        %v2533 = vmul.f32 %v2530, %v2532
        %v2534 = vadd.f32 %v2530, %v2533
        %vm2535 = vweird.f32 %v2346
        %vm2536 = vweird.f32 %v2530
        %vm2537 = vmor %vm2535, %vm2536
        %v2538 = vsel %vm2537, %v2530, %v2534
        %v2539 = vand.u32 2147483647, %v2346
        %vm2540 = vcmp.eq.f32.partialorder %v2539, 8.507059e+37
        %v2541 = vand.u32 %v2346, 2147483648
        %v2542 = vor.u32 1.1754944e-38, %v2541
        %v2543 = vsel %vm2540, %v2542, %v2538
        %v2544 = vmul.f32 1.0, %v2543
        %v2545 = vrcp.pop %v2347
        %v2546 = vmul.f32 %v2347, %v2545
        %v2547 = vsub.f32 1.0, %v2546
        %v2548 = vmul.f32 %v2545, %v2547
        %v2549 = vadd.f32 %v2545, %v2548
        %vm2550 = vweird.f32 %v2347
        %vm2551 = vweird.f32 %v2545
        %vm2552 = vmor %vm2550, %vm2551
        %v2553 = vsel %vm2552, %v2545, %v2549
        %v2554 = vand.u32 2147483647, %v2347
        %vm2555 = vcmp.eq.f32.partialorder %v2554, 8.507059e+37
        %v2556 = vand.u32 %v2347, 2147483648
        %v2557 = vor.u32 1.1754944e-38, %v2556
        %v2558 = vsel %vm2555, %v2557, %v2553
        %v2559 = vmul.f32 1.0, %v2558
        %v2560 = vrcp.pop %v2348
        %v2561 = vmul.f32 %v2348, %v2560
        %v2562 = vsub.f32 1.0, %v2561
        %v2563 = vmul.f32 %v2560, %v2562
        %v2564 = vadd.f32 %v2560, %v2563
        %vm2565 = vweird.f32 %v2348
        %vm2566 = vweird.f32 %v2560
        %vm2567 = vmor %vm2565, %vm2566
        %v2568 = vsel %vm2567, %v2560, %v2564
        %v2569 = vand.u32 2147483647, %v2348
        %vm2570 = vcmp.eq.f32.partialorder %v2569, 8.507059e+37
        %v2571 = vand.u32 %v2348, 2147483648
        %v2572 = vor.u32 1.1754944e-38, %v2571
        %v2573 = vsel %vm2570, %v2572, %v2568
        %v2574 = vmul.f32 1.0, %v2573
        %v2575 = vrcp.pop %v2349
        %v2576 = vmul.f32 %v2349, %v2575
        %v2577 = vsub.f32 1.0, %v2576
        %v2578 = vmul.f32 %v2575, %v2577
        %v2579 = vadd.f32 %v2575, %v2578
        %vm2580 = vweird.f32 %v2349
        %vm2581 = vweird.f32 %v2575
        %vm2582 = vmor %vm2580, %vm2581
        %v2583 = vsel %vm2582, %v2575, %v2579
        %v2584 = vand.u32 2147483647, %v2349
        %vm2585 = vcmp.eq.f32.partialorder %v2584, 8.507059e+37
        %v2586 = vand.u32 %v2349, 2147483648
        %v2587 = vor.u32 1.1754944e-38, %v2586
        %v2588 = vsel %vm2585, %v2587, %v2583
        %v2589 = vmul.f32 1.0, %v2588
        %v2590 = vmul.f32 %v2270, %v2364
        %v2591 = vmul.f32 %v2271, %v2379
        %v2592 = vmul.f32 %v2272, %v2394
        %v2593 = vmul.f32 %v2273, %v2409
        %v2594 = vmul.f32 %v2274, %v2424
        %v2595 = vmul.f32 %v2275, %v2439
        %v2596 = vmul.f32 %v2276, %v2454
        %v2597 = vmul.f32 %v2277, %v2469
        %v2598 = vmul.f32 %v2278, %v2484
        %v2599 = vmul.f32 %v2279, %v2499
        %v2600 = vmul.f32 %v2280, %v2514
        %v2601 = vmul.f32 %v2281, %v2529
        %v2602 = vmul.f32 %v2282, %v2544
        %v2603 = vmul.f32 %v2283, %v2559
        %v2604 = vmul.f32 %v2284, %v2574
        %v2605 = vmul.f32 %v2285, %v2589
        %vm2630 = vcmask 1046528
        %v2631 = vrot.slane %v340, 1
        %v2632 = vrot.slane %v341, 1
        %v2633 = vsel %vm2630, %v2631, %v2632
        %v2634 = vrot.slane %v342, 1
        %v2635 = vsel %vm2630, %v2632, %v2634
        %v2636 = vrot.slane %v343, 1
        %v2637 = vrot.slane %v344, 1
        %v2638 = vsel %vm2630, %v2636, %v2637
        %v2639 = vrot.slane %v345, 1
        %v2640 = vsel %vm2630, %v2637, %v2639
        %v2641 = vrot.slane %v346, 1
        %v2642 = vrot.slane %v347, 1
        %v2643 = vsel %vm2630, %v2641, %v2642
        %v2644 = vrot.slane %v348, 1
        %v2645 = vsel %vm2630, %v2642, %v2644
        %v2646 = vrot.slane %v349, 1
        %v2647 = vrot.slane %v350, 1
        %v2648 = vsel %vm2630, %v2646, %v2647
        %v2649 = vrot.slane %v351, 1
        %v2650 = vsel %vm2630, %v2647, %v2649
        %v2651 = vrot.slane %v352, 1
        %v2652 = vrot.slane %v353, 1
        %v2653 = vsel %vm2630, %v2651, %v2652
        %v2654 = vrot.slane %v354, 1
        %v2655 = vsel %vm2630, %v2652, %v2654
        %v2656 = vrot.slane %v355, 1
        %v2657 = vrot.slane %v356, 1
        %v2658 = vsel %vm2630, %v2656, %v2657
        %v2659 = vrot.slane %v357, 1
        %v2660 = vsel %vm2630, %v2657, %v2659
        %v2661 = vrot.slane %v358, 1
        %v2662 = vrot.slane %v359, 1
        %v2663 = vsel %vm2630, %v2661, %v2662
        %v2664 = vrot.slane %v360, 1
        %v2665 = vsel %vm2630, %v2662, %v2664
        %v2666 = vrot.slane %v361, 1
        %v2667 = vrot.slane %v362, 1
        %v2668 = vsel %vm2630, %v2666, %v2667
        %v2669 = vrot.slane %v363, 1
        %v2670 = vsel %vm2630, %v2667, %v2669
        %v2687 = vadd.f32 %v2590, %v2633
        %v2688 = vadd.f32 %v2591, %v2635
        %v2689 = vadd.f32 %v2592, %v2638
        %v2690 = vadd.f32 %v2593, %v2640
        %v2691 = vadd.f32 %v2594, %v2643
        %v2692 = vadd.f32 %v2595, %v2645
        %v2693 = vadd.f32 %v2596, %v2648
        %v2694 = vadd.f32 %v2597, %v2650
        %v2695 = vadd.f32 %v2598, %v2653
        %v2696 = vadd.f32 %v2599, %v2655
        %v2697 = vadd.f32 %v2600, %v2658
        %v2698 = vadd.f32 %v2601, %v2660
        %v2699 = vadd.f32 %v2602, %v2663
        %v2700 = vadd.f32 %v2603, %v2665
        %v2701 = vadd.f32 %v2604, %v2668
        %v2702 = vadd.f32 %v2605, %v2670
        %2703 = vst [vmem:[%s278] sm:$0xff] %v2687
        %2704 = vst [vmem:[%s278 + $0x8] sm:$0xff] %v2688
        %2705 = vst [vmem:[%s278 + $0x10] sm:$0xff] %v2689
        %2706 = vst [vmem:[%s278 + $0x18] sm:$0xff] %v2690
        %2707 = vst [vmem:[%s278 + $0x20] sm:$0xff] %v2691
        %2708 = vst [vmem:[%s278 + $0x28] sm:$0xff] %v2692
        %2709 = vst [vmem:[%s278 + $0x30] sm:$0xff] %v2693
        %2710 = vst [vmem:[%s278 + $0x38] sm:$0xff] %v2694
        %2711 = vst [vmem:[%s278 + $0x40] sm:$0xff] %v2695
        %2712 = vst [vmem:[%s278 + $0x48] sm:$0xff] %v2696
        %2713 = vst [vmem:[%s278 + $0x50] sm:$0xff] %v2697
        %2714 = vst [vmem:[%s278 + $0x58] sm:$0xff] %v2698
        %2715 = vst [vmem:[%s278 + $0x60] sm:$0xff] %v2699
        %2716 = vst [vmem:[%s278 + $0x68] sm:$0xff] %v2700
        %2717 = vst [vmem:[%s278 + $0x70] sm:$0xff] %v2701
        %2718 = vst [vmem:[%s278 + $0x78] sm:$0xff] %v2702
        %s2719 = sand.u32 %s171, 1
        %s2720 = scalar_lea.sflag [#allocation7], %s2719
        %s2721 = sand.u32 %s171, 1
        %s2722 = smul.addr %s2721, 128
        %s2723 = scalar_lea.vmem [#allocation10], %s2722
        // Predicated region
        $region77: #{tpu_custom_call.1} parent=43 // pred_check
          %p2724 = pneg %p181
        $region78: #{tpu_custom_call.1} parent=43 // pred_check_branch
          %2726 = sbr.rel (%p2724) target = $region80
        $region79: #{tpu_custom_call.1} parent=43 // pred_region
          %s2727 = smul.u32 8, %s28
          %2729 = vsyncadd %s2720, 0
          %s2730 = smul.addr %s2727, 2
          %s2731 = smul.addr %s27, 32
          %s2732 = sadd.s32 %s2730, %s2731
          %s2733 = smul.addr %s2732, 8
          %s2734 = scalar_lea.hbm %s7, %s2733
          %s2735 = sshll.u32 %s2723, 4
          %s2736 = int_to_ptr.vmem [resolvable:$true] %s2735
          %s2737 = sshll.u32 %s2734, 4
          %s2738 = int_to_ptr.hbm [resolvable:$true] %s2737
          %2743 = dma.vmem_to_hbm [thread:$0]  %s2736, 2048, %s2738, %s2720, 128, 128, 8
        $region80: #{tpu_custom_call.1} parent=43 // pred_fallthru
          _
      $region44: #{tpu_custom_call.1} parent=5 // pred_fallthru
        _
      %p2744 = scmp.le.s32.totalorder 2, %s18
      // Predicated region
      $region81: #{tpu_custom_call.1} parent=5 // pred_check
        %p2745 = pneg %p2744
      $region82: #{tpu_custom_call.1} parent=5 // pred_check_branch
        %2747 = sbr.rel (%p2745) target = $region84
      $region83: #{tpu_custom_call.1} parent=5 // pred_region
        %s2748 = ssub.s32 %s18, 2
        // Predicated region
        $region85: #{tpu_custom_call.1} parent=83 // pred_check
          %p2749 = pneg %p187
        $region86: #{tpu_custom_call.1} parent=83 // pred_check_branch
          %2751 = sbr.rel (%p2749) target = $region88
        $region87: #{tpu_custom_call.1} parent=83 // pred_region
          %s2752 = sand.u32 %s172, 1
          %s2753 = scalar_lea.sflag [#allocation7], %s2752
          %s2754 = sand.u32 %s172, 1
          %s2755 = smul.addr %s2754, 128
          %s2756 = scalar_lea.vmem [#allocation10], %s2755
          %2758 = dma.done %s2753, 2048
        $region88: #{tpu_custom_call.1} parent=83 // pred_fallthru
          _
      $region84: #{tpu_custom_call.1} parent=5 // pred_fallthru
        _
    $region6: #{tpu_custom_call.1} parent=1 // loop_footer
      %s22 = sadd.s32 1, %s18
    $region7: #{tpu_custom_call.1} parent=1 // loop_footer_branch
      %17 = sbr.rel target = $region3
    $region8: #{tpu_custom_call.1} parent=1 // loop_exit
      _
    %2759 = vsyncpa [#allocation6], 1
    %s2760 = scalar_lea.sflag [#allocation6], 1
    %2761 = vsyncpa %s2760, 1
    %2762 = vsyncpa [#allocation9], 1
    %2763 = vsyncpa [#allocation7], 1
    %s2764 = scalar_lea.sflag [#allocation7], 1
    %2765 = vsyncpa %s2764, 1
  %2766 = vsyncmov [#allocation4]
  %s2767 = vpop.sfrf %2766
  %p2768 = scmp.eq.s32.totalorder %s2767, 0
  %p2769 = pneg %p2768
  %2771 = shalt.err (%p2769)
  %s2772 = scalar_lea.sflag [#allocation4], 1
  %2773 = vsyncmov %s2772
  %s2774 = vpop.sfrf %2773
  %p2775 = scmp.eq.s32.totalorder %s2774, 0
  %p2776 = pneg %p2775
  %2778 = shalt.err (%p2776)

</llo_original>
